<compile_context>
chip_gen: v7x
topology: tpu7x:2x2x1
jax: 0.10.0
libtpu: 0.0.40
codegen_flags: <defaults>
</compile_context>

<pallas_src>
import functools

import jax
import jax.numpy as jnp
from jax.experimental import pallas as pl
from jax.experimental.pallas import tpu as pltpu  # noqa: F401  (TPU backend)


# ----------------------------------------------------------------------------
# Fused Pallas kernel
# ----------------------------------------------------------------------------

def _lstm_cell(gates, c_prev, hidden):
    """One LSTM cell update. gates: (B, 4H) pre-activations, PyTorch order i,f,g,o."""
    sg = 1.0 / (1.0 + jnp.exp(-gates))   # sigmoid over the full gate tile (1 EUP pass)
    th = jnp.tanh(gates)                 # tanh over the full gate tile    (1 EUP pass)
    i = sg[:, 0 * hidden:1 * hidden]
    f = sg[:, 1 * hidden:2 * hidden]
    g = th[:, 2 * hidden:3 * hidden]
    o = sg[:, 3 * hidden:4 * hidden]
    c = f * c_prev + i * g
    h = o * jnp.tanh(c)
    return h, c


def _fused_lstm_kernel(ids_ref, table_ref, *refs, seq_len, batch, hidden):
    """Whole LSTMModule forward in one kernel invocation (everything in VMEM).

    refs layout: [w_ih_cat, bias_cat, w_hh_blk] * n_layers, w_lin, b_lin, o_ref
      w_ih_cat : (in_f, 8H) bf16   [fwd 4H | rev 4H], gate order i,f,g,o
      bias_cat : (1, 8H)    f32    (b_ih + b_hh) per direction, fwd | rev
      w_hh_blk : (2H, 8H)   bf16   block-diagonal [W_hh_f^T  0 ; 0  W_hh_r^T]
      w_lin    : (2H, OUT)  bf16
      b_lin    : (1, OUT)   f32
      o_ref    : (B, OUT)   f32
    """
    T, B, H = seq_len, batch, hidden
    G = 4 * H
    n_layers = (len(refs) - 3) // 3
    layer_refs = refs[:3 * n_layers]
    w_lin_ref, b_lin_ref, o_ref = refs[3 * n_layers:]

    # --- Embedding: exact gather as one_hot(ids) @ table on the (idle) MXU ---
    R = T * B
    V = table_ref.shape[0]
    ids = ids_ref[...]                                            # (R, 1) int32
    iota = jax.lax.broadcasted_iota(jnp.int32, (R, V), 1)
    onehot = (iota == ids).astype(jnp.float32)
    x = jnp.dot(onehot, table_ref[...],
                preferred_element_type=jnp.float32)               # (R, E) f32

    last = None
    for layer in range(n_layers):
        w_ih = layer_refs[3 * layer + 0][...]                     # (in_f, 8H) bf16
        bias = layer_refs[3 * layer + 1][...]                     # (1, 8H)   f32
        w_hh = layer_refs[3 * layer + 2][...]                     # (2H, 8H)  bf16

        # Input projection for BOTH directions in one N=8H-wide GEMM.
        xproj = jnp.dot(x.astype(jnp.bfloat16), w_ih,
                        preferred_element_type=jnp.float32) + bias    # (R, 8H)

        h_state = jnp.zeros((B, 2 * H), jnp.float32)              # [h_fwd | h_rev]
        c_f = jnp.zeros((B, H), jnp.float32)
        c_r = jnp.zeros((B, H), jnp.float32)
        fwd_h = [None] * T
        rev_h = [None] * T

        for s in range(T):                                        # static unroll
            # One block-diagonal recurrent dot covers both directions.
            hg = jnp.dot(h_state.astype(jnp.bfloat16), w_hh,
                         preferred_element_type=jnp.float32)      # (B, 8H) f32
            gates_f = hg[:, 0:G] + xproj[s * B:(s + 1) * B, 0:G]
            gates_r = hg[:, G:2 * G] + xproj[(T - 1 - s) * B:(T - s) * B, G:2 * G]
            h_f, c_f = _lstm_cell(gates_f, c_f, H)
            h_r, c_r = _lstm_cell(gates_r, c_r, H)
            h_state = jnp.concatenate([h_f, h_r], axis=1)
            fwd_h[s] = h_f
            rev_h[T - 1 - s] = h_r

        if layer + 1 < n_layers:
            # TODO(synk): inter-layer LSTM dropout (p=0.25) is identity (inference).
            x = jnp.concatenate(
                [jnp.concatenate([fwd_h[t], rev_h[t]], axis=1) for t in range(T)],
                axis=0)                                           # (R, 2H) f32
        else:
            # lstm_out[:, -1, :] == [h_fwd at t=T-1 | h_rev at t=T-1]
            last = jnp.concatenate([fwd_h[T - 1], rev_h[T - 1]], axis=1)

    # --- self.dropout is identity at inference; Linear + ReLU epilogue ---
    out = jnp.dot(last.astype(jnp.bfloat16), w_lin_ref[...],
                  preferred_element_type=jnp.float32) + b_lin_ref[...]
    o_ref[...] = jnp.maximum(out, 0.0)


# ----------------------------------------------------------------------------
# Wrapper
# ----------------------------------------------------------------------------

def lstm_module_forward(ids, prep):
    """ids: (B, T) int32 token indices  ->  (B, output_size) f32."""
    B, T = ids.shape
    H = prep["lstm"][0]["w_hh_blk"].shape[0] // 2
    out_size = prep["linear_b"].shape[-1]

    # Time-major row layout: row r = t*B + b (matches in-kernel slicing).
    ids_tm = ids.T.reshape(T * B, 1).astype(jnp.int32)

    args = [ids_tm, prep["embedding"]]
    for lp in prep["lstm"]:
        args += [lp["w_ih_cat"], lp["bias_cat"], lp["w_hh_blk"]]
    args += [prep["linear_w"], prep["linear_b"]]

    kernel = functools.partial(_fused_lstm_kernel,
                               seq_len=T, batch=B, hidden=H)
    return pl.pallas_call(
        kernel,
        out_shape=jax.ShapeDtypeStruct((B, out_size), jnp.float32),
    )(*args)


# ----------------------------------------------------------------------------
# Parameter construction (PyTorch-style) + one-time kernel-layout preparation
# ----------------------------------------------------------------------------

def init_params(key, vocab, emb_dim, hidden, n_layers, out_size):
    k_emb, k_lstm, k_lin = jax.random.split(key, 3)
    params = {"embedding": jax.random.normal(k_emb, (vocab, emb_dim),
                                             jnp.float32)}
    bound = 1.0 / float(hidden) ** 0.5
    keys = iter(jax.random.split(k_lstm, n_layers * 2 * 4))
    lstm = []
    for layer in range(n_layers):
        in_f = emb_dim if layer == 0 else 2 * hidden
        dirs = []
        for _ in range(2):   # forward, reverse
            dirs.append({
                "w_ih": jax.random.uniform(next(keys), (4 * hidden, in_f),
                                           jnp.float32, -bound, bound),
                "w_hh": jax.random.uniform(next(keys), (4 * hidden, hidden),
                                           jnp.float32, -bound, bound),
                "b_ih": jax.random.uniform(next(keys), (4 * hidden,),
                                           jnp.float32, -bound, bound),
                "b_hh": jax.random.uniform(next(keys), (4 * hidden,),
                                           jnp.float32, -bound, bound),
            })
        lstm.append(dirs)
    params["lstm"] = lstm
    lb = 1.0 / float(2 * hidden) ** 0.5
    kw, kb = jax.random.split(k_lin)
    params["linear"] = {
        "w": jax.random.uniform(kw, (out_size, 2 * hidden), jnp.float32, -lb, lb),
        "b": jax.random.uniform(kb, (out_size,), jnp.float32, -lb, lb),
    }
    return params


def prepare_params(params):
    """One-time layout / dtype preparation of PyTorch-style params."""
    H = params["lstm"][0][0]["w_hh"].shape[1]
    prep = {"embedding": params["embedding"].astype(jnp.float32), "lstm": []}
    for (pf, pr) in params["lstm"]:
        # [fwd 4H | rev 4H] input-projection weights: one 8H-wide GEMM / layer.
        w_ih_cat = jnp.concatenate([pf["w_ih"].T, pr["w_ih"].T],
                                   axis=1).astype(jnp.bfloat16)
        bias_cat = jnp.concatenate(
            [pf["b_ih"] + pf["b_hh"], pr["b_ih"] + pr["b_hh"]]
        ).reshape(1, 8 * H).astype(jnp.float32)
        # Block-diagonal recurrent weight: one (B,2H)@(2H,8H) dot per step
        # drives both directions.
        w_hh_blk = jnp.zeros((2 * H, 8 * H), jnp.float32)
        w_hh_blk = w_hh_blk.at[0:H, 0:4 * H].set(pf["w_hh"].T)
        w_hh_blk = w_hh_blk.at[H:2 * H, 4 * H:8 * H].set(pr["w_hh"].T)
        prep["lstm"].append({
            "w_ih_cat": w_ih_cat,
            "bias_cat": bias_cat,
            "w_hh_blk": w_hh_blk.astype(jnp.bfloat16),
        })
    prep["linear_w"] = params["linear"]["w"].T.astype(jnp.bfloat16)
    prep["linear_b"] = params["linear"]["b"].reshape(1, -1).astype(jnp.float32)
    return prep


if __name__ == "__main__":
    VOCAB, EMB_DIM, HIDDEN, N_LAYERS, OUT_SIZE = 50, 32, 32, 2, 4
    BATCH, SEQ = 2, 8

    key = jax.random.PRNGKey(0)
    kx, kp = jax.random.split(key)
    ids = jax.random.randint(kx, (BATCH, SEQ), 0, VOCAB, dtype=jnp.int32)
    raw_params = init_params(kp, VOCAB, EMB_DIM, HIDDEN, N_LAYERS, OUT_SIZE)
    prep = prepare_params(raw_params)            # bf16 / fused layouts, done once

    out = jax.jit(lstm_module_forward)(ids, prep)
    out = jax.block_until_ready(out)

    assert out.shape == (BATCH, OUT_SIZE), out.shape
    assert bool(jnp.all(jnp.isfinite(out)))
    assert bool(jnp.all(out >= 0.0))             # ReLU epilogue
    print("KERNEL_OK")
</pallas_src>

<mosaic_0001>
module attributes {stable_mosaic.version = 11 : i64} {
  func.func @_fused_lstm_kernel(%arg0: memref<16x1xi32, #tpu.memory_space<vmem>>, %arg1: memref<50x32xf32, #tpu.memory_space<vmem>>, %arg2: memref<32x256xbf16, #tpu.memory_space<vmem>>, %arg3: memref<1x256xf32, #tpu.memory_space<vmem>>, %arg4: memref<64x256xbf16, #tpu.memory_space<vmem>>, %arg5: memref<64x256xbf16, #tpu.memory_space<vmem>>, %arg6: memref<1x256xf32, #tpu.memory_space<vmem>>, %arg7: memref<64x256xbf16, #tpu.memory_space<vmem>>, %arg8: memref<64x4xbf16, #tpu.memory_space<vmem>>, %arg9: memref<1x4xf32, #tpu.memory_space<vmem>>, %arg10: memref<2x4xf32, #tpu.memory_space<vmem>>) attributes {dimension_semantics = [], scalar_prefetch = 0 : i64, scratch_operands = 0 : i64, tpu.core_type = #tpu.core_type<tc>} {
    %c0 = arith.constant 0 : index
    %c0_0 = arith.constant 0 : index
    %0 = vector.load %arg0[%c0, %c0_0] : memref<16x1xi32, #tpu.memory_space<vmem>>, vector<16x1xi32>
    %1 = tpu.iota {dimensions = array<i32: 1>} : vector<16x50xi32>
    %2 = vector.broadcast %0 : vector<16x1xi32> to vector<16x50xi32>
    %3 = arith.cmpi eq, %1, %2 : vector<16x50xi32>
    %4 = arith.extui %3 : vector<16x50xi1> to vector<16x50xi32>
    %5 = arith.sitofp %4 : vector<16x50xi32> to vector<16x50xf32>
    %c0_1 = arith.constant 0 : index
    %c0_2 = arith.constant 0 : index
    %6 = vector.load %arg1[%c0_1, %c0_2] : memref<50x32xf32, #tpu.memory_space<vmem>>, vector<50x32xf32>
    %cst = arith.constant dense<0.000000e+00> : vector<16x32xf32>
    %7 = tpu.matmul %5, %6, %cst {dimension_numbers = #tpu.dot_dimension_numbers<[1], [0], [0], [1], [0, 0, 1, 1], [], []>} : vector<16x50xf32>, vector<50x32xf32>, vector<16x32xf32> -> vector<16x32xf32>
    %c0_3 = arith.constant 0 : index
    %c0_4 = arith.constant 0 : index
    %8 = vector.load %arg2[%c0_3, %c0_4] : memref<32x256xbf16, #tpu.memory_space<vmem>>, vector<32x256xbf16>
    %c0_5 = arith.constant 0 : index
    %c0_6 = arith.constant 0 : index
    %9 = vector.load %arg3[%c0_5, %c0_6] : memref<1x256xf32, #tpu.memory_space<vmem>>, vector<1x256xf32>
    %c0_7 = arith.constant 0 : index
    %c0_8 = arith.constant 0 : index
    %10 = vector.load %arg4[%c0_7, %c0_8] : memref<64x256xbf16, #tpu.memory_space<vmem>>, vector<64x256xbf16>
    %11 = arith.truncf %7 : vector<16x32xf32> to vector<16x32xbf16>
    %cst_9 = arith.constant dense<0.000000e+00> : vector<16x256xf32>
    %12 = tpu.matmul %11, %8, %cst_9 {dimension_numbers = #tpu.dot_dimension_numbers<[1], [0], [0], [1], [0, 0, 1, 1], [], []>} : vector<16x32xbf16>, vector<32x256xbf16>, vector<16x256xf32> -> vector<16x256xf32>
    %13 = vector.broadcast %9 : vector<1x256xf32> to vector<16x256xf32>
    %14 = arith.addf %12, %13 : vector<16x256xf32>
    %cst_10 = arith.constant 0.000000e+00 : f32
    %15 = vector.broadcast %cst_10 : f32 to vector<2x64xf32>
    %cst_11 = arith.constant 0.000000e+00 : f32
    %16 = vector.broadcast %cst_11 : f32 to vector<2x32xf32>
    %cst_12 = arith.constant 0.000000e+00 : f32
    %17 = vector.broadcast %cst_12 : f32 to vector<2x32xf32>
    %18 = arith.truncf %15 : vector<2x64xf32> to vector<2x64xbf16>
    %cst_13 = arith.constant dense<0.000000e+00> : vector<2x256xf32>
    %19 = tpu.matmul %18, %10, %cst_13 {dimension_numbers = #tpu.dot_dimension_numbers<[1], [0], [0], [1], [0, 0, 1, 1], [], []>} : vector<2x64xbf16>, vector<64x256xbf16>, vector<2x256xf32> -> vector<2x256xf32>
    %20 = vector.extract_strided_slice %19 {offsets = [0, 0], sizes = [2, 128], strides = [1, 1]} : vector<2x256xf32> to vector<2x128xf32>
    %21 = vector.extract_strided_slice %14 {offsets = [0, 0], sizes = [2, 128], strides = [1, 1]} : vector<16x256xf32> to vector<2x128xf32>
    %22 = arith.addf %20, %21 : vector<2x128xf32>
    %23 = vector.extract_strided_slice %19 {offsets = [0, 128], sizes = [2, 128], strides = [1, 1]} : vector<2x256xf32> to vector<2x128xf32>
    %24 = vector.extract_strided_slice %14 {offsets = [14, 128], sizes = [2, 128], strides = [1, 1]} : vector<16x256xf32> to vector<2x128xf32>
    %25 = arith.addf %23, %24 : vector<2x128xf32>
    %cst_14 = arith.constant 0.000000e+00 : f32
    %26 = vector.broadcast %cst_14 : f32 to vector<2x128xf32>
    %27 = arith.subf %26, %22 : vector<2x128xf32>
    %28 = math.exp %27 : vector<2x128xf32>
    %cst_15 = arith.constant 1.000000e+00 : f32
    %29 = vector.broadcast %cst_15 : f32 to vector<2x128xf32>
    %30 = arith.addf %29, %28 : vector<2x128xf32>
    %cst_16 = arith.constant 1.000000e+00 : f32
    %31 = vector.broadcast %cst_16 : f32 to vector<2x128xf32>
    %32 = arith.divf %31, %30 : vector<2x128xf32>
    %33 = math.tanh %22 : vector<2x128xf32>
    %34 = vector.extract_strided_slice %32 {offsets = [0, 0], sizes = [2, 32], strides = [1, 1]} : vector<2x128xf32> to vector<2x32xf32>
    %35 = vector.extract_strided_slice %32 {offsets = [0, 32], sizes = [2, 32], strides = [1, 1]} : vector<2x128xf32> to vector<2x32xf32>
    %36 = vector.extract_strided_slice %33 {offsets = [0, 64], sizes = [2, 32], strides = [1, 1]} : vector<2x128xf32> to vector<2x32xf32>
    %37 = vector.extract_strided_slice %32 {offsets = [0, 96], sizes = [2, 32], strides = [1, 1]} : vector<2x128xf32> to vector<2x32xf32>
    %38 = arith.mulf %35, %16 : vector<2x32xf32>
    %39 = arith.mulf %34, %36 : vector<2x32xf32>
    %40 = arith.addf %38, %39 : vector<2x32xf32>
    %41 = math.tanh %40 : vector<2x32xf32>
    %42 = arith.mulf %37, %41 : vector<2x32xf32>
    %cst_17 = arith.constant 0.000000e+00 : f32
    %43 = vector.broadcast %cst_17 : f32 to vector<2x128xf32>
    %44 = arith.subf %43, %25 : vector<2x128xf32>
    %45 = math.exp %44 : vector<2x128xf32>
    %cst_18 = arith.constant 1.000000e+00 : f32
    %46 = vector.broadcast %cst_18 : f32 to vector<2x128xf32>
    %47 = arith.addf %46, %45 : vector<2x128xf32>
    %cst_19 = arith.constant 1.000000e+00 : f32
    %48 = vector.broadcast %cst_19 : f32 to vector<2x128xf32>
    %49 = arith.divf %48, %47 : vector<2x128xf32>
    %50 = math.tanh %25 : vector<2x128xf32>
    %51 = vector.extract_strided_slice %49 {offsets = [0, 0], sizes = [2, 32], strides = [1, 1]} : vector<2x128xf32> to vector<2x32xf32>
    %52 = vector.extract_strided_slice %49 {offsets = [0, 32], sizes = [2, 32], strides = [1, 1]} : vector<2x128xf32> to vector<2x32xf32>
    %53 = vector.extract_strided_slice %50 {offsets = [0, 64], sizes = [2, 32], strides = [1, 1]} : vector<2x128xf32> to vector<2x32xf32>
    %54 = vector.extract_strided_slice %49 {offsets = [0, 96], sizes = [2, 32], strides = [1, 1]} : vector<2x128xf32> to vector<2x32xf32>
    %55 = arith.mulf %52, %17 : vector<2x32xf32>
    %56 = arith.mulf %51, %53 : vector<2x32xf32>
    %57 = arith.addf %55, %56 : vector<2x32xf32>
    %58 = math.tanh %57 : vector<2x32xf32>
    %59 = arith.mulf %54, %58 : vector<2x32xf32>
    %60 = tpu.concatenate %42, %59 in 1 : vector<2x32xf32>, vector<2x32xf32> -> vector<2x64xf32>
    %61 = arith.truncf %60 : vector<2x64xf32> to vector<2x64xbf16>
    %cst_20 = arith.constant dense<0.000000e+00> : vector<2x256xf32>
    %62 = tpu.matmul %61, %10, %cst_20 {dimension_numbers = #tpu.dot_dimension_numbers<[1], [0], [0], [1], [0, 0, 1, 1], [], []>} : vector<2x64xbf16>, vector<64x256xbf16>, vector<2x256xf32> -> vector<2x256xf32>
    %63 = vector.extract_strided_slice %62 {offsets = [0, 0], sizes = [2, 128], strides = [1, 1]} : vector<2x256xf32> to vector<2x128xf32>
    %64 = vector.extract_strided_slice %14 {offsets = [2, 0], sizes = [2, 128], strides = [1, 1]} : vector<16x256xf32> to vector<2x128xf32>
    %65 = arith.addf %63, %64 : vector<2x128xf32>
    %66 = vector.extract_strided_slice %62 {offsets = [0, 128], sizes = [2, 128], strides = [1, 1]} : vector<2x256xf32> to vector<2x128xf32>
    %67 = vector.extract_strided_slice %14 {offsets = [12, 128], sizes = [2, 128], strides = [1, 1]} : vector<16x256xf32> to vector<2x128xf32>
    %68 = arith.addf %66, %67 : vector<2x128xf32>
    %cst_21 = arith.constant 0.000000e+00 : f32
    %69 = vector.broadcast %cst_21 : f32 to vector<2x128xf32>
    %70 = arith.subf %69, %65 : vector<2x128xf32>
    %71 = math.exp %70 : vector<2x128xf32>
    %cst_22 = arith.constant 1.000000e+00 : f32
    %72 = vector.broadcast %cst_22 : f32 to vector<2x128xf32>
    %73 = arith.addf %72, %71 : vector<2x128xf32>
    %cst_23 = arith.constant 1.000000e+00 : f32
    %74 = vector.broadcast %cst_23 : f32 to vector<2x128xf32>
    %75 = arith.divf %74, %73 : vector<2x128xf32>
    %76 = math.tanh %65 : vector<2x128xf32>
    %77 = vector.extract_strided_slice %75 {offsets = [0, 0], sizes = [2, 32], strides = [1, 1]} : vector<2x128xf32> to vector<2x32xf32>
    %78 = vector.extract_strided_slice %75 {offsets = [0, 32], sizes = [2, 32], strides = [1, 1]} : vector<2x128xf32> to vector<2x32xf32>
    %79 = vector.extract_strided_slice %76 {offsets = [0, 64], sizes = [2, 32], strides = [1, 1]} : vector<2x128xf32> to vector<2x32xf32>
    %80 = vector.extract_strided_slice %75 {offsets = [0, 96], sizes = [2, 32], strides = [1, 1]} : vector<2x128xf32> to vector<2x32xf32>
    %81 = arith.mulf %78, %40 : vector<2x32xf32>
    %82 = arith.mulf %77, %79 : vector<2x32xf32>
    %83 = arith.addf %81, %82 : vector<2x32xf32>
    %84 = math.tanh %83 : vector<2x32xf32>
    %85 = arith.mulf %80, %84 : vector<2x32xf32>
    %cst_24 = arith.constant 0.000000e+00 : f32
    %86 = vector.broadcast %cst_24 : f32 to vector<2x128xf32>
    %87 = arith.subf %86, %68 : vector<2x128xf32>
    %88 = math.exp %87 : vector<2x128xf32>
    %cst_25 = arith.constant 1.000000e+00 : f32
    %89 = vector.broadcast %cst_25 : f32 to vector<2x128xf32>
    %90 = arith.addf %89, %88 : vector<2x128xf32>
    %cst_26 = arith.constant 1.000000e+00 : f32
    %91 = vector.broadcast %cst_26 : f32 to vector<2x128xf32>
    %92 = arith.divf %91, %90 : vector<2x128xf32>
    %93 = math.tanh %68 : vector<2x128xf32>
    %94 = vector.extract_strided_slice %92 {offsets = [0, 0], sizes = [2, 32], strides = [1, 1]} : vector<2x128xf32> to vector<2x32xf32>
    %95 = vector.extract_strided_slice %92 {offsets = [0, 32], sizes = [2, 32], strides = [1, 1]} : vector<2x128xf32> to vector<2x32xf32>
    %96 = vector.extract_strided_slice %93 {offsets = [0, 64], sizes = [2, 32], strides = [1, 1]} : vector<2x128xf32> to vector<2x32xf32>
    %97 = vector.extract_strided_slice %92 {offsets = [0, 96], sizes = [2, 32], strides = [1, 1]} : vector<2x128xf32> to vector<2x32xf32>
    %98 = arith.mulf %95, %57 : vector<2x32xf32>
    %99 = arith.mulf %94, %96 : vector<2x32xf32>
    %100 = arith.addf %98, %99 : vector<2x32xf32>
    %101 = math.tanh %100 : vector<2x32xf32>
    %102 = arith.mulf %97, %101 : vector<2x32xf32>
    %103 = tpu.concatenate %85, %102 in 1 : vector<2x32xf32>, vector<2x32xf32> -> vector<2x64xf32>
    %104 = arith.truncf %103 : vector<2x64xf32> to vector<2x64xbf16>
    %cst_27 = arith.constant dense<0.000000e+00> : vector<2x256xf32>
    %105 = tpu.matmul %104, %10, %cst_27 {dimension_numbers = #tpu.dot_dimension_numbers<[1], [0], [0], [1], [0, 0, 1, 1], [], []>} : vector<2x64xbf16>, vector<64x256xbf16>, vector<2x256xf32> -> vector<2x256xf32>
    %106 = vector.extract_strided_slice %105 {offsets = [0, 0], sizes = [2, 128], strides = [1, 1]} : vector<2x256xf32> to vector<2x128xf32>
    %107 = vector.extract_strided_slice %14 {offsets = [4, 0], sizes = [2, 128], strides = [1, 1]} : vector<16x256xf32> to vector<2x128xf32>
    %108 = arith.addf %106, %107 : vector<2x128xf32>
    %109 = vector.extract_strided_slice %105 {offsets = [0, 128], sizes = [2, 128], strides = [1, 1]} : vector<2x256xf32> to vector<2x128xf32>
    %110 = vector.extract_strided_slice %14 {offsets = [10, 128], sizes = [2, 128], strides = [1, 1]} : vector<16x256xf32> to vector<2x128xf32>
    %111 = arith.addf %109, %110 : vector<2x128xf32>
    %cst_28 = arith.constant 0.000000e+00 : f32
    %112 = vector.broadcast %cst_28 : f32 to vector<2x128xf32>
    %113 = arith.subf %112, %108 : vector<2x128xf32>
    %114 = math.exp %113 : vector<2x128xf32>
    %cst_29 = arith.constant 1.000000e+00 : f32
    %115 = vector.broadcast %cst_29 : f32 to vector<2x128xf32>
    %116 = arith.addf %115, %114 : vector<2x128xf32>
    %cst_30 = arith.constant 1.000000e+00 : f32
    %117 = vector.broadcast %cst_30 : f32 to vector<2x128xf32>
    %118 = arith.divf %117, %116 : vector<2x128xf32>
    %119 = math.tanh %108 : vector<2x128xf32>
    %120 = vector.extract_strided_slice %118 {offsets = [0, 0], sizes = [2, 32], strides = [1, 1]} : vector<2x128xf32> to vector<2x32xf32>
    %121 = vector.extract_strided_slice %118 {offsets = [0, 32], sizes = [2, 32], strides = [1, 1]} : vector<2x128xf32> to vector<2x32xf32>
    %122 = vector.extract_strided_slice %119 {offsets = [0, 64], sizes = [2, 32], strides = [1, 1]} : vector<2x128xf32> to vector<2x32xf32>
    %123 = vector.extract_strided_slice %118 {offsets = [0, 96], sizes = [2, 32], strides = [1, 1]} : vector<2x128xf32> to vector<2x32xf32>
    %124 = arith.mulf %121, %83 : vector<2x32xf32>
    %125 = arith.mulf %120, %122 : vector<2x32xf32>
    %126 = arith.addf %124, %125 : vector<2x32xf32>
    %127 = math.tanh %126 : vector<2x32xf32>
    %128 = arith.mulf %123, %127 : vector<2x32xf32>
    %cst_31 = arith.constant 0.000000e+00 : f32
    %129 = vector.broadcast %cst_31 : f32 to vector<2x128xf32>
    %130 = arith.subf %129, %111 : vector<2x128xf32>
    %131 = math.exp %130 : vector<2x128xf32>
    %cst_32 = arith.constant 1.000000e+00 : f32
    %132 = vector.broadcast %cst_32 : f32 to vector<2x128xf32>
    %133 = arith.addf %132, %131 : vector<2x128xf32>
    %cst_33 = arith.constant 1.000000e+00 : f32
    %134 = vector.broadcast %cst_33 : f32 to vector<2x128xf32>
    %135 = arith.divf %134, %133 : vector<2x128xf32>
    %136 = math.tanh %111 : vector<2x128xf32>
    %137 = vector.extract_strided_slice %135 {offsets = [0, 0], sizes = [2, 32], strides = [1, 1]} : vector<2x128xf32> to vector<2x32xf32>
    %138 = vector.extract_strided_slice %135 {offsets = [0, 32], sizes = [2, 32], strides = [1, 1]} : vector<2x128xf32> to vector<2x32xf32>
    %139 = vector.extract_strided_slice %136 {offsets = [0, 64], sizes = [2, 32], strides = [1, 1]} : vector<2x128xf32> to vector<2x32xf32>
    %140 = vector.extract_strided_slice %135 {offsets = [0, 96], sizes = [2, 32], strides = [1, 1]} : vector<2x128xf32> to vector<2x32xf32>
    %141 = arith.mulf %138, %100 : vector<2x32xf32>
    %142 = arith.mulf %137, %139 : vector<2x32xf32>
    %143 = arith.addf %141, %142 : vector<2x32xf32>
    %144 = math.tanh %143 : vector<2x32xf32>
    %145 = arith.mulf %140, %144 : vector<2x32xf32>
    %146 = tpu.concatenate %128, %145 in 1 : vector<2x32xf32>, vector<2x32xf32> -> vector<2x64xf32>
    %147 = arith.truncf %146 : vector<2x64xf32> to vector<2x64xbf16>
    %cst_34 = arith.constant dense<0.000000e+00> : vector<2x256xf32>
    %148 = tpu.matmul %147, %10, %cst_34 {dimension_numbers = #tpu.dot_dimension_numbers<[1], [0], [0], [1], [0, 0, 1, 1], [], []>} : vector<2x64xbf16>, vector<64x256xbf16>, vector<2x256xf32> -> vector<2x256xf32>
    %149 = vector.extract_strided_slice %148 {offsets = [0, 0], sizes = [2, 128], strides = [1, 1]} : vector<2x256xf32> to vector<2x128xf32>
    %150 = vector.extract_strided_slice %14 {offsets = [6, 0], sizes = [2, 128], strides = [1, 1]} : vector<16x256xf32> to vector<2x128xf32>
    %151 = arith.addf %149, %150 : vector<2x128xf32>
    %152 = vector.extract_strided_slice %148 {offsets = [0, 128], sizes = [2, 128], strides = [1, 1]} : vector<2x256xf32> to vector<2x128xf32>
    %153 = vector.extract_strided_slice %14 {offsets = [8, 128], sizes = [2, 128], strides = [1, 1]} : vector<16x256xf32> to vector<2x128xf32>
    %154 = arith.addf %152, %153 : vector<2x128xf32>
    %cst_35 = arith.constant 0.000000e+00 : f32
    %155 = vector.broadcast %cst_35 : f32 to vector<2x128xf32>
    %156 = arith.subf %155, %151 : vector<2x128xf32>
    %157 = math.exp %156 : vector<2x128xf32>
    %cst_36 = arith.constant 1.000000e+00 : f32
    %158 = vector.broadcast %cst_36 : f32 to vector<2x128xf32>
    %159 = arith.addf %158, %157 : vector<2x128xf32>
    %cst_37 = arith.constant 1.000000e+00 : f32
    %160 = vector.broadcast %cst_37 : f32 to vector<2x128xf32>
    %161 = arith.divf %160, %159 : vector<2x128xf32>
    %162 = math.tanh %151 : vector<2x128xf32>
    %163 = vector.extract_strided_slice %161 {offsets = [0, 0], sizes = [2, 32], strides = [1, 1]} : vector<2x128xf32> to vector<2x32xf32>
    %164 = vector.extract_strided_slice %161 {offsets = [0, 32], sizes = [2, 32], strides = [1, 1]} : vector<2x128xf32> to vector<2x32xf32>
    %165 = vector.extract_strided_slice %162 {offsets = [0, 64], sizes = [2, 32], strides = [1, 1]} : vector<2x128xf32> to vector<2x32xf32>
    %166 = vector.extract_strided_slice %161 {offsets = [0, 96], sizes = [2, 32], strides = [1, 1]} : vector<2x128xf32> to vector<2x32xf32>
    %167 = arith.mulf %164, %126 : vector<2x32xf32>
    %168 = arith.mulf %163, %165 : vector<2x32xf32>
    %169 = arith.addf %167, %168 : vector<2x32xf32>
    %170 = math.tanh %169 : vector<2x32xf32>
    %171 = arith.mulf %166, %170 : vector<2x32xf32>
    %cst_38 = arith.constant 0.000000e+00 : f32
    %172 = vector.broadcast %cst_38 : f32 to vector<2x128xf32>
    %173 = arith.subf %172, %154 : vector<2x128xf32>
    %174 = math.exp %173 : vector<2x128xf32>
    %cst_39 = arith.constant 1.000000e+00 : f32
    %175 = vector.broadcast %cst_39 : f32 to vector<2x128xf32>
    %176 = arith.addf %175, %174 : vector<2x128xf32>
    %cst_40 = arith.constant 1.000000e+00 : f32
    %177 = vector.broadcast %cst_40 : f32 to vector<2x128xf32>
    %178 = arith.divf %177, %176 : vector<2x128xf32>
    %179 = math.tanh %154 : vector<2x128xf32>
    %180 = vector.extract_strided_slice %178 {offsets = [0, 0], sizes = [2, 32], strides = [1, 1]} : vector<2x128xf32> to vector<2x32xf32>
    %181 = vector.extract_strided_slice %178 {offsets = [0, 32], sizes = [2, 32], strides = [1, 1]} : vector<2x128xf32> to vector<2x32xf32>
    %182 = vector.extract_strided_slice %179 {offsets = [0, 64], sizes = [2, 32], strides = [1, 1]} : vector<2x128xf32> to vector<2x32xf32>
    %183 = vector.extract_strided_slice %178 {offsets = [0, 96], sizes = [2, 32], strides = [1, 1]} : vector<2x128xf32> to vector<2x32xf32>
    %184 = arith.mulf %181, %143 : vector<2x32xf32>
    %185 = arith.mulf %180, %182 : vector<2x32xf32>
    %186 = arith.addf %184, %185 : vector<2x32xf32>
    %187 = math.tanh %186 : vector<2x32xf32>
    %188 = arith.mulf %183, %187 : vector<2x32xf32>
    %189 = tpu.concatenate %171, %188 in 1 : vector<2x32xf32>, vector<2x32xf32> -> vector<2x64xf32>
    %190 = arith.truncf %189 : vector<2x64xf32> to vector<2x64xbf16>
    %cst_41 = arith.constant dense<0.000000e+00> : vector<2x256xf32>
    %191 = tpu.matmul %190, %10, %cst_41 {dimension_numbers = #tpu.dot_dimension_numbers<[1], [0], [0], [1], [0, 0, 1, 1], [], []>} : vector<2x64xbf16>, vector<64x256xbf16>, vector<2x256xf32> -> vector<2x256xf32>
    %192 = vector.extract_strided_slice %191 {offsets = [0, 0], sizes = [2, 128], strides = [1, 1]} : vector<2x256xf32> to vector<2x128xf32>
    %193 = vector.extract_strided_slice %14 {offsets = [8, 0], sizes = [2, 128], strides = [1, 1]} : vector<16x256xf32> to vector<2x128xf32>
    %194 = arith.addf %192, %193 : vector<2x128xf32>
    %195 = vector.extract_strided_slice %191 {offsets = [0, 128], sizes = [2, 128], strides = [1, 1]} : vector<2x256xf32> to vector<2x128xf32>
    %196 = vector.extract_strided_slice %14 {offsets = [6, 128], sizes = [2, 128], strides = [1, 1]} : vector<16x256xf32> to vector<2x128xf32>
    %197 = arith.addf %195, %196 : vector<2x128xf32>
    %cst_42 = arith.constant 0.000000e+00 : f32
    %198 = vector.broadcast %cst_42 : f32 to vector<2x128xf32>
    %199 = arith.subf %198, %194 : vector<2x128xf32>
    %200 = math.exp %199 : vector<2x128xf32>
    %cst_43 = arith.constant 1.000000e+00 : f32
    %201 = vector.broadcast %cst_43 : f32 to vector<2x128xf32>
    %202 = arith.addf %201, %200 : vector<2x128xf32>
    %cst_44 = arith.constant 1.000000e+00 : f32
    %203 = vector.broadcast %cst_44 : f32 to vector<2x128xf32>
    %204 = arith.divf %203, %202 : vector<2x128xf32>
    %205 = math.tanh %194 : vector<2x128xf32>
    %206 = vector.extract_strided_slice %204 {offsets = [0, 0], sizes = [2, 32], strides = [1, 1]} : vector<2x128xf32> to vector<2x32xf32>
    %207 = vector.extract_strided_slice %204 {offsets = [0, 32], sizes = [2, 32], strides = [1, 1]} : vector<2x128xf32> to vector<2x32xf32>
    %208 = vector.extract_strided_slice %205 {offsets = [0, 64], sizes = [2, 32], strides = [1, 1]} : vector<2x128xf32> to vector<2x32xf32>
    %209 = vector.extract_strided_slice %204 {offsets = [0, 96], sizes = [2, 32], strides = [1, 1]} : vector<2x128xf32> to vector<2x32xf32>
    %210 = arith.mulf %207, %169 : vector<2x32xf32>
    %211 = arith.mulf %206, %208 : vector<2x32xf32>
    %212 = arith.addf %210, %211 : vector<2x32xf32>
    %213 = math.tanh %212 : vector<2x32xf32>
    %214 = arith.mulf %209, %213 : vector<2x32xf32>
    %cst_45 = arith.constant 0.000000e+00 : f32
    %215 = vector.broadcast %cst_45 : f32 to vector<2x128xf32>
    %216 = arith.subf %215, %197 : vector<2x128xf32>
    %217 = math.exp %216 : vector<2x128xf32>
    %cst_46 = arith.constant 1.000000e+00 : f32
    %218 = vector.broadcast %cst_46 : f32 to vector<2x128xf32>
    %219 = arith.addf %218, %217 : vector<2x128xf32>
    %cst_47 = arith.constant 1.000000e+00 : f32
    %220 = vector.broadcast %cst_47 : f32 to vector<2x128xf32>
    %221 = arith.divf %220, %219 : vector<2x128xf32>
    %222 = math.tanh %197 : vector<2x128xf32>
    %223 = vector.extract_strided_slice %221 {offsets = [0, 0], sizes = [2, 32], strides = [1, 1]} : vector<2x128xf32> to vector<2x32xf32>
    %224 = vector.extract_strided_slice %221 {offsets = [0, 32], sizes = [2, 32], strides = [1, 1]} : vector<2x128xf32> to vector<2x32xf32>
    %225 = vector.extract_strided_slice %222 {offsets = [0, 64], sizes = [2, 32], strides = [1, 1]} : vector<2x128xf32> to vector<2x32xf32>
    %226 = vector.extract_strided_slice %221 {offsets = [0, 96], sizes = [2, 32], strides = [1, 1]} : vector<2x128xf32> to vector<2x32xf32>
    %227 = arith.mulf %224, %186 : vector<2x32xf32>
    %228 = arith.mulf %223, %225 : vector<2x32xf32>
    %229 = arith.addf %227, %228 : vector<2x32xf32>
    %230 = math.tanh %229 : vector<2x32xf32>
    %231 = arith.mulf %226, %230 : vector<2x32xf32>
    %232 = tpu.concatenate %214, %231 in 1 : vector<2x32xf32>, vector<2x32xf32> -> vector<2x64xf32>
    %233 = arith.truncf %232 : vector<2x64xf32> to vector<2x64xbf16>
    %cst_48 = arith.constant dense<0.000000e+00> : vector<2x256xf32>
    %234 = tpu.matmul %233, %10, %cst_48 {dimension_numbers = #tpu.dot_dimension_numbers<[1], [0], [0], [1], [0, 0, 1, 1], [], []>} : vector<2x64xbf16>, vector<64x256xbf16>, vector<2x256xf32> -> vector<2x256xf32>
    %235 = vector.extract_strided_slice %234 {offsets = [0, 0], sizes = [2, 128], strides = [1, 1]} : vector<2x256xf32> to vector<2x128xf32>
    %236 = vector.extract_strided_slice %14 {offsets = [10, 0], sizes = [2, 128], strides = [1, 1]} : vector<16x256xf32> to vector<2x128xf32>
    %237 = arith.addf %235, %236 : vector<2x128xf32>
    %238 = vector.extract_strided_slice %234 {offsets = [0, 128], sizes = [2, 128], strides = [1, 1]} : vector<2x256xf32> to vector<2x128xf32>
    %239 = vector.extract_strided_slice %14 {offsets = [4, 128], sizes = [2, 128], strides = [1, 1]} : vector<16x256xf32> to vector<2x128xf32>
    %240 = arith.addf %238, %239 : vector<2x128xf32>
    %cst_49 = arith.constant 0.000000e+00 : f32
    %241 = vector.broadcast %cst_49 : f32 to vector<2x128xf32>
    %242 = arith.subf %241, %237 : vector<2x128xf32>
    %243 = math.exp %242 : vector<2x128xf32>
    %cst_50 = arith.constant 1.000000e+00 : f32
    %244 = vector.broadcast %cst_50 : f32 to vector<2x128xf32>
    %245 = arith.addf %244, %243 : vector<2x128xf32>
    %cst_51 = arith.constant 1.000000e+00 : f32
    %246 = vector.broadcast %cst_51 : f32 to vector<2x128xf32>
    %247 = arith.divf %246, %245 : vector<2x128xf32>
    %248 = math.tanh %237 : vector<2x128xf32>
    %249 = vector.extract_strided_slice %247 {offsets = [0, 0], sizes = [2, 32], strides = [1, 1]} : vector<2x128xf32> to vector<2x32xf32>
    %250 = vector.extract_strided_slice %247 {offsets = [0, 32], sizes = [2, 32], strides = [1, 1]} : vector<2x128xf32> to vector<2x32xf32>
    %251 = vector.extract_strided_slice %248 {offsets = [0, 64], sizes = [2, 32], strides = [1, 1]} : vector<2x128xf32> to vector<2x32xf32>
    %252 = vector.extract_strided_slice %247 {offsets = [0, 96], sizes = [2, 32], strides = [1, 1]} : vector<2x128xf32> to vector<2x32xf32>
    %253 = arith.mulf %250, %212 : vector<2x32xf32>
    %254 = arith.mulf %249, %251 : vector<2x32xf32>
    %255 = arith.addf %253, %254 : vector<2x32xf32>
    %256 = math.tanh %255 : vector<2x32xf32>
    %257 = arith.mulf %252, %256 : vector<2x32xf32>
    %cst_52 = arith.constant 0.000000e+00 : f32
    %258 = vector.broadcast %cst_52 : f32 to vector<2x128xf32>
    %259 = arith.subf %258, %240 : vector<2x128xf32>
    %260 = math.exp %259 : vector<2x128xf32>
    %cst_53 = arith.constant 1.000000e+00 : f32
    %261 = vector.broadcast %cst_53 : f32 to vector<2x128xf32>
    %262 = arith.addf %261, %260 : vector<2x128xf32>
    %cst_54 = arith.constant 1.000000e+00 : f32
    %263 = vector.broadcast %cst_54 : f32 to vector<2x128xf32>
    %264 = arith.divf %263, %262 : vector<2x128xf32>
    %265 = math.tanh %240 : vector<2x128xf32>
    %266 = vector.extract_strided_slice %264 {offsets = [0, 0], sizes = [2, 32], strides = [1, 1]} : vector<2x128xf32> to vector<2x32xf32>
    %267 = vector.extract_strided_slice %264 {offsets = [0, 32], sizes = [2, 32], strides = [1, 1]} : vector<2x128xf32> to vector<2x32xf32>
    %268 = vector.extract_strided_slice %265 {offsets = [0, 64], sizes = [2, 32], strides = [1, 1]} : vector<2x128xf32> to vector<2x32xf32>
    %269 = vector.extract_strided_slice %264 {offsets = [0, 96], sizes = [2, 32], strides = [1, 1]} : vector<2x128xf32> to vector<2x32xf32>
    %270 = arith.mulf %267, %229 : vector<2x32xf32>
    %271 = arith.mulf %266, %268 : vector<2x32xf32>
    %272 = arith.addf %270, %271 : vector<2x32xf32>
    %273 = math.tanh %272 : vector<2x32xf32>
    %274 = arith.mulf %269, %273 : vector<2x32xf32>
    %275 = tpu.concatenate %257, %274 in 1 : vector<2x32xf32>, vector<2x32xf32> -> vector<2x64xf32>
    %276 = arith.truncf %275 : vector<2x64xf32> to vector<2x64xbf16>
    %cst_55 = arith.constant dense<0.000000e+00> : vector<2x256xf32>
    %277 = tpu.matmul %276, %10, %cst_55 {dimension_numbers = #tpu.dot_dimension_numbers<[1], [0], [0], [1], [0, 0, 1, 1], [], []>} : vector<2x64xbf16>, vector<64x256xbf16>, vector<2x256xf32> -> vector<2x256xf32>
    %278 = vector.extract_strided_slice %277 {offsets = [0, 0], sizes = [2, 128], strides = [1, 1]} : vector<2x256xf32> to vector<2x128xf32>
    %279 = vector.extract_strided_slice %14 {offsets = [12, 0], sizes = [2, 128], strides = [1, 1]} : vector<16x256xf32> to vector<2x128xf32>
    %280 = arith.addf %278, %279 : vector<2x128xf32>
    %281 = vector.extract_strided_slice %277 {offsets = [0, 128], sizes = [2, 128], strides = [1, 1]} : vector<2x256xf32> to vector<2x128xf32>
    %282 = vector.extract_strided_slice %14 {offsets = [2, 128], sizes = [2, 128], strides = [1, 1]} : vector<16x256xf32> to vector<2x128xf32>
    %283 = arith.addf %281, %282 : vector<2x128xf32>
    %cst_56 = arith.constant 0.000000e+00 : f32
    %284 = vector.broadcast %cst_56 : f32 to vector<2x128xf32>
    %285 = arith.subf %284, %280 : vector<2x128xf32>
    %286 = math.exp %285 : vector<2x128xf32>
    %cst_57 = arith.constant 1.000000e+00 : f32
    %287 = vector.broadcast %cst_57 : f32 to vector<2x128xf32>
    %288 = arith.addf %287, %286 : vector<2x128xf32>
    %cst_58 = arith.constant 1.000000e+00 : f32
    %289 = vector.broadcast %cst_58 : f32 to vector<2x128xf32>
    %290 = arith.divf %289, %288 : vector<2x128xf32>
    %291 = math.tanh %280 : vector<2x128xf32>
    %292 = vector.extract_strided_slice %290 {offsets = [0, 0], sizes = [2, 32], strides = [1, 1]} : vector<2x128xf32> to vector<2x32xf32>
    %293 = vector.extract_strided_slice %290 {offsets = [0, 32], sizes = [2, 32], strides = [1, 1]} : vector<2x128xf32> to vector<2x32xf32>
    %294 = vector.extract_strided_slice %291 {offsets = [0, 64], sizes = [2, 32], strides = [1, 1]} : vector<2x128xf32> to vector<2x32xf32>
    %295 = vector.extract_strided_slice %290 {offsets = [0, 96], sizes = [2, 32], strides = [1, 1]} : vector<2x128xf32> to vector<2x32xf32>
    %296 = arith.mulf %293, %255 : vector<2x32xf32>
    %297 = arith.mulf %292, %294 : vector<2x32xf32>
    %298 = arith.addf %296, %297 : vector<2x32xf32>
    %299 = math.tanh %298 : vector<2x32xf32>
    %300 = arith.mulf %295, %299 : vector<2x32xf32>
    %cst_59 = arith.constant 0.000000e+00 : f32
    %301 = vector.broadcast %cst_59 : f32 to vector<2x128xf32>
    %302 = arith.subf %301, %283 : vector<2x128xf32>
    %303 = math.exp %302 : vector<2x128xf32>
    %cst_60 = arith.constant 1.000000e+00 : f32
    %304 = vector.broadcast %cst_60 : f32 to vector<2x128xf32>
    %305 = arith.addf %304, %303 : vector<2x128xf32>
    %cst_61 = arith.constant 1.000000e+00 : f32
    %306 = vector.broadcast %cst_61 : f32 to vector<2x128xf32>
    %307 = arith.divf %306, %305 : vector<2x128xf32>
    %308 = math.tanh %283 : vector<2x128xf32>
    %309 = vector.extract_strided_slice %307 {offsets = [0, 0], sizes = [2, 32], strides = [1, 1]} : vector<2x128xf32> to vector<2x32xf32>
    %310 = vector.extract_strided_slice %307 {offsets = [0, 32], sizes = [2, 32], strides = [1, 1]} : vector<2x128xf32> to vector<2x32xf32>
    %311 = vector.extract_strided_slice %308 {offsets = [0, 64], sizes = [2, 32], strides = [1, 1]} : vector<2x128xf32> to vector<2x32xf32>
    %312 = vector.extract_strided_slice %307 {offsets = [0, 96], sizes = [2, 32], strides = [1, 1]} : vector<2x128xf32> to vector<2x32xf32>
    %313 = arith.mulf %310, %272 : vector<2x32xf32>
    %314 = arith.mulf %309, %311 : vector<2x32xf32>
    %315 = arith.addf %313, %314 : vector<2x32xf32>
    %316 = math.tanh %315 : vector<2x32xf32>
    %317 = arith.mulf %312, %316 : vector<2x32xf32>
    %318 = tpu.concatenate %300, %317 in 1 : vector<2x32xf32>, vector<2x32xf32> -> vector<2x64xf32>
    %319 = arith.truncf %318 : vector<2x64xf32> to vector<2x64xbf16>
    %cst_62 = arith.constant dense<0.000000e+00> : vector<2x256xf32>
    %320 = tpu.matmul %319, %10, %cst_62 {dimension_numbers = #tpu.dot_dimension_numbers<[1], [0], [0], [1], [0, 0, 1, 1], [], []>} : vector<2x64xbf16>, vector<64x256xbf16>, vector<2x256xf32> -> vector<2x256xf32>
    %321 = vector.extract_strided_slice %320 {offsets = [0, 0], sizes = [2, 128], strides = [1, 1]} : vector<2x256xf32> to vector<2x128xf32>
    %322 = vector.extract_strided_slice %14 {offsets = [14, 0], sizes = [2, 128], strides = [1, 1]} : vector<16x256xf32> to vector<2x128xf32>
    %323 = arith.addf %321, %322 : vector<2x128xf32>
    %324 = vector.extract_strided_slice %320 {offsets = [0, 128], sizes = [2, 128], strides = [1, 1]} : vector<2x256xf32> to vector<2x128xf32>
    %325 = vector.extract_strided_slice %14 {offsets = [0, 128], sizes = [2, 128], strides = [1, 1]} : vector<16x256xf32> to vector<2x128xf32>
    %326 = arith.addf %324, %325 : vector<2x128xf32>
    %cst_63 = arith.constant 0.000000e+00 : f32
    %327 = vector.broadcast %cst_63 : f32 to vector<2x128xf32>
    %328 = arith.subf %327, %323 : vector<2x128xf32>
    %329 = math.exp %328 : vector<2x128xf32>
    %cst_64 = arith.constant 1.000000e+00 : f32
    %330 = vector.broadcast %cst_64 : f32 to vector<2x128xf32>
    %331 = arith.addf %330, %329 : vector<2x128xf32>
    %cst_65 = arith.constant 1.000000e+00 : f32
    %332 = vector.broadcast %cst_65 : f32 to vector<2x128xf32>
    %333 = arith.divf %332, %331 : vector<2x128xf32>
    %334 = math.tanh %323 : vector<2x128xf32>
    %335 = vector.extract_strided_slice %333 {offsets = [0, 0], sizes = [2, 32], strides = [1, 1]} : vector<2x128xf32> to vector<2x32xf32>
    %336 = vector.extract_strided_slice %333 {offsets = [0, 32], sizes = [2, 32], strides = [1, 1]} : vector<2x128xf32> to vector<2x32xf32>
    %337 = vector.extract_strided_slice %334 {offsets = [0, 64], sizes = [2, 32], strides = [1, 1]} : vector<2x128xf32> to vector<2x32xf32>
    %338 = vector.extract_strided_slice %333 {offsets = [0, 96], sizes = [2, 32], strides = [1, 1]} : vector<2x128xf32> to vector<2x32xf32>
    %339 = arith.mulf %336, %298 : vector<2x32xf32>
    %340 = arith.mulf %335, %337 : vector<2x32xf32>
    %341 = arith.addf %339, %340 : vector<2x32xf32>
    %342 = math.tanh %341 : vector<2x32xf32>
    %343 = arith.mulf %338, %342 : vector<2x32xf32>
    %cst_66 = arith.constant 0.000000e+00 : f32
    %344 = vector.broadcast %cst_66 : f32 to vector<2x128xf32>
    %345 = arith.subf %344, %326 : vector<2x128xf32>
    %346 = math.exp %345 : vector<2x128xf32>
    %cst_67 = arith.constant 1.000000e+00 : f32
    %347 = vector.broadcast %cst_67 : f32 to vector<2x128xf32>
    %348 = arith.addf %347, %346 : vector<2x128xf32>
    %cst_68 = arith.constant 1.000000e+00 : f32
    %349 = vector.broadcast %cst_68 : f32 to vector<2x128xf32>
    %350 = arith.divf %349, %348 : vector<2x128xf32>
    %351 = math.tanh %326 : vector<2x128xf32>
    %352 = vector.extract_strided_slice %350 {offsets = [0, 0], sizes = [2, 32], strides = [1, 1]} : vector<2x128xf32> to vector<2x32xf32>
    %353 = vector.extract_strided_slice %350 {offsets = [0, 32], sizes = [2, 32], strides = [1, 1]} : vector<2x128xf32> to vector<2x32xf32>
    %354 = vector.extract_strided_slice %351 {offsets = [0, 64], sizes = [2, 32], strides = [1, 1]} : vector<2x128xf32> to vector<2x32xf32>
    %355 = vector.extract_strided_slice %350 {offsets = [0, 96], sizes = [2, 32], strides = [1, 1]} : vector<2x128xf32> to vector<2x32xf32>
    %356 = arith.mulf %353, %315 : vector<2x32xf32>
    %357 = arith.mulf %352, %354 : vector<2x32xf32>
    %358 = arith.addf %356, %357 : vector<2x32xf32>
    %359 = math.tanh %358 : vector<2x32xf32>
    %360 = arith.mulf %355, %359 : vector<2x32xf32>
    %361 = tpu.concatenate %42, %360 in 1 : vector<2x32xf32>, vector<2x32xf32> -> vector<2x64xf32>
    %362 = tpu.concatenate %85, %317 in 1 : vector<2x32xf32>, vector<2x32xf32> -> vector<2x64xf32>
    %363 = tpu.concatenate %128, %274 in 1 : vector<2x32xf32>, vector<2x32xf32> -> vector<2x64xf32>
    %364 = tpu.concatenate %171, %231 in 1 : vector<2x32xf32>, vector<2x32xf32> -> vector<2x64xf32>
    %365 = tpu.concatenate %214, %188 in 1 : vector<2x32xf32>, vector<2x32xf32> -> vector<2x64xf32>
    %366 = tpu.concatenate %257, %145 in 1 : vector<2x32xf32>, vector<2x32xf32> -> vector<2x64xf32>
    %367 = tpu.concatenate %300, %102 in 1 : vector<2x32xf32>, vector<2x32xf32> -> vector<2x64xf32>
    %368 = tpu.concatenate %343, %59 in 1 : vector<2x32xf32>, vector<2x32xf32> -> vector<2x64xf32>
    %369 = tpu.concatenate %361, %362, %363, %364, %365, %366, %367, %368 in 0 : vector<2x64xf32>, vector<2x64xf32>, vector<2x64xf32>, vector<2x64xf32>, vector<2x64xf32>, vector<2x64xf32>, vector<2x64xf32>, vector<2x64xf32> -> vector<16x64xf32>
    %c0_69 = arith.constant 0 : index
    %c0_70 = arith.constant 0 : index
    %370 = vector.load %arg5[%c0_69, %c0_70] : memref<64x256xbf16, #tpu.memory_space<vmem>>, vector<64x256xbf16>
    %c0_71 = arith.constant 0 : index
    %c0_72 = arith.constant 0 : index
    %371 = vector.load %arg6[%c0_71, %c0_72] : memref<1x256xf32, #tpu.memory_space<vmem>>, vector<1x256xf32>
    %c0_73 = arith.constant 0 : index
    %c0_74 = arith.constant 0 : index
    %372 = vector.load %arg7[%c0_73, %c0_74] : memref<64x256xbf16, #tpu.memory_space<vmem>>, vector<64x256xbf16>
    %373 = arith.truncf %369 : vector<16x64xf32> to vector<16x64xbf16>
    %cst_75 = arith.constant dense<0.000000e+00> : vector<16x256xf32>
    %374 = tpu.matmul %373, %370, %cst_75 {dimension_numbers = #tpu.dot_dimension_numbers<[1], [0], [0], [1], [0, 0, 1, 1], [], []>} : vector<16x64xbf16>, vector<64x256xbf16>, vector<16x256xf32> -> vector<16x256xf32>
    %375 = vector.broadcast %371 : vector<1x256xf32> to vector<16x256xf32>
    %376 = arith.addf %374, %375 : vector<16x256xf32>
    %cst_76 = arith.constant 0.000000e+00 : f32
    %377 = vector.broadcast %cst_76 : f32 to vector<2x64xf32>
    %cst_77 = arith.constant 0.000000e+00 : f32
    %378 = vector.broadcast %cst_77 : f32 to vector<2x32xf32>
    %cst_78 = arith.constant 0.000000e+00 : f32
    %379 = vector.broadcast %cst_78 : f32 to vector<2x32xf32>
    %380 = arith.truncf %377 : vector<2x64xf32> to vector<2x64xbf16>
    %cst_79 = arith.constant dense<0.000000e+00> : vector<2x256xf32>
    %381 = tpu.matmul %380, %372, %cst_79 {dimension_numbers = #tpu.dot_dimension_numbers<[1], [0], [0], [1], [0, 0, 1, 1], [], []>} : vector<2x64xbf16>, vector<64x256xbf16>, vector<2x256xf32> -> vector<2x256xf32>
    %382 = vector.extract_strided_slice %381 {offsets = [0, 0], sizes = [2, 128], strides = [1, 1]} : vector<2x256xf32> to vector<2x128xf32>
    %383 = vector.extract_strided_slice %376 {offsets = [0, 0], sizes = [2, 128], strides = [1, 1]} : vector<16x256xf32> to vector<2x128xf32>
    %384 = arith.addf %382, %383 : vector<2x128xf32>
    %385 = vector.extract_strided_slice %381 {offsets = [0, 128], sizes = [2, 128], strides = [1, 1]} : vector<2x256xf32> to vector<2x128xf32>
    %386 = vector.extract_strided_slice %376 {offsets = [14, 128], sizes = [2, 128], strides = [1, 1]} : vector<16x256xf32> to vector<2x128xf32>
    %387 = arith.addf %385, %386 : vector<2x128xf32>
    %cst_80 = arith.constant 0.000000e+00 : f32
    %388 = vector.broadcast %cst_80 : f32 to vector<2x128xf32>
    %389 = arith.subf %388, %384 : vector<2x128xf32>
    %390 = math.exp %389 : vector<2x128xf32>
    %cst_81 = arith.constant 1.000000e+00 : f32
    %391 = vector.broadcast %cst_81 : f32 to vector<2x128xf32>
    %392 = arith.addf %391, %390 : vector<2x128xf32>
    %cst_82 = arith.constant 1.000000e+00 : f32
    %393 = vector.broadcast %cst_82 : f32 to vector<2x128xf32>
    %394 = arith.divf %393, %392 : vector<2x128xf32>
    %395 = math.tanh %384 : vector<2x128xf32>
    %396 = vector.extract_strided_slice %394 {offsets = [0, 0], sizes = [2, 32], strides = [1, 1]} : vector<2x128xf32> to vector<2x32xf32>
    %397 = vector.extract_strided_slice %394 {offsets = [0, 32], sizes = [2, 32], strides = [1, 1]} : vector<2x128xf32> to vector<2x32xf32>
    %398 = vector.extract_strided_slice %395 {offsets = [0, 64], sizes = [2, 32], strides = [1, 1]} : vector<2x128xf32> to vector<2x32xf32>
    %399 = vector.extract_strided_slice %394 {offsets = [0, 96], sizes = [2, 32], strides = [1, 1]} : vector<2x128xf32> to vector<2x32xf32>
    %400 = arith.mulf %397, %378 : vector<2x32xf32>
    %401 = arith.mulf %396, %398 : vector<2x32xf32>
    %402 = arith.addf %400, %401 : vector<2x32xf32>
    %403 = math.tanh %402 : vector<2x32xf32>
    %404 = arith.mulf %399, %403 : vector<2x32xf32>
    %cst_83 = arith.constant 0.000000e+00 : f32
    %405 = vector.broadcast %cst_83 : f32 to vector<2x128xf32>
    %406 = arith.subf %405, %387 : vector<2x128xf32>
    %407 = math.exp %406 : vector<2x128xf32>
    %cst_84 = arith.constant 1.000000e+00 : f32
    %408 = vector.broadcast %cst_84 : f32 to vector<2x128xf32>
    %409 = arith.addf %408, %407 : vector<2x128xf32>
    %cst_85 = arith.constant 1.000000e+00 : f32
    %410 = vector.broadcast %cst_85 : f32 to vector<2x128xf32>
    %411 = arith.divf %410, %409 : vector<2x128xf32>
    %412 = math.tanh %387 : vector<2x128xf32>
    %413 = vector.extract_strided_slice %411 {offsets = [0, 0], sizes = [2, 32], strides = [1, 1]} : vector<2x128xf32> to vector<2x32xf32>
    %414 = vector.extract_strided_slice %411 {offsets = [0, 32], sizes = [2, 32], strides = [1, 1]} : vector<2x128xf32> to vector<2x32xf32>
    %415 = vector.extract_strided_slice %412 {offsets = [0, 64], sizes = [2, 32], strides = [1, 1]} : vector<2x128xf32> to vector<2x32xf32>
    %416 = vector.extract_strided_slice %411 {offsets = [0, 96], sizes = [2, 32], strides = [1, 1]} : vector<2x128xf32> to vector<2x32xf32>
    %417 = arith.mulf %414, %379 : vector<2x32xf32>
    %418 = arith.mulf %413, %415 : vector<2x32xf32>
    %419 = arith.addf %417, %418 : vector<2x32xf32>
    %420 = math.tanh %419 : vector<2x32xf32>
    %421 = arith.mulf %416, %420 : vector<2x32xf32>
    %422 = tpu.concatenate %404, %421 in 1 : vector<2x32xf32>, vector<2x32xf32> -> vector<2x64xf32>
    %423 = arith.truncf %422 : vector<2x64xf32> to vector<2x64xbf16>
    %cst_86 = arith.constant dense<0.000000e+00> : vector<2x256xf32>
    %424 = tpu.matmul %423, %372, %cst_86 {dimension_numbers = #tpu.dot_dimension_numbers<[1], [0], [0], [1], [0, 0, 1, 1], [], []>} : vector<2x64xbf16>, vector<64x256xbf16>, vector<2x256xf32> -> vector<2x256xf32>
    %425 = vector.extract_strided_slice %424 {offsets = [0, 0], sizes = [2, 128], strides = [1, 1]} : vector<2x256xf32> to vector<2x128xf32>
    %426 = vector.extract_strided_slice %376 {offsets = [2, 0], sizes = [2, 128], strides = [1, 1]} : vector<16x256xf32> to vector<2x128xf32>
    %427 = arith.addf %425, %426 : vector<2x128xf32>
    %428 = vector.extract_strided_slice %424 {offsets = [0, 128], sizes = [2, 128], strides = [1, 1]} : vector<2x256xf32> to vector<2x128xf32>
    %429 = vector.extract_strided_slice %376 {offsets = [12, 128], sizes = [2, 128], strides = [1, 1]} : vector<16x256xf32> to vector<2x128xf32>
    %430 = arith.addf %428, %429 : vector<2x128xf32>
    %cst_87 = arith.constant 0.000000e+00 : f32
    %431 = vector.broadcast %cst_87 : f32 to vector<2x128xf32>
    %432 = arith.subf %431, %427 : vector<2x128xf32>
    %433 = math.exp %432 : vector<2x128xf32>
    %cst_88 = arith.constant 1.000000e+00 : f32
    %434 = vector.broadcast %cst_88 : f32 to vector<2x128xf32>
    %435 = arith.addf %434, %433 : vector<2x128xf32>
    %cst_89 = arith.constant 1.000000e+00 : f32
    %436 = vector.broadcast %cst_89 : f32 to vector<2x128xf32>
    %437 = arith.divf %436, %435 : vector<2x128xf32>
    %438 = math.tanh %427 : vector<2x128xf32>
    %439 = vector.extract_strided_slice %437 {offsets = [0, 0], sizes = [2, 32], strides = [1, 1]} : vector<2x128xf32> to vector<2x32xf32>
    %440 = vector.extract_strided_slice %437 {offsets = [0, 32], sizes = [2, 32], strides = [1, 1]} : vector<2x128xf32> to vector<2x32xf32>
    %441 = vector.extract_strided_slice %438 {offsets = [0, 64], sizes = [2, 32], strides = [1, 1]} : vector<2x128xf32> to vector<2x32xf32>
    %442 = vector.extract_strided_slice %437 {offsets = [0, 96], sizes = [2, 32], strides = [1, 1]} : vector<2x128xf32> to vector<2x32xf32>
    %443 = arith.mulf %440, %402 : vector<2x32xf32>
    %444 = arith.mulf %439, %441 : vector<2x32xf32>
    %445 = arith.addf %443, %444 : vector<2x32xf32>
    %446 = math.tanh %445 : vector<2x32xf32>
    %447 = arith.mulf %442, %446 : vector<2x32xf32>
    %cst_90 = arith.constant 0.000000e+00 : f32
    %448 = vector.broadcast %cst_90 : f32 to vector<2x128xf32>
    %449 = arith.subf %448, %430 : vector<2x128xf32>
    %450 = math.exp %449 : vector<2x128xf32>
    %cst_91 = arith.constant 1.000000e+00 : f32
    %451 = vector.broadcast %cst_91 : f32 to vector<2x128xf32>
    %452 = arith.addf %451, %450 : vector<2x128xf32>
    %cst_92 = arith.constant 1.000000e+00 : f32
    %453 = vector.broadcast %cst_92 : f32 to vector<2x128xf32>
    %454 = arith.divf %453, %452 : vector<2x128xf32>
    %455 = math.tanh %430 : vector<2x128xf32>
    %456 = vector.extract_strided_slice %454 {offsets = [0, 0], sizes = [2, 32], strides = [1, 1]} : vector<2x128xf32> to vector<2x32xf32>
    %457 = vector.extract_strided_slice %454 {offsets = [0, 32], sizes = [2, 32], strides = [1, 1]} : vector<2x128xf32> to vector<2x32xf32>
    %458 = vector.extract_strided_slice %455 {offsets = [0, 64], sizes = [2, 32], strides = [1, 1]} : vector<2x128xf32> to vector<2x32xf32>
    %459 = vector.extract_strided_slice %454 {offsets = [0, 96], sizes = [2, 32], strides = [1, 1]} : vector<2x128xf32> to vector<2x32xf32>
    %460 = arith.mulf %457, %419 : vector<2x32xf32>
    %461 = arith.mulf %456, %458 : vector<2x32xf32>
    %462 = arith.addf %460, %461 : vector<2x32xf32>
    %463 = math.tanh %462 : vector<2x32xf32>
    %464 = arith.mulf %459, %463 : vector<2x32xf32>
    %465 = tpu.concatenate %447, %464 in 1 : vector<2x32xf32>, vector<2x32xf32> -> vector<2x64xf32>
    %466 = arith.truncf %465 : vector<2x64xf32> to vector<2x64xbf16>
    %cst_93 = arith.constant dense<0.000000e+00> : vector<2x256xf32>
    %467 = tpu.matmul %466, %372, %cst_93 {dimension_numbers = #tpu.dot_dimension_numbers<[1], [0], [0], [1], [0, 0, 1, 1], [], []>} : vector<2x64xbf16>, vector<64x256xbf16>, vector<2x256xf32> -> vector<2x256xf32>
    %468 = vector.extract_strided_slice %467 {offsets = [0, 0], sizes = [2, 128], strides = [1, 1]} : vector<2x256xf32> to vector<2x128xf32>
    %469 = vector.extract_strided_slice %376 {offsets = [4, 0], sizes = [2, 128], strides = [1, 1]} : vector<16x256xf32> to vector<2x128xf32>
    %470 = arith.addf %468, %469 : vector<2x128xf32>
    %471 = vector.extract_strided_slice %467 {offsets = [0, 128], sizes = [2, 128], strides = [1, 1]} : vector<2x256xf32> to vector<2x128xf32>
    %472 = vector.extract_strided_slice %376 {offsets = [10, 128], sizes = [2, 128], strides = [1, 1]} : vector<16x256xf32> to vector<2x128xf32>
    %473 = arith.addf %471, %472 : vector<2x128xf32>
    %cst_94 = arith.constant 0.000000e+00 : f32
    %474 = vector.broadcast %cst_94 : f32 to vector<2x128xf32>
    %475 = arith.subf %474, %470 : vector<2x128xf32>
    %476 = math.exp %475 : vector<2x128xf32>
    %cst_95 = arith.constant 1.000000e+00 : f32
    %477 = vector.broadcast %cst_95 : f32 to vector<2x128xf32>
    %478 = arith.addf %477, %476 : vector<2x128xf32>
    %cst_96 = arith.constant 1.000000e+00 : f32
    %479 = vector.broadcast %cst_96 : f32 to vector<2x128xf32>
    %480 = arith.divf %479, %478 : vector<2x128xf32>
    %481 = math.tanh %470 : vector<2x128xf32>
    %482 = vector.extract_strided_slice %480 {offsets = [0, 0], sizes = [2, 32], strides = [1, 1]} : vector<2x128xf32> to vector<2x32xf32>
    %483 = vector.extract_strided_slice %480 {offsets = [0, 32], sizes = [2, 32], strides = [1, 1]} : vector<2x128xf32> to vector<2x32xf32>
    %484 = vector.extract_strided_slice %481 {offsets = [0, 64], sizes = [2, 32], strides = [1, 1]} : vector<2x128xf32> to vector<2x32xf32>
    %485 = vector.extract_strided_slice %480 {offsets = [0, 96], sizes = [2, 32], strides = [1, 1]} : vector<2x128xf32> to vector<2x32xf32>
    %486 = arith.mulf %483, %445 : vector<2x32xf32>
    %487 = arith.mulf %482, %484 : vector<2x32xf32>
    %488 = arith.addf %486, %487 : vector<2x32xf32>
    %489 = math.tanh %488 : vector<2x32xf32>
    %490 = arith.mulf %485, %489 : vector<2x32xf32>
    %cst_97 = arith.constant 0.000000e+00 : f32
    %491 = vector.broadcast %cst_97 : f32 to vector<2x128xf32>
    %492 = arith.subf %491, %473 : vector<2x128xf32>
    %493 = math.exp %492 : vector<2x128xf32>
    %cst_98 = arith.constant 1.000000e+00 : f32
    %494 = vector.broadcast %cst_98 : f32 to vector<2x128xf32>
    %495 = arith.addf %494, %493 : vector<2x128xf32>
    %cst_99 = arith.constant 1.000000e+00 : f32
    %496 = vector.broadcast %cst_99 : f32 to vector<2x128xf32>
    %497 = arith.divf %496, %495 : vector<2x128xf32>
    %498 = math.tanh %473 : vector<2x128xf32>
    %499 = vector.extract_strided_slice %497 {offsets = [0, 0], sizes = [2, 32], strides = [1, 1]} : vector<2x128xf32> to vector<2x32xf32>
    %500 = vector.extract_strided_slice %497 {offsets = [0, 32], sizes = [2, 32], strides = [1, 1]} : vector<2x128xf32> to vector<2x32xf32>
    %501 = vector.extract_strided_slice %498 {offsets = [0, 64], sizes = [2, 32], strides = [1, 1]} : vector<2x128xf32> to vector<2x32xf32>
    %502 = vector.extract_strided_slice %497 {offsets = [0, 96], sizes = [2, 32], strides = [1, 1]} : vector<2x128xf32> to vector<2x32xf32>
    %503 = arith.mulf %500, %462 : vector<2x32xf32>
    %504 = arith.mulf %499, %501 : vector<2x32xf32>
    %505 = arith.addf %503, %504 : vector<2x32xf32>
    %506 = math.tanh %505 : vector<2x32xf32>
    %507 = arith.mulf %502, %506 : vector<2x32xf32>
    %508 = tpu.concatenate %490, %507 in 1 : vector<2x32xf32>, vector<2x32xf32> -> vector<2x64xf32>
    %509 = arith.truncf %508 : vector<2x64xf32> to vector<2x64xbf16>
    %cst_100 = arith.constant dense<0.000000e+00> : vector<2x256xf32>
    %510 = tpu.matmul %509, %372, %cst_100 {dimension_numbers = #tpu.dot_dimension_numbers<[1], [0], [0], [1], [0, 0, 1, 1], [], []>} : vector<2x64xbf16>, vector<64x256xbf16>, vector<2x256xf32> -> vector<2x256xf32>
    %511 = vector.extract_strided_slice %510 {offsets = [0, 0], sizes = [2, 128], strides = [1, 1]} : vector<2x256xf32> to vector<2x128xf32>
    %512 = vector.extract_strided_slice %376 {offsets = [6, 0], sizes = [2, 128], strides = [1, 1]} : vector<16x256xf32> to vector<2x128xf32>
    %513 = arith.addf %511, %512 : vector<2x128xf32>
    %514 = vector.extract_strided_slice %510 {offsets = [0, 128], sizes = [2, 128], strides = [1, 1]} : vector<2x256xf32> to vector<2x128xf32>
    %515 = vector.extract_strided_slice %376 {offsets = [8, 128], sizes = [2, 128], strides = [1, 1]} : vector<16x256xf32> to vector<2x128xf32>
    %516 = arith.addf %514, %515 : vector<2x128xf32>
    %cst_101 = arith.constant 0.000000e+00 : f32
    %517 = vector.broadcast %cst_101 : f32 to vector<2x128xf32>
    %518 = arith.subf %517, %513 : vector<2x128xf32>
    %519 = math.exp %518 : vector<2x128xf32>
    %cst_102 = arith.constant 1.000000e+00 : f32
    %520 = vector.broadcast %cst_102 : f32 to vector<2x128xf32>
    %521 = arith.addf %520, %519 : vector<2x128xf32>
    %cst_103 = arith.constant 1.000000e+00 : f32
    %522 = vector.broadcast %cst_103 : f32 to vector<2x128xf32>
    %523 = arith.divf %522, %521 : vector<2x128xf32>
    %524 = math.tanh %513 : vector<2x128xf32>
    %525 = vector.extract_strided_slice %523 {offsets = [0, 0], sizes = [2, 32], strides = [1, 1]} : vector<2x128xf32> to vector<2x32xf32>
    %526 = vector.extract_strided_slice %523 {offsets = [0, 32], sizes = [2, 32], strides = [1, 1]} : vector<2x128xf32> to vector<2x32xf32>
    %527 = vector.extract_strided_slice %524 {offsets = [0, 64], sizes = [2, 32], strides = [1, 1]} : vector<2x128xf32> to vector<2x32xf32>
    %528 = vector.extract_strided_slice %523 {offsets = [0, 96], sizes = [2, 32], strides = [1, 1]} : vector<2x128xf32> to vector<2x32xf32>
    %529 = arith.mulf %526, %488 : vector<2x32xf32>
    %530 = arith.mulf %525, %527 : vector<2x32xf32>
    %531 = arith.addf %529, %530 : vector<2x32xf32>
    %532 = math.tanh %531 : vector<2x32xf32>
    %533 = arith.mulf %528, %532 : vector<2x32xf32>
    %cst_104 = arith.constant 0.000000e+00 : f32
    %534 = vector.broadcast %cst_104 : f32 to vector<2x128xf32>
    %535 = arith.subf %534, %516 : vector<2x128xf32>
    %536 = math.exp %535 : vector<2x128xf32>
    %cst_105 = arith.constant 1.000000e+00 : f32
    %537 = vector.broadcast %cst_105 : f32 to vector<2x128xf32>
    %538 = arith.addf %537, %536 : vector<2x128xf32>
    %cst_106 = arith.constant 1.000000e+00 : f32
    %539 = vector.broadcast %cst_106 : f32 to vector<2x128xf32>
    %540 = arith.divf %539, %538 : vector<2x128xf32>
    %541 = math.tanh %516 : vector<2x128xf32>
    %542 = vector.extract_strided_slice %540 {offsets = [0, 0], sizes = [2, 32], strides = [1, 1]} : vector<2x128xf32> to vector<2x32xf32>
    %543 = vector.extract_strided_slice %540 {offsets = [0, 32], sizes = [2, 32], strides = [1, 1]} : vector<2x128xf32> to vector<2x32xf32>
    %544 = vector.extract_strided_slice %541 {offsets = [0, 64], sizes = [2, 32], strides = [1, 1]} : vector<2x128xf32> to vector<2x32xf32>
    %545 = vector.extract_strided_slice %540 {offsets = [0, 96], sizes = [2, 32], strides = [1, 1]} : vector<2x128xf32> to vector<2x32xf32>
    %546 = arith.mulf %543, %505 : vector<2x32xf32>
    %547 = arith.mulf %542, %544 : vector<2x32xf32>
    %548 = arith.addf %546, %547 : vector<2x32xf32>
    %549 = math.tanh %548 : vector<2x32xf32>
    %550 = arith.mulf %545, %549 : vector<2x32xf32>
    %551 = tpu.concatenate %533, %550 in 1 : vector<2x32xf32>, vector<2x32xf32> -> vector<2x64xf32>
    %552 = arith.truncf %551 : vector<2x64xf32> to vector<2x64xbf16>
    %cst_107 = arith.constant dense<0.000000e+00> : vector<2x256xf32>
    %553 = tpu.matmul %552, %372, %cst_107 {dimension_numbers = #tpu.dot_dimension_numbers<[1], [0], [0], [1], [0, 0, 1, 1], [], []>} : vector<2x64xbf16>, vector<64x256xbf16>, vector<2x256xf32> -> vector<2x256xf32>
    %554 = vector.extract_strided_slice %553 {offsets = [0, 0], sizes = [2, 128], strides = [1, 1]} : vector<2x256xf32> to vector<2x128xf32>
    %555 = vector.extract_strided_slice %376 {offsets = [8, 0], sizes = [2, 128], strides = [1, 1]} : vector<16x256xf32> to vector<2x128xf32>
    %556 = arith.addf %554, %555 : vector<2x128xf32>
    %557 = vector.extract_strided_slice %553 {offsets = [0, 128], sizes = [2, 128], strides = [1, 1]} : vector<2x256xf32> to vector<2x128xf32>
    %558 = vector.extract_strided_slice %376 {offsets = [6, 128], sizes = [2, 128], strides = [1, 1]} : vector<16x256xf32> to vector<2x128xf32>
    %559 = arith.addf %557, %558 : vector<2x128xf32>
    %cst_108 = arith.constant 0.000000e+00 : f32
    %560 = vector.broadcast %cst_108 : f32 to vector<2x128xf32>
    %561 = arith.subf %560, %556 : vector<2x128xf32>
    %562 = math.exp %561 : vector<2x128xf32>
    %cst_109 = arith.constant 1.000000e+00 : f32
    %563 = vector.broadcast %cst_109 : f32 to vector<2x128xf32>
    %564 = arith.addf %563, %562 : vector<2x128xf32>
    %cst_110 = arith.constant 1.000000e+00 : f32
    %565 = vector.broadcast %cst_110 : f32 to vector<2x128xf32>
    %566 = arith.divf %565, %564 : vector<2x128xf32>
    %567 = math.tanh %556 : vector<2x128xf32>
    %568 = vector.extract_strided_slice %566 {offsets = [0, 0], sizes = [2, 32], strides = [1, 1]} : vector<2x128xf32> to vector<2x32xf32>
    %569 = vector.extract_strided_slice %566 {offsets = [0, 32], sizes = [2, 32], strides = [1, 1]} : vector<2x128xf32> to vector<2x32xf32>
    %570 = vector.extract_strided_slice %567 {offsets = [0, 64], sizes = [2, 32], strides = [1, 1]} : vector<2x128xf32> to vector<2x32xf32>
    %571 = vector.extract_strided_slice %566 {offsets = [0, 96], sizes = [2, 32], strides = [1, 1]} : vector<2x128xf32> to vector<2x32xf32>
    %572 = arith.mulf %569, %531 : vector<2x32xf32>
    %573 = arith.mulf %568, %570 : vector<2x32xf32>
    %574 = arith.addf %572, %573 : vector<2x32xf32>
    %575 = math.tanh %574 : vector<2x32xf32>
    %576 = arith.mulf %571, %575 : vector<2x32xf32>
    %cst_111 = arith.constant 0.000000e+00 : f32
    %577 = vector.broadcast %cst_111 : f32 to vector<2x128xf32>
    %578 = arith.subf %577, %559 : vector<2x128xf32>
    %579 = math.exp %578 : vector<2x128xf32>
    %cst_112 = arith.constant 1.000000e+00 : f32
    %580 = vector.broadcast %cst_112 : f32 to vector<2x128xf32>
    %581 = arith.addf %580, %579 : vector<2x128xf32>
    %cst_113 = arith.constant 1.000000e+00 : f32
    %582 = vector.broadcast %cst_113 : f32 to vector<2x128xf32>
    %583 = arith.divf %582, %581 : vector<2x128xf32>
    %584 = math.tanh %559 : vector<2x128xf32>
    %585 = vector.extract_strided_slice %583 {offsets = [0, 0], sizes = [2, 32], strides = [1, 1]} : vector<2x128xf32> to vector<2x32xf32>
    %586 = vector.extract_strided_slice %583 {offsets = [0, 32], sizes = [2, 32], strides = [1, 1]} : vector<2x128xf32> to vector<2x32xf32>
    %587 = vector.extract_strided_slice %584 {offsets = [0, 64], sizes = [2, 32], strides = [1, 1]} : vector<2x128xf32> to vector<2x32xf32>
    %588 = vector.extract_strided_slice %583 {offsets = [0, 96], sizes = [2, 32], strides = [1, 1]} : vector<2x128xf32> to vector<2x32xf32>
    %589 = arith.mulf %586, %548 : vector<2x32xf32>
    %590 = arith.mulf %585, %587 : vector<2x32xf32>
    %591 = arith.addf %589, %590 : vector<2x32xf32>
    %592 = math.tanh %591 : vector<2x32xf32>
    %593 = arith.mulf %588, %592 : vector<2x32xf32>
    %594 = tpu.concatenate %576, %593 in 1 : vector<2x32xf32>, vector<2x32xf32> -> vector<2x64xf32>
    %595 = arith.truncf %594 : vector<2x64xf32> to vector<2x64xbf16>
    %cst_114 = arith.constant dense<0.000000e+00> : vector<2x256xf32>
    %596 = tpu.matmul %595, %372, %cst_114 {dimension_numbers = #tpu.dot_dimension_numbers<[1], [0], [0], [1], [0, 0, 1, 1], [], []>} : vector<2x64xbf16>, vector<64x256xbf16>, vector<2x256xf32> -> vector<2x256xf32>
    %597 = vector.extract_strided_slice %596 {offsets = [0, 0], sizes = [2, 128], strides = [1, 1]} : vector<2x256xf32> to vector<2x128xf32>
    %598 = vector.extract_strided_slice %376 {offsets = [10, 0], sizes = [2, 128], strides = [1, 1]} : vector<16x256xf32> to vector<2x128xf32>
    %599 = arith.addf %597, %598 : vector<2x128xf32>
    %600 = vector.extract_strided_slice %596 {offsets = [0, 128], sizes = [2, 128], strides = [1, 1]} : vector<2x256xf32> to vector<2x128xf32>
    %601 = vector.extract_strided_slice %376 {offsets = [4, 128], sizes = [2, 128], strides = [1, 1]} : vector<16x256xf32> to vector<2x128xf32>
    %602 = arith.addf %600, %601 : vector<2x128xf32>
    %cst_115 = arith.constant 0.000000e+00 : f32
    %603 = vector.broadcast %cst_115 : f32 to vector<2x128xf32>
    %604 = arith.subf %603, %599 : vector<2x128xf32>
    %605 = math.exp %604 : vector<2x128xf32>
    %cst_116 = arith.constant 1.000000e+00 : f32
    %606 = vector.broadcast %cst_116 : f32 to vector<2x128xf32>
    %607 = arith.addf %606, %605 : vector<2x128xf32>
    %cst_117 = arith.constant 1.000000e+00 : f32
    %608 = vector.broadcast %cst_117 : f32 to vector<2x128xf32>
    %609 = arith.divf %608, %607 : vector<2x128xf32>
    %610 = math.tanh %599 : vector<2x128xf32>
    %611 = vector.extract_strided_slice %609 {offsets = [0, 0], sizes = [2, 32], strides = [1, 1]} : vector<2x128xf32> to vector<2x32xf32>
    %612 = vector.extract_strided_slice %609 {offsets = [0, 32], sizes = [2, 32], strides = [1, 1]} : vector<2x128xf32> to vector<2x32xf32>
    %613 = vector.extract_strided_slice %610 {offsets = [0, 64], sizes = [2, 32], strides = [1, 1]} : vector<2x128xf32> to vector<2x32xf32>
    %614 = vector.extract_strided_slice %609 {offsets = [0, 96], sizes = [2, 32], strides = [1, 1]} : vector<2x128xf32> to vector<2x32xf32>
    %615 = arith.mulf %612, %574 : vector<2x32xf32>
    %616 = arith.mulf %611, %613 : vector<2x32xf32>
    %617 = arith.addf %615, %616 : vector<2x32xf32>
    %618 = math.tanh %617 : vector<2x32xf32>
    %619 = arith.mulf %614, %618 : vector<2x32xf32>
    %cst_118 = arith.constant 0.000000e+00 : f32
    %620 = vector.broadcast %cst_118 : f32 to vector<2x128xf32>
    %621 = arith.subf %620, %602 : vector<2x128xf32>
    %622 = math.exp %621 : vector<2x128xf32>
    %cst_119 = arith.constant 1.000000e+00 : f32
    %623 = vector.broadcast %cst_119 : f32 to vector<2x128xf32>
    %624 = arith.addf %623, %622 : vector<2x128xf32>
    %cst_120 = arith.constant 1.000000e+00 : f32
    %625 = vector.broadcast %cst_120 : f32 to vector<2x128xf32>
    %626 = arith.divf %625, %624 : vector<2x128xf32>
    %627 = math.tanh %602 : vector<2x128xf32>
    %628 = vector.extract_strided_slice %626 {offsets = [0, 0], sizes = [2, 32], strides = [1, 1]} : vector<2x128xf32> to vector<2x32xf32>
    %629 = vector.extract_strided_slice %626 {offsets = [0, 32], sizes = [2, 32], strides = [1, 1]} : vector<2x128xf32> to vector<2x32xf32>
    %630 = vector.extract_strided_slice %627 {offsets = [0, 64], sizes = [2, 32], strides = [1, 1]} : vector<2x128xf32> to vector<2x32xf32>
    %631 = vector.extract_strided_slice %626 {offsets = [0, 96], sizes = [2, 32], strides = [1, 1]} : vector<2x128xf32> to vector<2x32xf32>
    %632 = arith.mulf %629, %591 : vector<2x32xf32>
    %633 = arith.mulf %628, %630 : vector<2x32xf32>
    %634 = arith.addf %632, %633 : vector<2x32xf32>
    %635 = math.tanh %634 : vector<2x32xf32>
    %636 = arith.mulf %631, %635 : vector<2x32xf32>
    %637 = tpu.concatenate %619, %636 in 1 : vector<2x32xf32>, vector<2x32xf32> -> vector<2x64xf32>
    %638 = arith.truncf %637 : vector<2x64xf32> to vector<2x64xbf16>
    %cst_121 = arith.constant dense<0.000000e+00> : vector<2x256xf32>
    %639 = tpu.matmul %638, %372, %cst_121 {dimension_numbers = #tpu.dot_dimension_numbers<[1], [0], [0], [1], [0, 0, 1, 1], [], []>} : vector<2x64xbf16>, vector<64x256xbf16>, vector<2x256xf32> -> vector<2x256xf32>
    %640 = vector.extract_strided_slice %639 {offsets = [0, 0], sizes = [2, 128], strides = [1, 1]} : vector<2x256xf32> to vector<2x128xf32>
    %641 = vector.extract_strided_slice %376 {offsets = [12, 0], sizes = [2, 128], strides = [1, 1]} : vector<16x256xf32> to vector<2x128xf32>
    %642 = arith.addf %640, %641 : vector<2x128xf32>
    %643 = vector.extract_strided_slice %639 {offsets = [0, 128], sizes = [2, 128], strides = [1, 1]} : vector<2x256xf32> to vector<2x128xf32>
    %644 = vector.extract_strided_slice %376 {offsets = [2, 128], sizes = [2, 128], strides = [1, 1]} : vector<16x256xf32> to vector<2x128xf32>
    %645 = arith.addf %643, %644 : vector<2x128xf32>
    %cst_122 = arith.constant 0.000000e+00 : f32
    %646 = vector.broadcast %cst_122 : f32 to vector<2x128xf32>
    %647 = arith.subf %646, %642 : vector<2x128xf32>
    %648 = math.exp %647 : vector<2x128xf32>
    %cst_123 = arith.constant 1.000000e+00 : f32
    %649 = vector.broadcast %cst_123 : f32 to vector<2x128xf32>
    %650 = arith.addf %649, %648 : vector<2x128xf32>
    %cst_124 = arith.constant 1.000000e+00 : f32
    %651 = vector.broadcast %cst_124 : f32 to vector<2x128xf32>
    %652 = arith.divf %651, %650 : vector<2x128xf32>
    %653 = math.tanh %642 : vector<2x128xf32>
    %654 = vector.extract_strided_slice %652 {offsets = [0, 0], sizes = [2, 32], strides = [1, 1]} : vector<2x128xf32> to vector<2x32xf32>
    %655 = vector.extract_strided_slice %652 {offsets = [0, 32], sizes = [2, 32], strides = [1, 1]} : vector<2x128xf32> to vector<2x32xf32>
    %656 = vector.extract_strided_slice %653 {offsets = [0, 64], sizes = [2, 32], strides = [1, 1]} : vector<2x128xf32> to vector<2x32xf32>
    %657 = vector.extract_strided_slice %652 {offsets = [0, 96], sizes = [2, 32], strides = [1, 1]} : vector<2x128xf32> to vector<2x32xf32>
    %658 = arith.mulf %655, %617 : vector<2x32xf32>
    %659 = arith.mulf %654, %656 : vector<2x32xf32>
    %660 = arith.addf %658, %659 : vector<2x32xf32>
    %661 = math.tanh %660 : vector<2x32xf32>
    %662 = arith.mulf %657, %661 : vector<2x32xf32>
    %cst_125 = arith.constant 0.000000e+00 : f32
    %663 = vector.broadcast %cst_125 : f32 to vector<2x128xf32>
    %664 = arith.subf %663, %645 : vector<2x128xf32>
    %665 = math.exp %664 : vector<2x128xf32>
    %cst_126 = arith.constant 1.000000e+00 : f32
    %666 = vector.broadcast %cst_126 : f32 to vector<2x128xf32>
    %667 = arith.addf %666, %665 : vector<2x128xf32>
    %cst_127 = arith.constant 1.000000e+00 : f32
    %668 = vector.broadcast %cst_127 : f32 to vector<2x128xf32>
    %669 = arith.divf %668, %667 : vector<2x128xf32>
    %670 = math.tanh %645 : vector<2x128xf32>
    %671 = vector.extract_strided_slice %669 {offsets = [0, 0], sizes = [2, 32], strides = [1, 1]} : vector<2x128xf32> to vector<2x32xf32>
    %672 = vector.extract_strided_slice %669 {offsets = [0, 32], sizes = [2, 32], strides = [1, 1]} : vector<2x128xf32> to vector<2x32xf32>
    %673 = vector.extract_strided_slice %670 {offsets = [0, 64], sizes = [2, 32], strides = [1, 1]} : vector<2x128xf32> to vector<2x32xf32>
    %674 = vector.extract_strided_slice %669 {offsets = [0, 96], sizes = [2, 32], strides = [1, 1]} : vector<2x128xf32> to vector<2x32xf32>
    %675 = arith.mulf %672, %634 : vector<2x32xf32>
    %676 = arith.mulf %671, %673 : vector<2x32xf32>
    %677 = arith.addf %675, %676 : vector<2x32xf32>
    %678 = math.tanh %677 : vector<2x32xf32>
    %679 = arith.mulf %674, %678 : vector<2x32xf32>
    %680 = tpu.concatenate %662, %679 in 1 : vector<2x32xf32>, vector<2x32xf32> -> vector<2x64xf32>
    %681 = arith.truncf %680 : vector<2x64xf32> to vector<2x64xbf16>
    %cst_128 = arith.constant dense<0.000000e+00> : vector<2x256xf32>
    %682 = tpu.matmul %681, %372, %cst_128 {dimension_numbers = #tpu.dot_dimension_numbers<[1], [0], [0], [1], [0, 0, 1, 1], [], []>} : vector<2x64xbf16>, vector<64x256xbf16>, vector<2x256xf32> -> vector<2x256xf32>
    %683 = vector.extract_strided_slice %682 {offsets = [0, 0], sizes = [2, 128], strides = [1, 1]} : vector<2x256xf32> to vector<2x128xf32>
    %684 = vector.extract_strided_slice %376 {offsets = [14, 0], sizes = [2, 128], strides = [1, 1]} : vector<16x256xf32> to vector<2x128xf32>
    %685 = arith.addf %683, %684 : vector<2x128xf32>
    %cst_129 = arith.constant 0.000000e+00 : f32
    %686 = vector.broadcast %cst_129 : f32 to vector<2x128xf32>
    %687 = arith.subf %686, %685 : vector<2x128xf32>
    %688 = math.exp %687 : vector<2x128xf32>
    %cst_130 = arith.constant 1.000000e+00 : f32
    %689 = vector.broadcast %cst_130 : f32 to vector<2x128xf32>
    %690 = arith.addf %689, %688 : vector<2x128xf32>
    %cst_131 = arith.constant 1.000000e+00 : f32
    %691 = vector.broadcast %cst_131 : f32 to vector<2x128xf32>
    %692 = arith.divf %691, %690 : vector<2x128xf32>
    %693 = math.tanh %685 : vector<2x128xf32>
    %694 = vector.extract_strided_slice %692 {offsets = [0, 0], sizes = [2, 32], strides = [1, 1]} : vector<2x128xf32> to vector<2x32xf32>
    %695 = vector.extract_strided_slice %692 {offsets = [0, 32], sizes = [2, 32], strides = [1, 1]} : vector<2x128xf32> to vector<2x32xf32>
    %696 = vector.extract_strided_slice %693 {offsets = [0, 64], sizes = [2, 32], strides = [1, 1]} : vector<2x128xf32> to vector<2x32xf32>
    %697 = vector.extract_strided_slice %692 {offsets = [0, 96], sizes = [2, 32], strides = [1, 1]} : vector<2x128xf32> to vector<2x32xf32>
    %698 = arith.mulf %695, %660 : vector<2x32xf32>
    %699 = arith.mulf %694, %696 : vector<2x32xf32>
    %700 = arith.addf %698, %699 : vector<2x32xf32>
    %701 = math.tanh %700 : vector<2x32xf32>
    %702 = arith.mulf %697, %701 : vector<2x32xf32>
    %703 = tpu.concatenate %702, %421 in 1 : vector<2x32xf32>, vector<2x32xf32> -> vector<2x64xf32>
    %704 = arith.truncf %703 : vector<2x64xf32> to vector<2x64xbf16>
    %c0_132 = arith.constant 0 : index
    %c0_133 = arith.constant 0 : index
    %705 = vector.load %arg8[%c0_132, %c0_133] : memref<64x4xbf16, #tpu.memory_space<vmem>>, vector<64x4xbf16>
    %cst_134 = arith.constant dense<0.000000e+00> : vector<2x4xf32>
    %706 = tpu.matmul %704, %705, %cst_134 {dimension_numbers = #tpu.dot_dimension_numbers<[1], [0], [0], [1], [0, 0, 1, 1], [], []>} : vector<2x64xbf16>, vector<64x4xbf16>, vector<2x4xf32> -> vector<2x4xf32>
    %c0_135 = arith.constant 0 : index
    %c0_136 = arith.constant 0 : index
    %707 = vector.load %arg9[%c0_135, %c0_136] : memref<1x4xf32, #tpu.memory_space<vmem>>, vector<1x4xf32>
    %708 = vector.broadcast %707 : vector<1x4xf32> to vector<2x4xf32>
    %709 = arith.addf %706, %708 : vector<2x4xf32>
    %cst_137 = arith.constant 0.000000e+00 : f32
    %710 = vector.broadcast %cst_137 : f32 to vector<2x4xf32>
    %711 = arith.maximumf %709, %710 : vector<2x4xf32>
    %c0_138 = arith.constant 0 : index
    %c0_139 = arith.constant 0 : index
    %712 = vector.load %arg10[%c0_138, %c0_139] : memref<2x4xf32, #tpu.memory_space<vmem>>, vector<2x4xf32>
    tpu.vector_store %arg10[%c0_138, %c0_139], %711 {strides = array<i32>} : memref<2x4xf32, #tpu.memory_space<vmem>>, vector<2x4xf32>,
    return
  }
}

</mosaic_0001>

<llo_original>
// kernel: lstm_module_forward.1
$region0: #{lstm_module_forward.1}
  #allocation0 [shape = 'u32[]', space=smem, size = 0x4, offset = 0x4, fixed_abs, tag = 'smem constant byte address 0x4 - core index']
  #allocation1 [shape = 'u32[144,128]{1,0:T(1,128)}', space=vmem, size = 0x12000, scoped, tag = 'internal scratch']
  %s0 = inlined_call_operand.vmem [shape: s32[16,1], index: 0, kind: input, shape index: {}]
  %s1 = inlined_call_operand.vmem [shape: f32[50,32], index: 1, kind: input, shape index: {}]
  %s2 = inlined_call_operand.hbm [shape: bf16[32,256], index: 2, kind: input, shape index: {}]
  %s3 = inlined_call_operand.vmem [shape: f32[1,256], index: 3, kind: input, shape index: {}]
  %s4 = inlined_call_operand.vmem [shape: bf16[64,256], index: 4, kind: input, shape index: {}]
  %s5 = inlined_call_operand.vmem [shape: bf16[64,256], index: 5, kind: input, shape index: {}]
  %s6 = inlined_call_operand.vmem [shape: f32[1,256], index: 6, kind: input, shape index: {}]
  %s7 = inlined_call_operand.hbm [shape: bf16[64,256], index: 7, kind: input, shape index: {}]
  %s8 = inlined_call_operand.vmem [shape: bf16[64,4], index: 8, kind: input, shape index: {}]
  %s9 = inlined_call_operand.vmem [shape: f32[1,4], index: 9, kind: input, shape index: {}]
  %s10 = inlined_call_operand.hbm [shape: f32[2,4], index: 10, kind: output, shape index: {}]
  %s11 = sld [smem:[#allocation0]]
  $region58: #{lstm_module_forward.1} parent=0
    _
  %s13 = ssub.s32 1, %s11
  %s14 = scalar_select 0, %s13, %s11
  $region1: #{lstm_module_forward.1} parent=0
    #allocation2 [shape = 'u8[16384]{0}', space=vmem, size = 0x4000, scoped, tag = 'input window, operand 2, single buffered']
    #allocation3 [shape = 's32[1]{0}', space=sflag, size = 0x4, scoped, tag = 'scoped memory for lstm_module_forward.1']
    #allocation4 [shape = 's32[1]{0}', space=sflag, size = 0x4, scoped, tag = 'scoped memory for lstm_module_forward.1']
    #allocation5 [shape = 'u8[32768]{0}', space=vmem, size = 0x8000, scoped, tag = 'input window, operand 7, single buffered']
    #allocation6 [shape = 's32[1]{0}', space=sflag, size = 0x4, scoped, tag = 'scoped memory for lstm_module_forward.1']
    #allocation7 [shape = 'u8[1024]{0}', space=vmem, size = 0x400, scoped, tag = 'output window, operand 0, single buffered']
    %15 = vsyncpa [#allocation3], 0
    %16 = vsyncpa [#allocation6], 0
    %17 = vsyncpa [#allocation4], 0
    // Predicated region
    $region2: #{lstm_module_forward.1} parent=1 // pred_check
      _
    $region3: #{lstm_module_forward.1} parent=1 // pred_check_branch
      %19 = sbr.rel (0) target = $region5
    $region4: #{lstm_module_forward.1} parent=1 // pred_region
      _
    $region5: #{lstm_module_forward.1} parent=1 // pred_fallthru
      _
    // Predicated region
    $region6: #{lstm_module_forward.1} parent=1 // pred_check
      _
    $region7: #{lstm_module_forward.1} parent=1 // pred_check_branch
      %21 = sbr.rel (0) target = $region9
    $region8: #{lstm_module_forward.1} parent=1 // pred_region
      _
    $region9: #{lstm_module_forward.1} parent=1 // pred_fallthru
      _
    // Predicated region
    $region10: #{lstm_module_forward.1} parent=1 // pred_check
      _
    $region11: #{lstm_module_forward.1} parent=1 // pred_check_branch
      %23 = sbr.rel (0) target = $region13
    $region12: #{lstm_module_forward.1} parent=1 // pred_region
      %s25 = ssub.s32 512, 512
      %26 = vsyncadd [#allocation3], %s25
      %s27 = sshll.u32 [#allocation2], 4
      %s28 = int_to_ptr.vmem [resolvable:$true] %s27
      %33 = dma.hbm_to_vmem [thread:$0]  %s2, 512, %s28, [#allocation3], 128, 128, 8
    $region13: #{lstm_module_forward.1} parent=1 // pred_fallthru
      _
    // Predicated region
    $region14: #{lstm_module_forward.1} parent=1 // pred_check
      _
    $region15: #{lstm_module_forward.1} parent=1 // pred_check_branch
      %35 = sbr.rel (0) target = $region17
    $region16: #{lstm_module_forward.1} parent=1 // pred_region
      _
    $region17: #{lstm_module_forward.1} parent=1 // pred_fallthru
      _
    // Predicated region
    $region18: #{lstm_module_forward.1} parent=1 // pred_check
      _
    $region19: #{lstm_module_forward.1} parent=1 // pred_check_branch
      %37 = sbr.rel (0) target = $region21
    $region20: #{lstm_module_forward.1} parent=1 // pred_region
      _
    $region21: #{lstm_module_forward.1} parent=1 // pred_fallthru
      _
    // Predicated region
    $region22: #{lstm_module_forward.1} parent=1 // pred_check
      _
    $region23: #{lstm_module_forward.1} parent=1 // pred_check_branch
      %39 = sbr.rel (0) target = $region25
    $region24: #{lstm_module_forward.1} parent=1 // pred_region
      _
    $region25: #{lstm_module_forward.1} parent=1 // pred_fallthru
      _
    // Predicated region
    $region26: #{lstm_module_forward.1} parent=1 // pred_check
      _
    $region27: #{lstm_module_forward.1} parent=1 // pred_check_branch
      %41 = sbr.rel (0) target = $region29
    $region28: #{lstm_module_forward.1} parent=1 // pred_region
      _
    $region29: #{lstm_module_forward.1} parent=1 // pred_fallthru
      _
    // Predicated region
    $region30: #{lstm_module_forward.1} parent=1 // pred_check
      _
    $region31: #{lstm_module_forward.1} parent=1 // pred_check_branch
      %43 = sbr.rel (0) target = $region33
    $region32: #{lstm_module_forward.1} parent=1 // pred_region
      %s45 = ssub.s32 1024, 1024
      %46 = vsyncadd [#allocation6], %s45
      %s47 = sshll.u32 [#allocation5], 4
      %s48 = int_to_ptr.vmem [resolvable:$true] %s47
      %53 = dma.hbm_to_vmem [thread:$0]  %s7, 1024, %s48, [#allocation6], 128, 128, 8
    $region33: #{lstm_module_forward.1} parent=1 // pred_fallthru
      _
    // Predicated region
    $region34: #{lstm_module_forward.1} parent=1 // pred_check
      _
    $region35: #{lstm_module_forward.1} parent=1 // pred_check_branch
      %55 = sbr.rel (0) target = $region37
    $region36: #{lstm_module_forward.1} parent=1 // pred_region
      _
    $region37: #{lstm_module_forward.1} parent=1 // pred_fallthru
      _
    // Predicated region
    $region38: #{lstm_module_forward.1} parent=1 // pred_check
      _
    $region39: #{lstm_module_forward.1} parent=1 // pred_check_branch
      %57 = sbr.rel (0) target = $region41
    $region40: #{lstm_module_forward.1} parent=1 // pred_region
      _
    $region41: #{lstm_module_forward.1} parent=1 // pred_fallthru
      _
    // Predicated region
    $region42: #{lstm_module_forward.1} parent=1 // pred_check
      _
    $region43: #{lstm_module_forward.1} parent=1 // pred_check_branch
      %59 = sbr.rel (0) target = $region45
    $region44: #{lstm_module_forward.1} parent=1 // pred_region
      %60 = dma.done [#allocation3], 512
    $region45: #{lstm_module_forward.1} parent=1 // pred_fallthru
      _
    // Predicated region
    $region46: #{lstm_module_forward.1} parent=1 // pred_check
      _
    $region47: #{lstm_module_forward.1} parent=1 // pred_check_branch
      %62 = sbr.rel (0) target = $region49
    $region48: #{lstm_module_forward.1} parent=1 // pred_region
      %63 = dma.done [#allocation6], 1024
    $region49: #{lstm_module_forward.1} parent=1 // pred_fallthru
      _
    %v65 = vld [vmem:[%s0] sm:$0xff]
    %v66 = vld [vmem:[%s0 + $0x8] sm:$0xff]
    %v67 = vlaneseq
    %v68 = vand.u32 %v67, 127
    %69 = vset.pattern.permute.xlu0 0
    %70 = vperm.xlu0 %69, %v65
    %v71 = vpop.permute.xlu0 %70
    %72 = vset.pattern.permute.xlu0 0
    %73 = vperm.xlu0 %72, %v66
    %v74 = vpop.permute.xlu0 %73
    %vm75 = vcmp.eq.s32.totalorder %v68, %v71
    %vm76 = vcmp.eq.s32.totalorder %v68, %v74
    %v77 = vsel %vm75, 1, 0
    %v78 = vsel %vm76, 1, 0
    %v79 = vcvt.s32.f32 %v77
    %v80 = vcvt.s32.f32 %v78
    %v81 = vld [vmem:[%s1] sm:$0xff]
    %v82 = vld [vmem:[%s1 + $0x8] sm:$0xff]
    %v83 = vld [vmem:[%s1 + $0x10] sm:$0xff]
    %v84 = vld [vmem:[%s1 + $0x18] sm:$0xff]
    %v85 = vld [vmem:[%s1 + $0x20] sm:$0xff]
    %v86 = vld [vmem:[%s1 + $0x28] sm:$0xff]
    %v87 = vld [vmem:[%s1 + $0x30] sm:$0x3]
    %vm88 = vcmask 408576
    %v90 = vsel %vm88, %v79, 0
    %v93 = vsel %vm88, %v80, 0
    %vm95 = vcmask 1041408
    %v97 = vsel %vm95, %v87, 0
    %99 = vmatprep.subr.mxu0 0.0
    %100 = vmatpush1.msra.mxu0 %v81
    %101 = vmatprep.subr.mxu0 0.0
    %102 = vmatpush1.msra.mxu0 %v82
    %103 = vmatprep.subr.mxu0 0.0
    %104 = vmatpush1.msra.mxu0 %v83
    %105 = vmatprep.subr.mxu0 0.0
    %106 = vmatpush1.msra.mxu0 %v84
    %107 = vmatprep.subr.mxu0 0.0
    %108 = vmatpush1.msra.mxu0 %v85
    %109 = vmatprep.subr.mxu0 0.0
    %110 = vmatpush1.msra.mxu0 %v86
    %111 = vmatprep.subr.mxu0 0.0
    %112 = vmatpush1.msra.mxu0 %v97
    %113 = vmatprep.subr.mxu0 0.0
    %114 = vmatpush1.msra.mxu0 0.0
    %115 = vmatprep.subr.mxu0 0.0
    %116 = vmatpush1.msra.mxu0 0.0
    %117 = vmatprep.subr.mxu0 0.0
    %118 = vmatpush1.msra.mxu0 0.0
    %119 = vmatprep.subr.mxu0 0.0
    %120 = vmatpush1.msra.mxu0 0.0
    %121 = vmatprep.subr.mxu0 0.0
    %122 = vmatpush1.msra.mxu0 0.0
    %123 = vmatprep.subr.mxu0 0.0
    %124 = vmatpush1.msra.mxu0 0.0
    %125 = vmatprep.subr.mxu0 0.0
    %126 = vmatpush1.msra.mxu0 0.0
    %127 = vmatprep.subr.mxu0 0.0
    %128 = vmatpush1.msra.mxu0 0.0
    %129 = vmatprep.subr.mxu0 0.0
    %130 = vmatpush1.msra.mxu0 0.0
    %131 = vmatprep.subr.mxu0 0.0
    %132 = vmatpush1.msra.mxu0 0.0
    %133 = vmatprep.subr.mxu0 0.0
    %134 = vmatpush1.msra.mxu0 0.0
    %135 = vmatprep.subr.mxu0 0.0
    %136 = vmatpush1.msra.mxu0 0.0
    %137 = vmatprep.subr.mxu0 0.0
    %138 = vmatpush1.msra.mxu0 0.0
    %139 = vmatprep.subr.mxu0 0.0
    %140 = vmatpush1.msra.mxu0 0.0
    %141 = vmatprep.subr.mxu0 0.0
    %142 = vmatpush1.msra.mxu0 0.0
    %143 = vmatprep.subr.mxu0 0.0
    %144 = vmatpush1.msra.mxu0 0.0
    %145 = vmatprep.subr.mxu0 0.0
    %146 = vmatpush1.msra.mxu0 0.0
    %147 = vmatprep.subr.mxu0 0.0
    %148 = vmatpush1.msra.mxu0 0.0
    %149 = vmatprep.subr.mxu0 0.0
    %150 = vmatpush1.msra.mxu0 0.0
    %151 = vmatprep.subr.mxu0 0.0
    %152 = vmatpush1.msra.mxu0 0.0
    %153 = vmatprep.subr.mxu0 0.0
    %154 = vmatpush1.msra.mxu0 0.0
    %155 = vmatprep.subr.mxu0 0.0
    %156 = vmatpush1.msra.mxu0 0.0
    %157 = vmatprep.subr.mxu0 0.0
    %158 = vmatpush1.msra.mxu0 0.0
    %159 = vmatprep.subr.mxu0 0.0
    %160 = vmatpush1.msra.mxu0 0.0
    %161 = vmatprep.subr.mxu0 0.0
    %162 = vmatpush1.msra.mxu0 0.0
    %163 = vmatprep.mubr.f32.mxu0 0.0
    %164 = vmatmul.mubr.f32.gmra.mrb[0].mxu0 %v90
    %v165 = vpop.f32.mrb[0].mxu0
    %v166 = vadd.f32 0.0, %v165
    %v167 = vpop.f32.mrb[0].mxu0
    %168 = vmatprep.mubr.f32.mxu0 0.0
    %169 = vmatmul.mubr.f32.gmra.mrb[0].mxu0 %v93
    %v170 = vpop.f32.mrb[0].mxu0
    %v171 = vadd.f32 0.0, %v170
    %v172 = vpop.f32.mrb[0].mxu0
    %173 = vdwg.mxu0
    %v174 = vld [vmem:[#allocation2] sm:$0xff]
    %v175 = vld [vmem:[#allocation2 + $0x8] sm:$0xff]
    %v176 = vld [vmem:[#allocation2 + $0x10] sm:$0xff]
    %v177 = vld [vmem:[#allocation2 + $0x18] sm:$0xff]
    %v178 = vld [vmem:[%s3] sm:$0x3]
    %v179 = vld [vmem:[%s4] sm:$0xff]
    %v180 = vld [vmem:[%s4 + $0x8] sm:$0xff]
    %v181 = vld [vmem:[%s4 + $0x10] sm:$0xff]
    %v182 = vld [vmem:[%s4 + $0x18] sm:$0xff]
    %v183 = vld [vmem:[%s4 + $0x20] sm:$0xff]
    %v184 = vld [vmem:[%s4 + $0x28] sm:$0xff]
    %v185 = vld [vmem:[%s4 + $0x30] sm:$0xff]
    %v186 = vld [vmem:[%s4 + $0x38] sm:$0xff]
    %v187 = vpack.c.bf16 %v171, %v166
    %v189 = vlaneseq
    %v190 = vshrl.u32 %v189, 7
    %v191 = vsub.s32 0, %v190
    %v192 = vrot.slane %v178, %v191
    %v193 = vlaneseq
    %v194 = vshrl.u32 %v193, 7
    %v195 = vsub.s32 1, %v194
    %v196 = vrot.slane %v178, %v195
    %v203 = vunpack.c.l.b16 %v174
    %v204 = vunpack.c.h.b16 %v174
    %v205 = vunpack.c.l.b16 %v175
    %v206 = vunpack.c.h.b16 %v175
    %v207 = vunpack.c.l.b16 %v176
    %v208 = vunpack.c.h.b16 %v176
    %v209 = vunpack.c.l.b16 %v177
    %v210 = vunpack.c.h.b16 %v177
    %v211 = vpack.c.b16 %v205, %v203
    %v212 = vpack.c.b16 %v206, %v204
    %v213 = vpack.c.b16 %v209, %v207
    %v214 = vpack.c.b16 %v210, %v208
    %vm219 = vcmask 261120
    %v221 = vsel %vm219, %v187, 0
    %223 = vmatprep.subr.bf16.mxu0 %v212
    %224 = vmatpush1.bf16.msra.mxu0 %v211
    %225 = vmatprep.subr.bf16.mxu0 %v214
    %226 = vmatpush1.bf16.msra.mxu0 %v213
    %227 = vmatprep.subr.bf16.mxu0 0
    %228 = vmatpush1.bf16.msra.mxu0 0
    %229 = vmatprep.subr.bf16.mxu0 0
    %230 = vmatpush1.bf16.msra.mxu0 0
    %231 = vmatprep.subr.bf16.mxu0 0
    %232 = vmatpush1.bf16.msra.mxu0 0
    %233 = vmatprep.subr.bf16.mxu0 0
    %234 = vmatpush1.bf16.msra.mxu0 0
    %235 = vmatprep.subr.bf16.mxu0 0
    %236 = vmatpush1.bf16.msra.mxu0 0
    %237 = vmatprep.subr.bf16.mxu0 0
    %238 = vmatpush1.bf16.msra.mxu0 0
    %239 = vmatprep.subr.bf16.mxu0 0
    %240 = vmatpush1.bf16.msra.mxu0 0
    %241 = vmatprep.subr.bf16.mxu0 0
    %242 = vmatpush1.bf16.msra.mxu0 0
    %243 = vmatprep.subr.bf16.mxu0 0
    %244 = vmatpush1.bf16.msra.mxu0 0
    %245 = vmatprep.subr.bf16.mxu0 0
    %246 = vmatpush1.bf16.msra.mxu0 0
    %247 = vmatprep.subr.bf16.mxu0 0
    %248 = vmatpush1.bf16.msra.mxu0 0
    %249 = vmatprep.subr.bf16.mxu0 0
    %250 = vmatpush1.bf16.msra.mxu0 0
    %251 = vmatprep.subr.bf16.mxu0 0
    %252 = vmatpush1.bf16.msra.mxu0 0
    %253 = vmatprep.subr.bf16.mxu0 0
    %254 = vmatpush1.bf16.msra.mxu0 0
    %255 = vmatprep.mubr.bf16.mxu0 0
    %256 = vmatmul.mubr.bf16.gmra.mrb[0].mxu0 %v221
    %v257 = vpop.f32.mrb[0].mxu0
    %v258 = vadd.f32 %v192, %v257
    %v259 = vpop.f32.mrb[0].mxu0
    %v260 = vadd.f32 %v196, %v259
    %v261 = vpop.f32.mrb[0].mxu0
    %v262 = vadd.f32 %v192, %v261
    %v263 = vpop.f32.mrb[0].mxu0
    %v264 = vadd.f32 %v196, %v263
    %265 = vdwg.mxu0
    %v274 = vunpack.c.l.b16 %v179
    %v275 = vunpack.c.h.b16 %v179
    %v276 = vunpack.c.l.b16 %v180
    %v277 = vunpack.c.h.b16 %v180
    %v278 = vunpack.c.l.b16 %v181
    %v279 = vunpack.c.h.b16 %v181
    %v280 = vunpack.c.l.b16 %v182
    %v281 = vunpack.c.h.b16 %v182
    %v282 = vunpack.c.l.b16 %v183
    %v283 = vunpack.c.h.b16 %v183
    %v284 = vunpack.c.l.b16 %v184
    %v285 = vunpack.c.h.b16 %v184
    %v286 = vunpack.c.l.b16 %v185
    %v287 = vunpack.c.h.b16 %v185
    %v288 = vunpack.c.l.b16 %v186
    %v289 = vunpack.c.h.b16 %v186
    %v290 = vpack.c.b16 %v276, %v274
    %v291 = vpack.c.b16 %v277, %v275
    %v292 = vpack.c.b16 %v280, %v278
    %v293 = vpack.c.b16 %v281, %v279
    %v294 = vpack.c.b16 %v284, %v282
    %v295 = vpack.c.b16 %v285, %v283
    %v296 = vpack.c.b16 %v288, %v286
    %v297 = vpack.c.b16 %v289, %v287
    %vm306 = vcmask 523264
    %v308 = vsel %vm306, 0, 0
    %310 = vmatprep.subr.bf16.mxu0 %v291
    %311 = vmatpush1.bf16.msra.mxu0 %v290
    %312 = vmatprep.subr.bf16.mxu0 %v293
    %313 = vmatpush1.bf16.msra.mxu0 %v292
    %314 = vmatprep.subr.bf16.mxu0 %v295
    %315 = vmatpush1.bf16.msra.mxu0 %v294
    %316 = vmatprep.subr.bf16.mxu0 %v297
    %317 = vmatpush1.bf16.msra.mxu0 %v296
    %318 = vmatprep.subr.bf16.mxu0 0
    %319 = vmatpush1.bf16.msra.mxu0 0
    %320 = vmatprep.subr.bf16.mxu0 0
    %321 = vmatpush1.bf16.msra.mxu0 0
    %322 = vmatprep.subr.bf16.mxu0 0
    %323 = vmatpush1.bf16.msra.mxu0 0
    %324 = vmatprep.subr.bf16.mxu0 0
    %325 = vmatpush1.bf16.msra.mxu0 0
    %326 = vmatprep.subr.bf16.mxu0 0
    %327 = vmatpush1.bf16.msra.mxu0 0
    %328 = vmatprep.subr.bf16.mxu0 0
    %329 = vmatpush1.bf16.msra.mxu0 0
    %330 = vmatprep.subr.bf16.mxu0 0
    %331 = vmatpush1.bf16.msra.mxu0 0
    %332 = vmatprep.subr.bf16.mxu0 0
    %333 = vmatpush1.bf16.msra.mxu0 0
    %334 = vmatprep.subr.bf16.mxu0 0
    %335 = vmatpush1.bf16.msra.mxu0 0
    %336 = vmatprep.subr.bf16.mxu0 0
    %337 = vmatpush1.bf16.msra.mxu0 0
    %338 = vmatprep.subr.bf16.mxu0 0
    %339 = vmatpush1.bf16.msra.mxu0 0
    %340 = vmatprep.subr.bf16.mxu0 0
    %341 = vmatpush1.bf16.msra.mxu0 0
    %342 = vmatprep.mubr.bf16.mxu0 0
    %343 = vmatmul.mubr.bf16.gmra.mrb[0].mxu0 %v308
    %v344 = vpop.f32.mrb[0].mxu0
    %v345 = vadd.f32 0.0, %v344
    %v346 = vpop.f32.mrb[0].mxu0
    %v347 = vadd.f32 0.0, %v346
    %v348 = vpop.f32.mrb[0].mxu0
    %v349 = vpop.f32.mrb[0].mxu0
    %350 = vdwg.mxu0
    %v351 = vadd.f32 %v345, %v258
    %v353 = vrot.slane %v264, 6
    %v355 = vadd.f32 %v347, %v353
    %v356 = vsub.f32 0.0, %v351
    %v357 = vmul.f32 %v356, 1.442695
    %v358 = vpow.pop %v357
    %v359 = vadd.f32 %v358, 1.0
    %v360 = vrcp.pop %v359
    %v361 = vmul.f32 1.0, %v360
    %v362 = vtanh.pop %v351
    %v363 = vmul.f32 %v361, 0.0
    %365 = vrot.lane.b32.xlu0 %v362, 64
    %v366 = vpop.permute.xlu0 %365
    %v368 = vmul.f32 %v361, %v366
    %370 = vrot.lane.b32.xlu0 %v368, 32
    %v371 = vpop.permute.xlu0 %370
    %v373 = vadd.f32 %v363, %v371
    %v374 = vtanh.pop %v373
    %376 = vrot.lane.b32.xlu0 %v374, 64
    %v377 = vpop.permute.xlu0 %376
    %v379 = vmul.f32 %v361, %v377
    %v380 = vsub.f32 0.0, %v355
    %v381 = vmul.f32 %v380, 1.442695
    %v382 = vpow.pop %v381
    %v383 = vadd.f32 %v382, 1.0
    %v384 = vrcp.pop %v383
    %v385 = vmul.f32 1.0, %v384
    %v386 = vtanh.pop %v355
    %v387 = vmul.f32 %v385, 0.0
    %389 = vrot.lane.b32.xlu0 %v386, 64
    %v390 = vpop.permute.xlu0 %389
    %v392 = vmul.f32 %v385, %v390
    %394 = vrot.lane.b32.xlu0 %v392, 32
    %v395 = vpop.permute.xlu0 %394
    %v397 = vadd.f32 %v387, %v395
    %v398 = vtanh.pop %v397
    %400 = vrot.lane.b32.xlu0 %v398, 64
    %v401 = vpop.permute.xlu0 %400
    %v403 = vmul.f32 %v385, %v401
    %405 = vrot.lane.b32.xlu0 %v379, 32
    %v406 = vpop.permute.xlu0 %405
    %409 = vrot.lane.b32.xlu0 %v403, 64
    %v410 = vpop.permute.xlu0 %409
    %v412 = vsel %vm219, %v406, %v410
    %v413 = vpack.c.bf16 %v412, %v412
    %v415 = vsel %vm306, %v413, 0
    %417 = vmatprep.subr.bf16.mxu0 %v291
    %418 = vmatpush1.bf16.msra.mxu0 %v290
    %419 = vmatprep.subr.bf16.mxu0 %v293
    %420 = vmatpush1.bf16.msra.mxu0 %v292
    %421 = vmatprep.subr.bf16.mxu0 %v295
    %422 = vmatpush1.bf16.msra.mxu0 %v294
    %423 = vmatprep.subr.bf16.mxu0 %v297
    %424 = vmatpush1.bf16.msra.mxu0 %v296
    %425 = vmatprep.subr.bf16.mxu0 0
    %426 = vmatpush1.bf16.msra.mxu0 0
    %427 = vmatprep.subr.bf16.mxu0 0
    %428 = vmatpush1.bf16.msra.mxu0 0
    %429 = vmatprep.subr.bf16.mxu0 0
    %430 = vmatpush1.bf16.msra.mxu0 0
    %431 = vmatprep.subr.bf16.mxu0 0
    %432 = vmatpush1.bf16.msra.mxu0 0
    %433 = vmatprep.subr.bf16.mxu0 0
    %434 = vmatpush1.bf16.msra.mxu0 0
    %435 = vmatprep.subr.bf16.mxu0 0
    %436 = vmatpush1.bf16.msra.mxu0 0
    %437 = vmatprep.subr.bf16.mxu0 0
    %438 = vmatpush1.bf16.msra.mxu0 0
    %439 = vmatprep.subr.bf16.mxu0 0
    %440 = vmatpush1.bf16.msra.mxu0 0
    %441 = vmatprep.subr.bf16.mxu0 0
    %442 = vmatpush1.bf16.msra.mxu0 0
    %443 = vmatprep.subr.bf16.mxu0 0
    %444 = vmatpush1.bf16.msra.mxu0 0
    %445 = vmatprep.subr.bf16.mxu0 0
    %446 = vmatpush1.bf16.msra.mxu0 0
    %447 = vmatprep.subr.bf16.mxu0 0
    %448 = vmatpush1.bf16.msra.mxu0 0
    %449 = vmatprep.mubr.bf16.mxu0 0
    %450 = vmatmul.mubr.bf16.gmra.mrb[0].mxu0 %v415
    %v451 = vpop.f32.mrb[0].mxu0
    %v452 = vadd.f32 0.0, %v451
    %v453 = vpop.f32.mrb[0].mxu0
    %v454 = vadd.f32 0.0, %v453
    %v455 = vpop.f32.mrb[0].mxu0
    %v456 = vpop.f32.mrb[0].mxu0
    %457 = vdwg.mxu0
    %v459 = vrot.slane %v258, 2
    %v461 = vadd.f32 %v452, %v459
    %v462 = vrot.slane %v264, 4
    %v464 = vadd.f32 %v454, %v462
    %v465 = vsub.f32 0.0, %v461
    %v466 = vmul.f32 %v465, 1.442695
    %v467 = vpow.pop %v466
    %v468 = vadd.f32 %v467, 1.0
    %v469 = vrcp.pop %v468
    %v470 = vmul.f32 1.0, %v469
    %v471 = vtanh.pop %v461
    %v472 = vmul.f32 %v470, %v373
    %474 = vrot.lane.b32.xlu0 %v471, 64
    %v475 = vpop.permute.xlu0 %474
    %v477 = vmul.f32 %v470, %v475
    %479 = vrot.lane.b32.xlu0 %v477, 32
    %v480 = vpop.permute.xlu0 %479
    %v482 = vadd.f32 %v472, %v480
    %v483 = vtanh.pop %v482
    %485 = vrot.lane.b32.xlu0 %v483, 64
    %v486 = vpop.permute.xlu0 %485
    %v488 = vmul.f32 %v470, %v486
    %v489 = vsub.f32 0.0, %v464
    %v490 = vmul.f32 %v489, 1.442695
    %v491 = vpow.pop %v490
    %v492 = vadd.f32 %v491, 1.0
    %v493 = vrcp.pop %v492
    %v494 = vmul.f32 1.0, %v493
    %v495 = vtanh.pop %v464
    %v496 = vmul.f32 %v494, %v397
    %498 = vrot.lane.b32.xlu0 %v495, 64
    %v499 = vpop.permute.xlu0 %498
    %v501 = vmul.f32 %v494, %v499
    %503 = vrot.lane.b32.xlu0 %v501, 32
    %v504 = vpop.permute.xlu0 %503
    %v506 = vadd.f32 %v496, %v504
    %v507 = vtanh.pop %v506
    %509 = vrot.lane.b32.xlu0 %v507, 64
    %v510 = vpop.permute.xlu0 %509
    %v512 = vmul.f32 %v494, %v510
    %514 = vrot.lane.b32.xlu0 %v488, 32
    %v515 = vpop.permute.xlu0 %514
    %518 = vrot.lane.b32.xlu0 %v512, 64
    %v519 = vpop.permute.xlu0 %518
    %v521 = vsel %vm219, %v515, %v519
    %v522 = vpack.c.bf16 %v521, %v521
    %v524 = vsel %vm306, %v522, 0
    %526 = vmatprep.subr.bf16.mxu0 %v291
    %527 = vmatpush1.bf16.msra.mxu0 %v290
    %528 = vmatprep.subr.bf16.mxu0 %v293
    %529 = vmatpush1.bf16.msra.mxu0 %v292
    %530 = vmatprep.subr.bf16.mxu0 %v295
    %531 = vmatpush1.bf16.msra.mxu0 %v294
    %532 = vmatprep.subr.bf16.mxu0 %v297
    %533 = vmatpush1.bf16.msra.mxu0 %v296
    %534 = vmatprep.subr.bf16.mxu0 0
    %535 = vmatpush1.bf16.msra.mxu0 0
    %536 = vmatprep.subr.bf16.mxu0 0
    %537 = vmatpush1.bf16.msra.mxu0 0
    %538 = vmatprep.subr.bf16.mxu0 0
    %539 = vmatpush1.bf16.msra.mxu0 0
    %540 = vmatprep.subr.bf16.mxu0 0
    %541 = vmatpush1.bf16.msra.mxu0 0
    %542 = vmatprep.subr.bf16.mxu0 0
    %543 = vmatpush1.bf16.msra.mxu0 0
    %544 = vmatprep.subr.bf16.mxu0 0
    %545 = vmatpush1.bf16.msra.mxu0 0
    %546 = vmatprep.subr.bf16.mxu0 0
    %547 = vmatpush1.bf16.msra.mxu0 0
    %548 = vmatprep.subr.bf16.mxu0 0
    %549 = vmatpush1.bf16.msra.mxu0 0
    %550 = vmatprep.subr.bf16.mxu0 0
    %551 = vmatpush1.bf16.msra.mxu0 0
    %552 = vmatprep.subr.bf16.mxu0 0
    %553 = vmatpush1.bf16.msra.mxu0 0
    %554 = vmatprep.subr.bf16.mxu0 0
    %555 = vmatpush1.bf16.msra.mxu0 0
    %556 = vmatprep.subr.bf16.mxu0 0
    %557 = vmatpush1.bf16.msra.mxu0 0
    %558 = vmatprep.mubr.bf16.mxu0 0
    %559 = vmatmul.mubr.bf16.gmra.mrb[0].mxu0 %v524
    %v560 = vpop.f32.mrb[0].mxu0
    %v561 = vadd.f32 0.0, %v560
    %v562 = vpop.f32.mrb[0].mxu0
    %v563 = vadd.f32 0.0, %v562
    %v564 = vpop.f32.mrb[0].mxu0
    %v565 = vpop.f32.mrb[0].mxu0
    %566 = vdwg.mxu0
    %v567 = vrot.slane %v258, 4
    %v569 = vadd.f32 %v561, %v567
    %v570 = vrot.slane %v264, 2
    %v572 = vadd.f32 %v563, %v570
    %v573 = vsub.f32 0.0, %v569
    %v574 = vmul.f32 %v573, 1.442695
    %v575 = vpow.pop %v574
    %v576 = vadd.f32 %v575, 1.0
    %v577 = vrcp.pop %v576
    %v578 = vmul.f32 1.0, %v577
    %v579 = vtanh.pop %v569
    %v580 = vmul.f32 %v578, %v482
    %582 = vrot.lane.b32.xlu0 %v579, 64
    %v583 = vpop.permute.xlu0 %582
    %v585 = vmul.f32 %v578, %v583
    %587 = vrot.lane.b32.xlu0 %v585, 32
    %v588 = vpop.permute.xlu0 %587
    %v590 = vadd.f32 %v580, %v588
    %v591 = vtanh.pop %v590
    %593 = vrot.lane.b32.xlu0 %v591, 64
    %v594 = vpop.permute.xlu0 %593
    %v596 = vmul.f32 %v578, %v594
    %v597 = vsub.f32 0.0, %v572
    %v598 = vmul.f32 %v597, 1.442695
    %v599 = vpow.pop %v598
    %v600 = vadd.f32 %v599, 1.0
    %v601 = vrcp.pop %v600
    %v602 = vmul.f32 1.0, %v601
    %v603 = vtanh.pop %v572
    %v604 = vmul.f32 %v602, %v506
    %606 = vrot.lane.b32.xlu0 %v603, 64
    %v607 = vpop.permute.xlu0 %606
    %v609 = vmul.f32 %v602, %v607
    %611 = vrot.lane.b32.xlu0 %v609, 32
    %v612 = vpop.permute.xlu0 %611
    %v614 = vadd.f32 %v604, %v612
    %v615 = vtanh.pop %v614
    %617 = vrot.lane.b32.xlu0 %v615, 64
    %v618 = vpop.permute.xlu0 %617
    %v620 = vmul.f32 %v602, %v618
    %622 = vrot.lane.b32.xlu0 %v596, 32
    %v623 = vpop.permute.xlu0 %622
    %626 = vrot.lane.b32.xlu0 %v620, 64
    %v627 = vpop.permute.xlu0 %626
    %v629 = vsel %vm219, %v623, %v627
    %v630 = vpack.c.bf16 %v629, %v629
    %v632 = vsel %vm306, %v630, 0
    %634 = vmatprep.subr.bf16.mxu0 %v291
    %635 = vmatpush1.bf16.msra.mxu0 %v290
    %636 = vmatprep.subr.bf16.mxu0 %v293
    %637 = vmatpush1.bf16.msra.mxu0 %v292
    %638 = vmatprep.subr.bf16.mxu0 %v295
    %639 = vmatpush1.bf16.msra.mxu0 %v294
    %640 = vmatprep.subr.bf16.mxu0 %v297
    %641 = vmatpush1.bf16.msra.mxu0 %v296
    %642 = vmatprep.subr.bf16.mxu0 0
    %643 = vmatpush1.bf16.msra.mxu0 0
    %644 = vmatprep.subr.bf16.mxu0 0
    %645 = vmatpush1.bf16.msra.mxu0 0
    %646 = vmatprep.subr.bf16.mxu0 0
    %647 = vmatpush1.bf16.msra.mxu0 0
    %648 = vmatprep.subr.bf16.mxu0 0
    %649 = vmatpush1.bf16.msra.mxu0 0
    %650 = vmatprep.subr.bf16.mxu0 0
    %651 = vmatpush1.bf16.msra.mxu0 0
    %652 = vmatprep.subr.bf16.mxu0 0
    %653 = vmatpush1.bf16.msra.mxu0 0
    %654 = vmatprep.subr.bf16.mxu0 0
    %655 = vmatpush1.bf16.msra.mxu0 0
    %656 = vmatprep.subr.bf16.mxu0 0
    %657 = vmatpush1.bf16.msra.mxu0 0
    %658 = vmatprep.subr.bf16.mxu0 0
    %659 = vmatpush1.bf16.msra.mxu0 0
    %660 = vmatprep.subr.bf16.mxu0 0
    %661 = vmatpush1.bf16.msra.mxu0 0
    %662 = vmatprep.subr.bf16.mxu0 0
    %663 = vmatpush1.bf16.msra.mxu0 0
    %664 = vmatprep.subr.bf16.mxu0 0
    %665 = vmatpush1.bf16.msra.mxu0 0
    %666 = vmatprep.mubr.bf16.mxu0 0
    %667 = vmatmul.mubr.bf16.gmra.mrb[0].mxu0 %v632
    %v668 = vpop.f32.mrb[0].mxu0
    %v669 = vadd.f32 0.0, %v668
    %v670 = vpop.f32.mrb[0].mxu0
    %v671 = vadd.f32 0.0, %v670
    %v672 = vpop.f32.mrb[0].mxu0
    %v673 = vpop.f32.mrb[0].mxu0
    %674 = vdwg.mxu0
    %v675 = vrot.slane %v258, 6
    %v677 = vadd.f32 %v669, %v675
    %v678 = vadd.f32 %v671, %v264
    %v679 = vsub.f32 0.0, %v677
    %v680 = vmul.f32 %v679, 1.442695
    %v681 = vpow.pop %v680
    %v682 = vadd.f32 %v681, 1.0
    %v683 = vrcp.pop %v682
    %v684 = vmul.f32 1.0, %v683
    %v685 = vtanh.pop %v677
    %v686 = vmul.f32 %v684, %v590
    %688 = vrot.lane.b32.xlu0 %v685, 64
    %v689 = vpop.permute.xlu0 %688
    %v691 = vmul.f32 %v684, %v689
    %693 = vrot.lane.b32.xlu0 %v691, 32
    %v694 = vpop.permute.xlu0 %693
    %v696 = vadd.f32 %v686, %v694
    %v697 = vtanh.pop %v696
    %699 = vrot.lane.b32.xlu0 %v697, 64
    %v700 = vpop.permute.xlu0 %699
    %v702 = vmul.f32 %v684, %v700
    %v703 = vsub.f32 0.0, %v678
    %v704 = vmul.f32 %v703, 1.442695
    %v705 = vpow.pop %v704
    %v706 = vadd.f32 %v705, 1.0
    %v707 = vrcp.pop %v706
    %v708 = vmul.f32 1.0, %v707
    %v709 = vtanh.pop %v678
    %v710 = vmul.f32 %v708, %v614
    %712 = vrot.lane.b32.xlu0 %v709, 64
    %v713 = vpop.permute.xlu0 %712
    %v715 = vmul.f32 %v708, %v713
    %717 = vrot.lane.b32.xlu0 %v715, 32
    %v718 = vpop.permute.xlu0 %717
    %v720 = vadd.f32 %v710, %v718
    %v721 = vtanh.pop %v720
    %723 = vrot.lane.b32.xlu0 %v721, 64
    %v724 = vpop.permute.xlu0 %723
    %v726 = vmul.f32 %v708, %v724
    %728 = vrot.lane.b32.xlu0 %v702, 32
    %v729 = vpop.permute.xlu0 %728
    %732 = vrot.lane.b32.xlu0 %v726, 64
    %v733 = vpop.permute.xlu0 %732
    %v735 = vsel %vm219, %v729, %v733
    %v736 = vpack.c.bf16 %v735, %v735
    %v738 = vsel %vm306, %v736, 0
    %740 = vmatprep.subr.bf16.mxu0 %v291
    %741 = vmatpush1.bf16.msra.mxu0 %v290
    %742 = vmatprep.subr.bf16.mxu0 %v293
    %743 = vmatpush1.bf16.msra.mxu0 %v292
    %744 = vmatprep.subr.bf16.mxu0 %v295
    %745 = vmatpush1.bf16.msra.mxu0 %v294
    %746 = vmatprep.subr.bf16.mxu0 %v297
    %747 = vmatpush1.bf16.msra.mxu0 %v296
    %748 = vmatprep.subr.bf16.mxu0 0
    %749 = vmatpush1.bf16.msra.mxu0 0
    %750 = vmatprep.subr.bf16.mxu0 0
    %751 = vmatpush1.bf16.msra.mxu0 0
    %752 = vmatprep.subr.bf16.mxu0 0
    %753 = vmatpush1.bf16.msra.mxu0 0
    %754 = vmatprep.subr.bf16.mxu0 0
    %755 = vmatpush1.bf16.msra.mxu0 0
    %756 = vmatprep.subr.bf16.mxu0 0
    %757 = vmatpush1.bf16.msra.mxu0 0
    %758 = vmatprep.subr.bf16.mxu0 0
    %759 = vmatpush1.bf16.msra.mxu0 0
    %760 = vmatprep.subr.bf16.mxu0 0
    %761 = vmatpush1.bf16.msra.mxu0 0
    %762 = vmatprep.subr.bf16.mxu0 0
    %763 = vmatpush1.bf16.msra.mxu0 0
    %764 = vmatprep.subr.bf16.mxu0 0
    %765 = vmatpush1.bf16.msra.mxu0 0
    %766 = vmatprep.subr.bf16.mxu0 0
    %767 = vmatpush1.bf16.msra.mxu0 0
    %768 = vmatprep.subr.bf16.mxu0 0
    %769 = vmatpush1.bf16.msra.mxu0 0
    %770 = vmatprep.subr.bf16.mxu0 0
    %771 = vmatpush1.bf16.msra.mxu0 0
    %772 = vmatprep.mubr.bf16.mxu0 0
    %773 = vmatmul.mubr.bf16.gmra.mrb[0].mxu0 %v738
    %v774 = vpop.f32.mrb[0].mxu0
    %v775 = vadd.f32 0.0, %v774
    %v776 = vpop.f32.mrb[0].mxu0
    %v777 = vadd.f32 0.0, %v776
    %v778 = vpop.f32.mrb[0].mxu0
    %v779 = vpop.f32.mrb[0].mxu0
    %780 = vdwg.mxu0
    %v781 = vadd.f32 %v775, %v262
    %v783 = vrot.slane %v260, 6
    %v785 = vadd.f32 %v777, %v783
    %v786 = vsub.f32 0.0, %v781
    %v787 = vmul.f32 %v786, 1.442695
    %v788 = vpow.pop %v787
    %v789 = vadd.f32 %v788, 1.0
    %v790 = vrcp.pop %v789
    %v791 = vmul.f32 1.0, %v790
    %v792 = vtanh.pop %v781
    %v793 = vmul.f32 %v791, %v696
    %795 = vrot.lane.b32.xlu0 %v792, 64
    %v796 = vpop.permute.xlu0 %795
    %v798 = vmul.f32 %v791, %v796
    %800 = vrot.lane.b32.xlu0 %v798, 32
    %v801 = vpop.permute.xlu0 %800
    %v803 = vadd.f32 %v793, %v801
    %v804 = vtanh.pop %v803
    %806 = vrot.lane.b32.xlu0 %v804, 64
    %v807 = vpop.permute.xlu0 %806
    %v809 = vmul.f32 %v791, %v807
    %v810 = vsub.f32 0.0, %v785
    %v811 = vmul.f32 %v810, 1.442695
    %v812 = vpow.pop %v811
    %v813 = vadd.f32 %v812, 1.0
    %v814 = vrcp.pop %v813
    %v815 = vmul.f32 1.0, %v814
    %v816 = vtanh.pop %v785
    %v817 = vmul.f32 %v815, %v720
    %819 = vrot.lane.b32.xlu0 %v816, 64
    %v820 = vpop.permute.xlu0 %819
    %v822 = vmul.f32 %v815, %v820
    %824 = vrot.lane.b32.xlu0 %v822, 32
    %v825 = vpop.permute.xlu0 %824
    %v827 = vadd.f32 %v817, %v825
    %v828 = vtanh.pop %v827
    %830 = vrot.lane.b32.xlu0 %v828, 64
    %v831 = vpop.permute.xlu0 %830
    %v833 = vmul.f32 %v815, %v831
    %835 = vrot.lane.b32.xlu0 %v809, 32
    %v836 = vpop.permute.xlu0 %835
    %839 = vrot.lane.b32.xlu0 %v833, 64
    %v840 = vpop.permute.xlu0 %839
    %v842 = vsel %vm219, %v836, %v840
    %v843 = vpack.c.bf16 %v842, %v842
    %v845 = vsel %vm306, %v843, 0
    %847 = vmatprep.subr.bf16.mxu0 %v291
    %848 = vmatpush1.bf16.msra.mxu0 %v290
    %849 = vmatprep.subr.bf16.mxu0 %v293
    %850 = vmatpush1.bf16.msra.mxu0 %v292
    %851 = vmatprep.subr.bf16.mxu0 %v295
    %852 = vmatpush1.bf16.msra.mxu0 %v294
    %853 = vmatprep.subr.bf16.mxu0 %v297
    %854 = vmatpush1.bf16.msra.mxu0 %v296
    %855 = vmatprep.subr.bf16.mxu0 0
    %856 = vmatpush1.bf16.msra.mxu0 0
    %857 = vmatprep.subr.bf16.mxu0 0
    %858 = vmatpush1.bf16.msra.mxu0 0
    %859 = vmatprep.subr.bf16.mxu0 0
    %860 = vmatpush1.bf16.msra.mxu0 0
    %861 = vmatprep.subr.bf16.mxu0 0
    %862 = vmatpush1.bf16.msra.mxu0 0
    %863 = vmatprep.subr.bf16.mxu0 0
    %864 = vmatpush1.bf16.msra.mxu0 0
    %865 = vmatprep.subr.bf16.mxu0 0
    %866 = vmatpush1.bf16.msra.mxu0 0
    %867 = vmatprep.subr.bf16.mxu0 0
    %868 = vmatpush1.bf16.msra.mxu0 0
    %869 = vmatprep.subr.bf16.mxu0 0
    %870 = vmatpush1.bf16.msra.mxu0 0
    %871 = vmatprep.subr.bf16.mxu0 0
    %872 = vmatpush1.bf16.msra.mxu0 0
    %873 = vmatprep.subr.bf16.mxu0 0
    %874 = vmatpush1.bf16.msra.mxu0 0
    %875 = vmatprep.subr.bf16.mxu0 0
    %876 = vmatpush1.bf16.msra.mxu0 0
    %877 = vmatprep.subr.bf16.mxu0 0
    %878 = vmatpush1.bf16.msra.mxu0 0
    %879 = vmatprep.mubr.bf16.mxu0 0
    %880 = vmatmul.mubr.bf16.gmra.mrb[0].mxu0 %v845
    %v881 = vpop.f32.mrb[0].mxu0
    %v882 = vadd.f32 0.0, %v881
    %v883 = vpop.f32.mrb[0].mxu0
    %v884 = vadd.f32 0.0, %v883
    %v885 = vpop.f32.mrb[0].mxu0
    %v886 = vpop.f32.mrb[0].mxu0
    %887 = vdwg.mxu0
    %v889 = vrot.slane %v262, 2
    %v891 = vadd.f32 %v882, %v889
    %v892 = vrot.slane %v260, 4
    %v894 = vadd.f32 %v884, %v892
    %v895 = vsub.f32 0.0, %v891
    %v896 = vmul.f32 %v895, 1.442695
    %v897 = vpow.pop %v896
    %v898 = vadd.f32 %v897, 1.0
    %v899 = vrcp.pop %v898
    %v900 = vmul.f32 1.0, %v899
    %v901 = vtanh.pop %v891
    %v902 = vmul.f32 %v900, %v803
    %904 = vrot.lane.b32.xlu0 %v901, 64
    %v905 = vpop.permute.xlu0 %904
    %v907 = vmul.f32 %v900, %v905
    %909 = vrot.lane.b32.xlu0 %v907, 32
    %v910 = vpop.permute.xlu0 %909
    %v912 = vadd.f32 %v902, %v910
    %v913 = vtanh.pop %v912
    %915 = vrot.lane.b32.xlu0 %v913, 64
    %v916 = vpop.permute.xlu0 %915
    %v918 = vmul.f32 %v900, %v916
    %v919 = vsub.f32 0.0, %v894
    %v920 = vmul.f32 %v919, 1.442695
    %v921 = vpow.pop %v920
    %v922 = vadd.f32 %v921, 1.0
    %v923 = vrcp.pop %v922
    %v924 = vmul.f32 1.0, %v923
    %v925 = vtanh.pop %v894
    %v926 = vmul.f32 %v924, %v827
    %928 = vrot.lane.b32.xlu0 %v925, 64
    %v929 = vpop.permute.xlu0 %928
    %v931 = vmul.f32 %v924, %v929
    %933 = vrot.lane.b32.xlu0 %v931, 32
    %v934 = vpop.permute.xlu0 %933
    %v936 = vadd.f32 %v926, %v934
    %v937 = vtanh.pop %v936
    %939 = vrot.lane.b32.xlu0 %v937, 64
    %v940 = vpop.permute.xlu0 %939
    %v942 = vmul.f32 %v924, %v940
    %944 = vrot.lane.b32.xlu0 %v918, 32
    %v945 = vpop.permute.xlu0 %944
    %948 = vrot.lane.b32.xlu0 %v942, 64
    %v949 = vpop.permute.xlu0 %948
    %v951 = vsel %vm219, %v945, %v949
    %v952 = vpack.c.bf16 %v951, %v951
    %v954 = vsel %vm306, %v952, 0
    %956 = vmatprep.subr.bf16.mxu0 %v291
    %957 = vmatpush1.bf16.msra.mxu0 %v290
    %958 = vmatprep.subr.bf16.mxu0 %v293
    %959 = vmatpush1.bf16.msra.mxu0 %v292
    %960 = vmatprep.subr.bf16.mxu0 %v295
    %961 = vmatpush1.bf16.msra.mxu0 %v294
    %962 = vmatprep.subr.bf16.mxu0 %v297
    %963 = vmatpush1.bf16.msra.mxu0 %v296
    %964 = vmatprep.subr.bf16.mxu0 0
    %965 = vmatpush1.bf16.msra.mxu0 0
    %966 = vmatprep.subr.bf16.mxu0 0
    %967 = vmatpush1.bf16.msra.mxu0 0
    %968 = vmatprep.subr.bf16.mxu0 0
    %969 = vmatpush1.bf16.msra.mxu0 0
    %970 = vmatprep.subr.bf16.mxu0 0
    %971 = vmatpush1.bf16.msra.mxu0 0
    %972 = vmatprep.subr.bf16.mxu0 0
    %973 = vmatpush1.bf16.msra.mxu0 0
    %974 = vmatprep.subr.bf16.mxu0 0
    %975 = vmatpush1.bf16.msra.mxu0 0
    %976 = vmatprep.subr.bf16.mxu0 0
    %977 = vmatpush1.bf16.msra.mxu0 0
    %978 = vmatprep.subr.bf16.mxu0 0
    %979 = vmatpush1.bf16.msra.mxu0 0
    %980 = vmatprep.subr.bf16.mxu0 0
    %981 = vmatpush1.bf16.msra.mxu0 0
    %982 = vmatprep.subr.bf16.mxu0 0
    %983 = vmatpush1.bf16.msra.mxu0 0
    %984 = vmatprep.subr.bf16.mxu0 0
    %985 = vmatpush1.bf16.msra.mxu0 0
    %986 = vmatprep.subr.bf16.mxu0 0
    %987 = vmatpush1.bf16.msra.mxu0 0
    %988 = vmatprep.mubr.bf16.mxu0 0
    %989 = vmatmul.mubr.bf16.gmra.mrb[0].mxu0 %v954
    %v990 = vpop.f32.mrb[0].mxu0
    %v991 = vadd.f32 0.0, %v990
    %v992 = vpop.f32.mrb[0].mxu0
    %v993 = vadd.f32 0.0, %v992
    %v994 = vpop.f32.mrb[0].mxu0
    %v995 = vpop.f32.mrb[0].mxu0
    %996 = vdwg.mxu0
    %v997 = vrot.slane %v262, 4
    %v999 = vadd.f32 %v991, %v997
    %v1000 = vrot.slane %v260, 2
    %v1002 = vadd.f32 %v993, %v1000
    %v1003 = vsub.f32 0.0, %v999
    %v1004 = vmul.f32 %v1003, 1.442695
    %v1005 = vpow.pop %v1004
    %v1006 = vadd.f32 %v1005, 1.0
    %v1007 = vrcp.pop %v1006
    %v1008 = vmul.f32 1.0, %v1007
    %v1009 = vtanh.pop %v999
    %v1010 = vmul.f32 %v1008, %v912
    %1012 = vrot.lane.b32.xlu0 %v1009, 64
    %v1013 = vpop.permute.xlu0 %1012
    %v1015 = vmul.f32 %v1008, %v1013
    %1017 = vrot.lane.b32.xlu0 %v1015, 32
    %v1018 = vpop.permute.xlu0 %1017
    %v1020 = vadd.f32 %v1010, %v1018
    %v1021 = vtanh.pop %v1020
    %1023 = vrot.lane.b32.xlu0 %v1021, 64
    %v1024 = vpop.permute.xlu0 %1023
    %v1026 = vmul.f32 %v1008, %v1024
    %v1027 = vsub.f32 0.0, %v1002
    %v1028 = vmul.f32 %v1027, 1.442695
    %v1029 = vpow.pop %v1028
    %v1030 = vadd.f32 %v1029, 1.0
    %v1031 = vrcp.pop %v1030
    %v1032 = vmul.f32 1.0, %v1031
    %v1033 = vtanh.pop %v1002
    %v1034 = vmul.f32 %v1032, %v936
    %1036 = vrot.lane.b32.xlu0 %v1033, 64
    %v1037 = vpop.permute.xlu0 %1036
    %v1039 = vmul.f32 %v1032, %v1037
    %1041 = vrot.lane.b32.xlu0 %v1039, 32
    %v1042 = vpop.permute.xlu0 %1041
    %v1044 = vadd.f32 %v1034, %v1042
    %v1045 = vtanh.pop %v1044
    %1047 = vrot.lane.b32.xlu0 %v1045, 64
    %v1048 = vpop.permute.xlu0 %1047
    %v1050 = vmul.f32 %v1032, %v1048
    %1052 = vrot.lane.b32.xlu0 %v1026, 32
    %v1053 = vpop.permute.xlu0 %1052
    %1056 = vrot.lane.b32.xlu0 %v1050, 64
    %v1057 = vpop.permute.xlu0 %1056
    %v1059 = vsel %vm219, %v1053, %v1057
    %v1060 = vpack.c.bf16 %v1059, %v1059
    %v1062 = vsel %vm306, %v1060, 0
    %1064 = vmatprep.subr.bf16.mxu0 %v291
    %1065 = vmatpush1.bf16.msra.mxu0 %v290
    %1066 = vmatprep.subr.bf16.mxu0 %v293
    %1067 = vmatpush1.bf16.msra.mxu0 %v292
    %1068 = vmatprep.subr.bf16.mxu0 %v295
    %1069 = vmatpush1.bf16.msra.mxu0 %v294
    %1070 = vmatprep.subr.bf16.mxu0 %v297
    %1071 = vmatpush1.bf16.msra.mxu0 %v296
    %1072 = vmatprep.subr.bf16.mxu0 0
    %1073 = vmatpush1.bf16.msra.mxu0 0
    %1074 = vmatprep.subr.bf16.mxu0 0
    %1075 = vmatpush1.bf16.msra.mxu0 0
    %1076 = vmatprep.subr.bf16.mxu0 0
    %1077 = vmatpush1.bf16.msra.mxu0 0
    %1078 = vmatprep.subr.bf16.mxu0 0
    %1079 = vmatpush1.bf16.msra.mxu0 0
    %1080 = vmatprep.subr.bf16.mxu0 0
    %1081 = vmatpush1.bf16.msra.mxu0 0
    %1082 = vmatprep.subr.bf16.mxu0 0
    %1083 = vmatpush1.bf16.msra.mxu0 0
    %1084 = vmatprep.subr.bf16.mxu0 0
    %1085 = vmatpush1.bf16.msra.mxu0 0
    %1086 = vmatprep.subr.bf16.mxu0 0
    %1087 = vmatpush1.bf16.msra.mxu0 0
    %1088 = vmatprep.subr.bf16.mxu0 0
    %1089 = vmatpush1.bf16.msra.mxu0 0
    %1090 = vmatprep.subr.bf16.mxu0 0
    %1091 = vmatpush1.bf16.msra.mxu0 0
    %1092 = vmatprep.subr.bf16.mxu0 0
    %1093 = vmatpush1.bf16.msra.mxu0 0
    %1094 = vmatprep.subr.bf16.mxu0 0
    %1095 = vmatpush1.bf16.msra.mxu0 0
    %1096 = vmatprep.mubr.bf16.mxu0 0
    %1097 = vmatmul.mubr.bf16.gmra.mrb[0].mxu0 %v1062
    %v1098 = vpop.f32.mrb[0].mxu0
    %v1099 = vadd.f32 0.0, %v1098
    %v1100 = vpop.f32.mrb[0].mxu0
    %v1101 = vadd.f32 0.0, %v1100
    %v1102 = vpop.f32.mrb[0].mxu0
    %v1103 = vpop.f32.mrb[0].mxu0
    %1104 = vdwg.mxu0
    %v1105 = vrot.slane %v262, 6
    %v1107 = vadd.f32 %v1099, %v1105
    %v1108 = vadd.f32 %v1101, %v260
    %v1109 = vsub.f32 0.0, %v1107
    %v1110 = vmul.f32 %v1109, 1.442695
    %v1111 = vpow.pop %v1110
    %v1112 = vadd.f32 %v1111, 1.0
    %v1113 = vrcp.pop %v1112
    %v1114 = vmul.f32 1.0, %v1113
    %v1115 = vtanh.pop %v1107
    %v1116 = vmul.f32 %v1114, %v1020
    %1118 = vrot.lane.b32.xlu0 %v1115, 64
    %v1119 = vpop.permute.xlu0 %1118
    %v1121 = vmul.f32 %v1114, %v1119
    %1123 = vrot.lane.b32.xlu0 %v1121, 32
    %v1124 = vpop.permute.xlu0 %1123
    %v1126 = vadd.f32 %v1116, %v1124
    %v1127 = vtanh.pop %v1126
    %1129 = vrot.lane.b32.xlu0 %v1127, 64
    %v1130 = vpop.permute.xlu0 %1129
    %v1132 = vmul.f32 %v1114, %v1130
    %v1133 = vsub.f32 0.0, %v1108
    %v1134 = vmul.f32 %v1133, 1.442695
    %v1135 = vpow.pop %v1134
    %v1136 = vadd.f32 %v1135, 1.0
    %v1137 = vrcp.pop %v1136
    %v1138 = vmul.f32 1.0, %v1137
    %v1139 = vtanh.pop %v1108
    %v1140 = vmul.f32 %v1138, %v1044
    %1142 = vrot.lane.b32.xlu0 %v1139, 64
    %v1143 = vpop.permute.xlu0 %1142
    %v1145 = vmul.f32 %v1138, %v1143
    %1147 = vrot.lane.b32.xlu0 %v1145, 32
    %v1148 = vpop.permute.xlu0 %1147
    %v1150 = vadd.f32 %v1140, %v1148
    %v1151 = vtanh.pop %v1150
    %1153 = vrot.lane.b32.xlu0 %v1151, 64
    %v1154 = vpop.permute.xlu0 %1153
    %v1156 = vmul.f32 %v1138, %v1154
    %1158 = vrot.lane.b32.xlu0 %v1156, 64
    %v1159 = vpop.permute.xlu0 %1158
    %v1161 = vsel %vm219, %v406, %v1159
    %v1162 = vsel %vm219, %v515, %v1057
    %v1163 = vsel %vm219, %v623, %v949
    %v1164 = vsel %vm219, %v729, %v840
    %v1165 = vsel %vm219, %v836, %v733
    %v1166 = vsel %vm219, %v945, %v627
    %v1167 = vsel %vm219, %v1053, %v519
    %1169 = vrot.lane.b32.xlu0 %v1132, 32
    %v1170 = vpop.permute.xlu0 %1169
    %v1172 = vsel %vm219, %v1170, %v410
    %v1174 = vrot.slane %v1162, 6
    %v1177 = vrot.slane %v1163, 4
    %v1180 = vrot.slane %v1164, 2
    %v1183 = vrot.slane %v1166, 6
    %v1186 = vrot.slane %v1167, 4
    %v1189 = vrot.slane %v1172, 2
    %v1191 = vsel %vm95, %v1161, %v1174
    %vm1192 = vcmask 1043456
    %v1193 = vsel %vm1192, %v1191, %v1177
    %vm1194 = vcmask 1045504
    %v1195 = vsel %vm1194, %v1193, %v1180
    %v1196 = vsel %vm95, %v1165, %v1183
    %v1197 = vsel %vm1192, %v1196, %v1186
    %v1198 = vsel %vm1194, %v1197, %v1189
    %v1199 = vld [vmem:[%s5] sm:$0xff]
    %v1200 = vld [vmem:[%s5 + $0x8] sm:$0xff]
    %v1201 = vld [vmem:[%s5 + $0x10] sm:$0xff]
    %v1202 = vld [vmem:[%s5 + $0x18] sm:$0xff]
    %v1203 = vld [vmem:[%s5 + $0x20] sm:$0xff]
    %v1204 = vld [vmem:[%s5 + $0x28] sm:$0xff]
    %v1205 = vld [vmem:[%s5 + $0x30] sm:$0xff]
    %v1206 = vld [vmem:[%s5 + $0x38] sm:$0xff]
    %v1207 = vld [vmem:[%s6] sm:$0x3]
    %v1208 = vld [vmem:[#allocation5] sm:$0xff]
    %v1209 = vld [vmem:[#allocation5 + $0x8] sm:$0xff]
    %v1210 = vld [vmem:[#allocation5 + $0x10] sm:$0xff]
    %v1211 = vld [vmem:[#allocation5 + $0x18] sm:$0xff]
    %v1212 = vld [vmem:[#allocation5 + $0x20] sm:$0xff]
    %v1213 = vld [vmem:[#allocation5 + $0x28] sm:$0xff]
    %v1214 = vld [vmem:[#allocation5 + $0x30] sm:$0xff]
    %v1215 = vld [vmem:[#allocation5 + $0x38] sm:$0xff]
    %v1216 = vpack.c.bf16 %v1198, %v1195
    %v1218 = vlaneseq
    %v1219 = vshrl.u32 %v1218, 7
    %v1220 = vsub.s32 0, %v1219
    %v1221 = vrot.slane %v1207, %v1220
    %v1222 = vlaneseq
    %v1223 = vshrl.u32 %v1222, 7
    %v1224 = vsub.s32 1, %v1223
    %v1225 = vrot.slane %v1207, %v1224
    %v1236 = vunpack.c.l.b16 %v1199
    %v1237 = vunpack.c.h.b16 %v1199
    %v1238 = vunpack.c.l.b16 %v1200
    %v1239 = vunpack.c.h.b16 %v1200
    %v1240 = vunpack.c.l.b16 %v1201
    %v1241 = vunpack.c.h.b16 %v1201
    %v1242 = vunpack.c.l.b16 %v1202
    %v1243 = vunpack.c.h.b16 %v1202
    %v1244 = vunpack.c.l.b16 %v1203
    %v1245 = vunpack.c.h.b16 %v1203
    %v1246 = vunpack.c.l.b16 %v1204
    %v1247 = vunpack.c.h.b16 %v1204
    %v1248 = vunpack.c.l.b16 %v1205
    %v1249 = vunpack.c.h.b16 %v1205
    %v1250 = vunpack.c.l.b16 %v1206
    %v1251 = vunpack.c.h.b16 %v1206
    %v1252 = vpack.c.b16 %v1238, %v1236
    %v1253 = vpack.c.b16 %v1239, %v1237
    %v1254 = vpack.c.b16 %v1242, %v1240
    %v1255 = vpack.c.b16 %v1243, %v1241
    %v1256 = vpack.c.b16 %v1246, %v1244
    %v1257 = vpack.c.b16 %v1247, %v1245
    %v1258 = vpack.c.b16 %v1250, %v1248
    %v1259 = vpack.c.b16 %v1251, %v1249
    %v1269 = vsel %vm306, %v1216, 0
    %1271 = vmatprep.subr.bf16.mxu0 %v1253
    %1272 = vmatpush1.bf16.msra.mxu0 %v1252
    %1273 = vmatprep.subr.bf16.mxu0 %v1255
    %1274 = vmatpush1.bf16.msra.mxu0 %v1254
    %1275 = vmatprep.subr.bf16.mxu0 %v1257
    %1276 = vmatpush1.bf16.msra.mxu0 %v1256
    %1277 = vmatprep.subr.bf16.mxu0 %v1259
    %1278 = vmatpush1.bf16.msra.mxu0 %v1258
    %1279 = vmatprep.subr.bf16.mxu0 0
    %1280 = vmatpush1.bf16.msra.mxu0 0
    %1281 = vmatprep.subr.bf16.mxu0 0
    %1282 = vmatpush1.bf16.msra.mxu0 0
    %1283 = vmatprep.subr.bf16.mxu0 0
    %1284 = vmatpush1.bf16.msra.mxu0 0
    %1285 = vmatprep.subr.bf16.mxu0 0
    %1286 = vmatpush1.bf16.msra.mxu0 0
    %1287 = vmatprep.subr.bf16.mxu0 0
    %1288 = vmatpush1.bf16.msra.mxu0 0
    %1289 = vmatprep.subr.bf16.mxu0 0
    %1290 = vmatpush1.bf16.msra.mxu0 0
    %1291 = vmatprep.subr.bf16.mxu0 0
    %1292 = vmatpush1.bf16.msra.mxu0 0
    %1293 = vmatprep.subr.bf16.mxu0 0
    %1294 = vmatpush1.bf16.msra.mxu0 0
    %1295 = vmatprep.subr.bf16.mxu0 0
    %1296 = vmatpush1.bf16.msra.mxu0 0
    %1297 = vmatprep.subr.bf16.mxu0 0
    %1298 = vmatpush1.bf16.msra.mxu0 0
    %1299 = vmatprep.subr.bf16.mxu0 0
    %1300 = vmatpush1.bf16.msra.mxu0 0
    %1301 = vmatprep.subr.bf16.mxu0 0
    %1302 = vmatpush1.bf16.msra.mxu0 0
    %1303 = vmatprep.mubr.bf16.mxu0 0
    %1304 = vmatmul.mubr.bf16.gmra.mrb[0].mxu0 %v1269
    %v1305 = vpop.f32.mrb[0].mxu0
    %v1306 = vadd.f32 %v1221, %v1305
    %v1307 = vpop.f32.mrb[0].mxu0
    %v1308 = vadd.f32 %v1225, %v1307
    %v1309 = vpop.f32.mrb[0].mxu0
    %v1310 = vadd.f32 %v1221, %v1309
    %v1311 = vpop.f32.mrb[0].mxu0
    %v1312 = vadd.f32 %v1225, %v1311
    %1313 = vdwg.mxu0
    %v1322 = vunpack.c.l.b16 %v1208
    %v1323 = vunpack.c.h.b16 %v1208
    %v1324 = vunpack.c.l.b16 %v1209
    %v1325 = vunpack.c.h.b16 %v1209
    %v1326 = vunpack.c.l.b16 %v1210
    %v1327 = vunpack.c.h.b16 %v1210
    %v1328 = vunpack.c.l.b16 %v1211
    %v1329 = vunpack.c.h.b16 %v1211
    %v1330 = vunpack.c.l.b16 %v1212
    %v1331 = vunpack.c.h.b16 %v1212
    %v1332 = vunpack.c.l.b16 %v1213
    %v1333 = vunpack.c.h.b16 %v1213
    %v1334 = vunpack.c.l.b16 %v1214
    %v1335 = vunpack.c.h.b16 %v1214
    %v1336 = vunpack.c.l.b16 %v1215
    %v1337 = vunpack.c.h.b16 %v1215
    %v1338 = vpack.c.b16 %v1324, %v1322
    %v1339 = vpack.c.b16 %v1325, %v1323
    %v1340 = vpack.c.b16 %v1328, %v1326
    %v1341 = vpack.c.b16 %v1329, %v1327
    %v1342 = vpack.c.b16 %v1332, %v1330
    %v1343 = vpack.c.b16 %v1333, %v1331
    %v1344 = vpack.c.b16 %v1336, %v1334
    %v1345 = vpack.c.b16 %v1337, %v1335
    %1354 = vmatprep.subr.bf16.mxu0 %v1339
    %1355 = vmatpush1.bf16.msra.mxu0 %v1338
    %1356 = vmatprep.subr.bf16.mxu0 %v1341
    %1357 = vmatpush1.bf16.msra.mxu0 %v1340
    %1358 = vmatprep.subr.bf16.mxu0 %v1343
    %1359 = vmatpush1.bf16.msra.mxu0 %v1342
    %1360 = vmatprep.subr.bf16.mxu0 %v1345
    %1361 = vmatpush1.bf16.msra.mxu0 %v1344
    %1362 = vmatprep.subr.bf16.mxu0 0
    %1363 = vmatpush1.bf16.msra.mxu0 0
    %1364 = vmatprep.subr.bf16.mxu0 0
    %1365 = vmatpush1.bf16.msra.mxu0 0
    %1366 = vmatprep.subr.bf16.mxu0 0
    %1367 = vmatpush1.bf16.msra.mxu0 0
    %1368 = vmatprep.subr.bf16.mxu0 0
    %1369 = vmatpush1.bf16.msra.mxu0 0
    %1370 = vmatprep.subr.bf16.mxu0 0
    %1371 = vmatpush1.bf16.msra.mxu0 0
    %1372 = vmatprep.subr.bf16.mxu0 0
    %1373 = vmatpush1.bf16.msra.mxu0 0
    %1374 = vmatprep.subr.bf16.mxu0 0
    %1375 = vmatpush1.bf16.msra.mxu0 0
    %1376 = vmatprep.subr.bf16.mxu0 0
    %1377 = vmatpush1.bf16.msra.mxu0 0
    %1378 = vmatprep.subr.bf16.mxu0 0
    %1379 = vmatpush1.bf16.msra.mxu0 0
    %1380 = vmatprep.subr.bf16.mxu0 0
    %1381 = vmatpush1.bf16.msra.mxu0 0
    %1382 = vmatprep.subr.bf16.mxu0 0
    %1383 = vmatpush1.bf16.msra.mxu0 0
    %1384 = vmatprep.subr.bf16.mxu0 0
    %1385 = vmatpush1.bf16.msra.mxu0 0
    %1386 = vmatprep.mubr.bf16.mxu0 0
    %1387 = vmatmul.mubr.bf16.gmra.mrb[0].mxu0 %v308
    %v1388 = vpop.f32.mrb[0].mxu0
    %v1389 = vadd.f32 0.0, %v1388
    %v1390 = vpop.f32.mrb[0].mxu0
    %v1391 = vadd.f32 0.0, %v1390
    %v1392 = vpop.f32.mrb[0].mxu0
    %v1393 = vpop.f32.mrb[0].mxu0
    %1394 = vdwg.mxu0
    %v1395 = vadd.f32 %v1389, %v1306
    %v1397 = vrot.slane %v1312, 6
    %v1399 = vadd.f32 %v1391, %v1397
    %v1400 = vsub.f32 0.0, %v1395
    %v1401 = vmul.f32 %v1400, 1.442695
    %v1402 = vpow.pop %v1401
    %v1403 = vadd.f32 %v1402, 1.0
    %v1404 = vrcp.pop %v1403
    %v1405 = vmul.f32 1.0, %v1404
    %v1406 = vtanh.pop %v1395
    %v1407 = vmul.f32 %v1405, 0.0
    %1409 = vrot.lane.b32.xlu0 %v1406, 64
    %v1410 = vpop.permute.xlu0 %1409
    %v1412 = vmul.f32 %v1405, %v1410
    %1414 = vrot.lane.b32.xlu0 %v1412, 32
    %v1415 = vpop.permute.xlu0 %1414
    %v1417 = vadd.f32 %v1407, %v1415
    %v1418 = vtanh.pop %v1417
    %1420 = vrot.lane.b32.xlu0 %v1418, 64
    %v1421 = vpop.permute.xlu0 %1420
    %v1423 = vmul.f32 %v1405, %v1421
    %v1424 = vsub.f32 0.0, %v1399
    %v1425 = vmul.f32 %v1424, 1.442695
    %v1426 = vpow.pop %v1425
    %v1427 = vadd.f32 %v1426, 1.0
    %v1428 = vrcp.pop %v1427
    %v1429 = vmul.f32 1.0, %v1428
    %v1430 = vtanh.pop %v1399
    %v1431 = vmul.f32 %v1429, 0.0
    %1433 = vrot.lane.b32.xlu0 %v1430, 64
    %v1434 = vpop.permute.xlu0 %1433
    %v1436 = vmul.f32 %v1429, %v1434
    %1438 = vrot.lane.b32.xlu0 %v1436, 32
    %v1439 = vpop.permute.xlu0 %1438
    %v1441 = vadd.f32 %v1431, %v1439
    %v1442 = vtanh.pop %v1441
    %1444 = vrot.lane.b32.xlu0 %v1442, 64
    %v1445 = vpop.permute.xlu0 %1444
    %v1447 = vmul.f32 %v1429, %v1445
    %1449 = vrot.lane.b32.xlu0 %v1423, 32
    %v1450 = vpop.permute.xlu0 %1449
    %1453 = vrot.lane.b32.xlu0 %v1447, 64
    %v1454 = vpop.permute.xlu0 %1453
    %v1456 = vsel %vm219, %v1450, %v1454
    %v1457 = vpack.c.bf16 %v1456, %v1456
    %v1459 = vsel %vm306, %v1457, 0
    %1461 = vmatprep.subr.bf16.mxu0 %v1339
    %1462 = vmatpush1.bf16.msra.mxu0 %v1338
    %1463 = vmatprep.subr.bf16.mxu0 %v1341
    %1464 = vmatpush1.bf16.msra.mxu0 %v1340
    %1465 = vmatprep.subr.bf16.mxu0 %v1343
    %1466 = vmatpush1.bf16.msra.mxu0 %v1342
    %1467 = vmatprep.subr.bf16.mxu0 %v1345
    %1468 = vmatpush1.bf16.msra.mxu0 %v1344
    %1469 = vmatprep.subr.bf16.mxu0 0
    %1470 = vmatpush1.bf16.msra.mxu0 0
    %1471 = vmatprep.subr.bf16.mxu0 0
    %1472 = vmatpush1.bf16.msra.mxu0 0
    %1473 = vmatprep.subr.bf16.mxu0 0
    %1474 = vmatpush1.bf16.msra.mxu0 0
    %1475 = vmatprep.subr.bf16.mxu0 0
    %1476 = vmatpush1.bf16.msra.mxu0 0
    %1477 = vmatprep.subr.bf16.mxu0 0
    %1478 = vmatpush1.bf16.msra.mxu0 0
    %1479 = vmatprep.subr.bf16.mxu0 0
    %1480 = vmatpush1.bf16.msra.mxu0 0
    %1481 = vmatprep.subr.bf16.mxu0 0
    %1482 = vmatpush1.bf16.msra.mxu0 0
    %1483 = vmatprep.subr.bf16.mxu0 0
    %1484 = vmatpush1.bf16.msra.mxu0 0
    %1485 = vmatprep.subr.bf16.mxu0 0
    %1486 = vmatpush1.bf16.msra.mxu0 0
    %1487 = vmatprep.subr.bf16.mxu0 0
    %1488 = vmatpush1.bf16.msra.mxu0 0
    %1489 = vmatprep.subr.bf16.mxu0 0
    %1490 = vmatpush1.bf16.msra.mxu0 0
    %1491 = vmatprep.subr.bf16.mxu0 0
    %1492 = vmatpush1.bf16.msra.mxu0 0
    %1493 = vmatprep.mubr.bf16.mxu0 0
    %1494 = vmatmul.mubr.bf16.gmra.mrb[0].mxu0 %v1459
    %v1495 = vpop.f32.mrb[0].mxu0
    %v1496 = vadd.f32 0.0, %v1495
    %v1497 = vpop.f32.mrb[0].mxu0
    %v1498 = vadd.f32 0.0, %v1497
    %v1499 = vpop.f32.mrb[0].mxu0
    %v1500 = vpop.f32.mrb[0].mxu0
    %1501 = vdwg.mxu0
    %v1503 = vrot.slane %v1306, 2
    %v1505 = vadd.f32 %v1496, %v1503
    %v1506 = vrot.slane %v1312, 4
    %v1508 = vadd.f32 %v1498, %v1506
    %v1509 = vsub.f32 0.0, %v1505
    %v1510 = vmul.f32 %v1509, 1.442695
    %v1511 = vpow.pop %v1510
    %v1512 = vadd.f32 %v1511, 1.0
    %v1513 = vrcp.pop %v1512
    %v1514 = vmul.f32 1.0, %v1513
    %v1515 = vtanh.pop %v1505
    %v1516 = vmul.f32 %v1514, %v1417
    %1518 = vrot.lane.b32.xlu0 %v1515, 64
    %v1519 = vpop.permute.xlu0 %1518
    %v1521 = vmul.f32 %v1514, %v1519
    %1523 = vrot.lane.b32.xlu0 %v1521, 32
    %v1524 = vpop.permute.xlu0 %1523
    %v1526 = vadd.f32 %v1516, %v1524
    %v1527 = vtanh.pop %v1526
    %1529 = vrot.lane.b32.xlu0 %v1527, 64
    %v1530 = vpop.permute.xlu0 %1529
    %v1532 = vmul.f32 %v1514, %v1530
    %v1533 = vsub.f32 0.0, %v1508
    %v1534 = vmul.f32 %v1533, 1.442695
    %v1535 = vpow.pop %v1534
    %v1536 = vadd.f32 %v1535, 1.0
    %v1537 = vrcp.pop %v1536
    %v1538 = vmul.f32 1.0, %v1537
    %v1539 = vtanh.pop %v1508
    %v1540 = vmul.f32 %v1538, %v1441
    %1542 = vrot.lane.b32.xlu0 %v1539, 64
    %v1543 = vpop.permute.xlu0 %1542
    %v1545 = vmul.f32 %v1538, %v1543
    %1547 = vrot.lane.b32.xlu0 %v1545, 32
    %v1548 = vpop.permute.xlu0 %1547
    %v1550 = vadd.f32 %v1540, %v1548
    %v1551 = vtanh.pop %v1550
    %1553 = vrot.lane.b32.xlu0 %v1551, 64
    %v1554 = vpop.permute.xlu0 %1553
    %v1556 = vmul.f32 %v1538, %v1554
    %1558 = vrot.lane.b32.xlu0 %v1532, 32
    %v1559 = vpop.permute.xlu0 %1558
    %1562 = vrot.lane.b32.xlu0 %v1556, 64
    %v1563 = vpop.permute.xlu0 %1562
    %v1565 = vsel %vm219, %v1559, %v1563
    %v1566 = vpack.c.bf16 %v1565, %v1565
    %v1568 = vsel %vm306, %v1566, 0
    %1570 = vmatprep.subr.bf16.mxu0 %v1339
    %1571 = vmatpush1.bf16.msra.mxu0 %v1338
    %1572 = vmatprep.subr.bf16.mxu0 %v1341
    %1573 = vmatpush1.bf16.msra.mxu0 %v1340
    %1574 = vmatprep.subr.bf16.mxu0 %v1343
    %1575 = vmatpush1.bf16.msra.mxu0 %v1342
    %1576 = vmatprep.subr.bf16.mxu0 %v1345
    %1577 = vmatpush1.bf16.msra.mxu0 %v1344
    %1578 = vmatprep.subr.bf16.mxu0 0
    %1579 = vmatpush1.bf16.msra.mxu0 0
    %1580 = vmatprep.subr.bf16.mxu0 0
    %1581 = vmatpush1.bf16.msra.mxu0 0
    %1582 = vmatprep.subr.bf16.mxu0 0
    %1583 = vmatpush1.bf16.msra.mxu0 0
    %1584 = vmatprep.subr.bf16.mxu0 0
    %1585 = vmatpush1.bf16.msra.mxu0 0
    %1586 = vmatprep.subr.bf16.mxu0 0
    %1587 = vmatpush1.bf16.msra.mxu0 0
    %1588 = vmatprep.subr.bf16.mxu0 0
    %1589 = vmatpush1.bf16.msra.mxu0 0
    %1590 = vmatprep.subr.bf16.mxu0 0
    %1591 = vmatpush1.bf16.msra.mxu0 0
    %1592 = vmatprep.subr.bf16.mxu0 0
    %1593 = vmatpush1.bf16.msra.mxu0 0
    %1594 = vmatprep.subr.bf16.mxu0 0
    %1595 = vmatpush1.bf16.msra.mxu0 0
    %1596 = vmatprep.subr.bf16.mxu0 0
    %1597 = vmatpush1.bf16.msra.mxu0 0
    %1598 = vmatprep.subr.bf16.mxu0 0
    %1599 = vmatpush1.bf16.msra.mxu0 0
    %1600 = vmatprep.subr.bf16.mxu0 0
    %1601 = vmatpush1.bf16.msra.mxu0 0
    %1602 = vmatprep.mubr.bf16.mxu0 0
    %1603 = vmatmul.mubr.bf16.gmra.mrb[0].mxu0 %v1568
    %v1604 = vpop.f32.mrb[0].mxu0
    %v1605 = vadd.f32 0.0, %v1604
    %v1606 = vpop.f32.mrb[0].mxu0
    %v1607 = vadd.f32 0.0, %v1606
    %v1608 = vpop.f32.mrb[0].mxu0
    %v1609 = vpop.f32.mrb[0].mxu0
    %1610 = vdwg.mxu0
    %v1611 = vrot.slane %v1306, 4
    %v1613 = vadd.f32 %v1605, %v1611
    %v1614 = vrot.slane %v1312, 2
    %v1616 = vadd.f32 %v1607, %v1614
    %v1617 = vsub.f32 0.0, %v1613
    %v1618 = vmul.f32 %v1617, 1.442695
    %v1619 = vpow.pop %v1618
    %v1620 = vadd.f32 %v1619, 1.0
    %v1621 = vrcp.pop %v1620
    %v1622 = vmul.f32 1.0, %v1621
    %v1623 = vtanh.pop %v1613
    %v1624 = vmul.f32 %v1622, %v1526
    %1626 = vrot.lane.b32.xlu0 %v1623, 64
    %v1627 = vpop.permute.xlu0 %1626
    %v1629 = vmul.f32 %v1622, %v1627
    %1631 = vrot.lane.b32.xlu0 %v1629, 32
    %v1632 = vpop.permute.xlu0 %1631
    %v1634 = vadd.f32 %v1624, %v1632
    %v1635 = vtanh.pop %v1634
    %1637 = vrot.lane.b32.xlu0 %v1635, 64
    %v1638 = vpop.permute.xlu0 %1637
    %v1640 = vmul.f32 %v1622, %v1638
    %v1641 = vsub.f32 0.0, %v1616
    %v1642 = vmul.f32 %v1641, 1.442695
    %v1643 = vpow.pop %v1642
    %v1644 = vadd.f32 %v1643, 1.0
    %v1645 = vrcp.pop %v1644
    %v1646 = vmul.f32 1.0, %v1645
    %v1647 = vtanh.pop %v1616
    %v1648 = vmul.f32 %v1646, %v1550
    %1650 = vrot.lane.b32.xlu0 %v1647, 64
    %v1651 = vpop.permute.xlu0 %1650
    %v1653 = vmul.f32 %v1646, %v1651
    %1655 = vrot.lane.b32.xlu0 %v1653, 32
    %v1656 = vpop.permute.xlu0 %1655
    %v1658 = vadd.f32 %v1648, %v1656
    %v1659 = vtanh.pop %v1658
    %1661 = vrot.lane.b32.xlu0 %v1659, 64
    %v1662 = vpop.permute.xlu0 %1661
    %v1664 = vmul.f32 %v1646, %v1662
    %1666 = vrot.lane.b32.xlu0 %v1640, 32
    %v1667 = vpop.permute.xlu0 %1666
    %1670 = vrot.lane.b32.xlu0 %v1664, 64
    %v1671 = vpop.permute.xlu0 %1670
    %v1673 = vsel %vm219, %v1667, %v1671
    %v1674 = vpack.c.bf16 %v1673, %v1673
    %v1676 = vsel %vm306, %v1674, 0
    %1678 = vmatprep.subr.bf16.mxu0 %v1339
    %1679 = vmatpush1.bf16.msra.mxu0 %v1338
    %1680 = vmatprep.subr.bf16.mxu0 %v1341
    %1681 = vmatpush1.bf16.msra.mxu0 %v1340
    %1682 = vmatprep.subr.bf16.mxu0 %v1343
    %1683 = vmatpush1.bf16.msra.mxu0 %v1342
    %1684 = vmatprep.subr.bf16.mxu0 %v1345
    %1685 = vmatpush1.bf16.msra.mxu0 %v1344
    %1686 = vmatprep.subr.bf16.mxu0 0
    %1687 = vmatpush1.bf16.msra.mxu0 0
    %1688 = vmatprep.subr.bf16.mxu0 0
    %1689 = vmatpush1.bf16.msra.mxu0 0
    %1690 = vmatprep.subr.bf16.mxu0 0
    %1691 = vmatpush1.bf16.msra.mxu0 0
    %1692 = vmatprep.subr.bf16.mxu0 0
    %1693 = vmatpush1.bf16.msra.mxu0 0
    %1694 = vmatprep.subr.bf16.mxu0 0
    %1695 = vmatpush1.bf16.msra.mxu0 0
    %1696 = vmatprep.subr.bf16.mxu0 0
    %1697 = vmatpush1.bf16.msra.mxu0 0
    %1698 = vmatprep.subr.bf16.mxu0 0
    %1699 = vmatpush1.bf16.msra.mxu0 0
    %1700 = vmatprep.subr.bf16.mxu0 0
    %1701 = vmatpush1.bf16.msra.mxu0 0
    %1702 = vmatprep.subr.bf16.mxu0 0
    %1703 = vmatpush1.bf16.msra.mxu0 0
    %1704 = vmatprep.subr.bf16.mxu0 0
    %1705 = vmatpush1.bf16.msra.mxu0 0
    %1706 = vmatprep.subr.bf16.mxu0 0
    %1707 = vmatpush1.bf16.msra.mxu0 0
    %1708 = vmatprep.subr.bf16.mxu0 0
    %1709 = vmatpush1.bf16.msra.mxu0 0
    %1710 = vmatprep.mubr.bf16.mxu0 0
    %1711 = vmatmul.mubr.bf16.gmra.mrb[0].mxu0 %v1676
    %v1712 = vpop.f32.mrb[0].mxu0
    %v1713 = vadd.f32 0.0, %v1712
    %v1714 = vpop.f32.mrb[0].mxu0
    %v1715 = vadd.f32 0.0, %v1714
    %v1716 = vpop.f32.mrb[0].mxu0
    %v1717 = vpop.f32.mrb[0].mxu0
    %1718 = vdwg.mxu0
    %v1719 = vrot.slane %v1306, 6
    %v1721 = vadd.f32 %v1713, %v1719
    %v1722 = vadd.f32 %v1715, %v1312
    %v1723 = vsub.f32 0.0, %v1721
    %v1724 = vmul.f32 %v1723, 1.442695
    %v1725 = vpow.pop %v1724
    %v1726 = vadd.f32 %v1725, 1.0
    %v1727 = vrcp.pop %v1726
    %v1728 = vmul.f32 1.0, %v1727
    %v1729 = vtanh.pop %v1721
    %v1730 = vmul.f32 %v1728, %v1634
    %1732 = vrot.lane.b32.xlu0 %v1729, 64
    %v1733 = vpop.permute.xlu0 %1732
    %v1735 = vmul.f32 %v1728, %v1733
    %1737 = vrot.lane.b32.xlu0 %v1735, 32
    %v1738 = vpop.permute.xlu0 %1737
    %v1740 = vadd.f32 %v1730, %v1738
    %v1741 = vtanh.pop %v1740
    %1743 = vrot.lane.b32.xlu0 %v1741, 64
    %v1744 = vpop.permute.xlu0 %1743
    %v1746 = vmul.f32 %v1728, %v1744
    %v1747 = vsub.f32 0.0, %v1722
    %v1748 = vmul.f32 %v1747, 1.442695
    %v1749 = vpow.pop %v1748
    %v1750 = vadd.f32 %v1749, 1.0
    %v1751 = vrcp.pop %v1750
    %v1752 = vmul.f32 1.0, %v1751
    %v1753 = vtanh.pop %v1722
    %v1754 = vmul.f32 %v1752, %v1658
    %1756 = vrot.lane.b32.xlu0 %v1753, 64
    %v1757 = vpop.permute.xlu0 %1756
    %v1759 = vmul.f32 %v1752, %v1757
    %1761 = vrot.lane.b32.xlu0 %v1759, 32
    %v1762 = vpop.permute.xlu0 %1761
    %v1764 = vadd.f32 %v1754, %v1762
    %v1765 = vtanh.pop %v1764
    %1767 = vrot.lane.b32.xlu0 %v1765, 64
    %v1768 = vpop.permute.xlu0 %1767
    %v1770 = vmul.f32 %v1752, %v1768
    %1772 = vrot.lane.b32.xlu0 %v1746, 32
    %v1773 = vpop.permute.xlu0 %1772
    %1776 = vrot.lane.b32.xlu0 %v1770, 64
    %v1777 = vpop.permute.xlu0 %1776
    %v1779 = vsel %vm219, %v1773, %v1777
    %v1780 = vpack.c.bf16 %v1779, %v1779
    %v1782 = vsel %vm306, %v1780, 0
    %1784 = vmatprep.subr.bf16.mxu0 %v1339
    %1785 = vmatpush1.bf16.msra.mxu0 %v1338
    %1786 = vmatprep.subr.bf16.mxu0 %v1341
    %1787 = vmatpush1.bf16.msra.mxu0 %v1340
    %1788 = vmatprep.subr.bf16.mxu0 %v1343
    %1789 = vmatpush1.bf16.msra.mxu0 %v1342
    %1790 = vmatprep.subr.bf16.mxu0 %v1345
    %1791 = vmatpush1.bf16.msra.mxu0 %v1344
    %1792 = vmatprep.subr.bf16.mxu0 0
    %1793 = vmatpush1.bf16.msra.mxu0 0
    %1794 = vmatprep.subr.bf16.mxu0 0
    %1795 = vmatpush1.bf16.msra.mxu0 0
    %1796 = vmatprep.subr.bf16.mxu0 0
    %1797 = vmatpush1.bf16.msra.mxu0 0
    %1798 = vmatprep.subr.bf16.mxu0 0
    %1799 = vmatpush1.bf16.msra.mxu0 0
    %1800 = vmatprep.subr.bf16.mxu0 0
    %1801 = vmatpush1.bf16.msra.mxu0 0
    %1802 = vmatprep.subr.bf16.mxu0 0
    %1803 = vmatpush1.bf16.msra.mxu0 0
    %1804 = vmatprep.subr.bf16.mxu0 0
    %1805 = vmatpush1.bf16.msra.mxu0 0
    %1806 = vmatprep.subr.bf16.mxu0 0
    %1807 = vmatpush1.bf16.msra.mxu0 0
    %1808 = vmatprep.subr.bf16.mxu0 0
    %1809 = vmatpush1.bf16.msra.mxu0 0
    %1810 = vmatprep.subr.bf16.mxu0 0
    %1811 = vmatpush1.bf16.msra.mxu0 0
    %1812 = vmatprep.subr.bf16.mxu0 0
    %1813 = vmatpush1.bf16.msra.mxu0 0
    %1814 = vmatprep.subr.bf16.mxu0 0
    %1815 = vmatpush1.bf16.msra.mxu0 0
    %1816 = vmatprep.mubr.bf16.mxu0 0
    %1817 = vmatmul.mubr.bf16.gmra.mrb[0].mxu0 %v1782
    %v1818 = vpop.f32.mrb[0].mxu0
    %v1819 = vadd.f32 0.0, %v1818
    %v1820 = vpop.f32.mrb[0].mxu0
    %v1821 = vadd.f32 0.0, %v1820
    %v1822 = vpop.f32.mrb[0].mxu0
    %v1823 = vpop.f32.mrb[0].mxu0
    %1824 = vdwg.mxu0
    %v1825 = vadd.f32 %v1819, %v1310
    %v1827 = vrot.slane %v1308, 6
    %v1829 = vadd.f32 %v1821, %v1827
    %v1830 = vsub.f32 0.0, %v1825
    %v1831 = vmul.f32 %v1830, 1.442695
    %v1832 = vpow.pop %v1831
    %v1833 = vadd.f32 %v1832, 1.0
    %v1834 = vrcp.pop %v1833
    %v1835 = vmul.f32 1.0, %v1834
    %v1836 = vtanh.pop %v1825
    %v1837 = vmul.f32 %v1835, %v1740
    %1839 = vrot.lane.b32.xlu0 %v1836, 64
    %v1840 = vpop.permute.xlu0 %1839
    %v1842 = vmul.f32 %v1835, %v1840
    %1844 = vrot.lane.b32.xlu0 %v1842, 32
    %v1845 = vpop.permute.xlu0 %1844
    %v1847 = vadd.f32 %v1837, %v1845
    %v1848 = vtanh.pop %v1847
    %1850 = vrot.lane.b32.xlu0 %v1848, 64
    %v1851 = vpop.permute.xlu0 %1850
    %v1853 = vmul.f32 %v1835, %v1851
    %v1854 = vsub.f32 0.0, %v1829
    %v1855 = vmul.f32 %v1854, 1.442695
    %v1856 = vpow.pop %v1855
    %v1857 = vadd.f32 %v1856, 1.0
    %v1858 = vrcp.pop %v1857
    %v1859 = vmul.f32 1.0, %v1858
    %v1860 = vtanh.pop %v1829
    %v1861 = vmul.f32 %v1859, %v1764
    %1863 = vrot.lane.b32.xlu0 %v1860, 64
    %v1864 = vpop.permute.xlu0 %1863
    %v1866 = vmul.f32 %v1859, %v1864
    %1868 = vrot.lane.b32.xlu0 %v1866, 32
    %v1869 = vpop.permute.xlu0 %1868
    %v1871 = vadd.f32 %v1861, %v1869
    %v1872 = vtanh.pop %v1871
    %1874 = vrot.lane.b32.xlu0 %v1872, 64
    %v1875 = vpop.permute.xlu0 %1874
    %v1877 = vmul.f32 %v1859, %v1875
    %1879 = vrot.lane.b32.xlu0 %v1853, 32
    %v1880 = vpop.permute.xlu0 %1879
    %1883 = vrot.lane.b32.xlu0 %v1877, 64
    %v1884 = vpop.permute.xlu0 %1883
    %v1886 = vsel %vm219, %v1880, %v1884
    %v1887 = vpack.c.bf16 %v1886, %v1886
    %v1889 = vsel %vm306, %v1887, 0
    %1891 = vmatprep.subr.bf16.mxu0 %v1339
    %1892 = vmatpush1.bf16.msra.mxu0 %v1338
    %1893 = vmatprep.subr.bf16.mxu0 %v1341
    %1894 = vmatpush1.bf16.msra.mxu0 %v1340
    %1895 = vmatprep.subr.bf16.mxu0 %v1343
    %1896 = vmatpush1.bf16.msra.mxu0 %v1342
    %1897 = vmatprep.subr.bf16.mxu0 %v1345
    %1898 = vmatpush1.bf16.msra.mxu0 %v1344
    %1899 = vmatprep.subr.bf16.mxu0 0
    %1900 = vmatpush1.bf16.msra.mxu0 0
    %1901 = vmatprep.subr.bf16.mxu0 0
    %1902 = vmatpush1.bf16.msra.mxu0 0
    %1903 = vmatprep.subr.bf16.mxu0 0
    %1904 = vmatpush1.bf16.msra.mxu0 0
    %1905 = vmatprep.subr.bf16.mxu0 0
    %1906 = vmatpush1.bf16.msra.mxu0 0
    %1907 = vmatprep.subr.bf16.mxu0 0
    %1908 = vmatpush1.bf16.msra.mxu0 0
    %1909 = vmatprep.subr.bf16.mxu0 0
    %1910 = vmatpush1.bf16.msra.mxu0 0
    %1911 = vmatprep.subr.bf16.mxu0 0
    %1912 = vmatpush1.bf16.msra.mxu0 0
    %1913 = vmatprep.subr.bf16.mxu0 0
    %1914 = vmatpush1.bf16.msra.mxu0 0
    %1915 = vmatprep.subr.bf16.mxu0 0
    %1916 = vmatpush1.bf16.msra.mxu0 0
    %1917 = vmatprep.subr.bf16.mxu0 0
    %1918 = vmatpush1.bf16.msra.mxu0 0
    %1919 = vmatprep.subr.bf16.mxu0 0
    %1920 = vmatpush1.bf16.msra.mxu0 0
    %1921 = vmatprep.subr.bf16.mxu0 0
    %1922 = vmatpush1.bf16.msra.mxu0 0
    %1923 = vmatprep.mubr.bf16.mxu0 0
    %1924 = vmatmul.mubr.bf16.gmra.mrb[0].mxu0 %v1889
    %v1925 = vpop.f32.mrb[0].mxu0
    %v1926 = vadd.f32 0.0, %v1925
    %v1927 = vpop.f32.mrb[0].mxu0
    %v1928 = vadd.f32 0.0, %v1927
    %v1929 = vpop.f32.mrb[0].mxu0
    %v1930 = vpop.f32.mrb[0].mxu0
    %1931 = vdwg.mxu0
    %v1933 = vrot.slane %v1310, 2
    %v1935 = vadd.f32 %v1926, %v1933
    %v1936 = vrot.slane %v1308, 4
    %v1938 = vadd.f32 %v1928, %v1936
    %v1939 = vsub.f32 0.0, %v1935
    %v1940 = vmul.f32 %v1939, 1.442695
    %v1941 = vpow.pop %v1940
    %v1942 = vadd.f32 %v1941, 1.0
    %v1943 = vrcp.pop %v1942
    %v1944 = vmul.f32 1.0, %v1943
    %v1945 = vtanh.pop %v1935
    %v1946 = vmul.f32 %v1944, %v1847
    %1948 = vrot.lane.b32.xlu0 %v1945, 64
    %v1949 = vpop.permute.xlu0 %1948
    %v1951 = vmul.f32 %v1944, %v1949
    %1953 = vrot.lane.b32.xlu0 %v1951, 32
    %v1954 = vpop.permute.xlu0 %1953
    %v1956 = vadd.f32 %v1946, %v1954
    %v1957 = vtanh.pop %v1956
    %1959 = vrot.lane.b32.xlu0 %v1957, 64
    %v1960 = vpop.permute.xlu0 %1959
    %v1962 = vmul.f32 %v1944, %v1960
    %v1963 = vsub.f32 0.0, %v1938
    %v1964 = vmul.f32 %v1963, 1.442695
    %v1965 = vpow.pop %v1964
    %v1966 = vadd.f32 %v1965, 1.0
    %v1967 = vrcp.pop %v1966
    %v1968 = vmul.f32 1.0, %v1967
    %v1969 = vtanh.pop %v1938
    %v1970 = vmul.f32 %v1968, %v1871
    %1972 = vrot.lane.b32.xlu0 %v1969, 64
    %v1973 = vpop.permute.xlu0 %1972
    %v1975 = vmul.f32 %v1968, %v1973
    %1977 = vrot.lane.b32.xlu0 %v1975, 32
    %v1978 = vpop.permute.xlu0 %1977
    %v1980 = vadd.f32 %v1970, %v1978
    %v1981 = vtanh.pop %v1980
    %1983 = vrot.lane.b32.xlu0 %v1981, 64
    %v1984 = vpop.permute.xlu0 %1983
    %v1986 = vmul.f32 %v1968, %v1984
    %1988 = vrot.lane.b32.xlu0 %v1962, 32
    %v1989 = vpop.permute.xlu0 %1988
    %1992 = vrot.lane.b32.xlu0 %v1986, 64
    %v1993 = vpop.permute.xlu0 %1992
    %v1995 = vsel %vm219, %v1989, %v1993
    %v1996 = vpack.c.bf16 %v1995, %v1995
    %v1998 = vsel %vm306, %v1996, 0
    %2000 = vmatprep.subr.bf16.mxu0 %v1339
    %2001 = vmatpush1.bf16.msra.mxu0 %v1338
    %2002 = vmatprep.subr.bf16.mxu0 %v1341
    %2003 = vmatpush1.bf16.msra.mxu0 %v1340
    %2004 = vmatprep.subr.bf16.mxu0 %v1343
    %2005 = vmatpush1.bf16.msra.mxu0 %v1342
    %2006 = vmatprep.subr.bf16.mxu0 %v1345
    %2007 = vmatpush1.bf16.msra.mxu0 %v1344
    %2008 = vmatprep.subr.bf16.mxu0 0
    %2009 = vmatpush1.bf16.msra.mxu0 0
    %2010 = vmatprep.subr.bf16.mxu0 0
    %2011 = vmatpush1.bf16.msra.mxu0 0
    %2012 = vmatprep.subr.bf16.mxu0 0
    %2013 = vmatpush1.bf16.msra.mxu0 0
    %2014 = vmatprep.subr.bf16.mxu0 0
    %2015 = vmatpush1.bf16.msra.mxu0 0
    %2016 = vmatprep.subr.bf16.mxu0 0
    %2017 = vmatpush1.bf16.msra.mxu0 0
    %2018 = vmatprep.subr.bf16.mxu0 0
    %2019 = vmatpush1.bf16.msra.mxu0 0
    %2020 = vmatprep.subr.bf16.mxu0 0
    %2021 = vmatpush1.bf16.msra.mxu0 0
    %2022 = vmatprep.subr.bf16.mxu0 0
    %2023 = vmatpush1.bf16.msra.mxu0 0
    %2024 = vmatprep.subr.bf16.mxu0 0
    %2025 = vmatpush1.bf16.msra.mxu0 0
    %2026 = vmatprep.subr.bf16.mxu0 0
    %2027 = vmatpush1.bf16.msra.mxu0 0
    %2028 = vmatprep.subr.bf16.mxu0 0
    %2029 = vmatpush1.bf16.msra.mxu0 0
    %2030 = vmatprep.subr.bf16.mxu0 0
    %2031 = vmatpush1.bf16.msra.mxu0 0
    %2032 = vmatprep.mubr.bf16.mxu0 0
    %2033 = vmatmul.mubr.bf16.gmra.mrb[0].mxu0 %v1998
    %v2034 = vpop.f32.mrb[0].mxu0
    %v2035 = vadd.f32 0.0, %v2034
    %v2036 = vpop.f32.mrb[0].mxu0
    %v2037 = vadd.f32 0.0, %v2036
    %v2038 = vpop.f32.mrb[0].mxu0
    %v2039 = vpop.f32.mrb[0].mxu0
    %2040 = vdwg.mxu0
    %v2041 = vrot.slane %v1310, 4
    %v2043 = vadd.f32 %v2035, %v2041
    %v2044 = vrot.slane %v1308, 2
    %v2046 = vadd.f32 %v2037, %v2044
    %v2047 = vsub.f32 0.0, %v2043
    %v2048 = vmul.f32 %v2047, 1.442695
    %v2049 = vpow.pop %v2048
    %v2050 = vadd.f32 %v2049, 1.0
    %v2051 = vrcp.pop %v2050
    %v2052 = vmul.f32 1.0, %v2051
    %v2053 = vtanh.pop %v2043
    %v2054 = vmul.f32 %v2052, %v1956
    %2056 = vrot.lane.b32.xlu0 %v2053, 64
    %v2057 = vpop.permute.xlu0 %2056
    %v2059 = vmul.f32 %v2052, %v2057
    %2061 = vrot.lane.b32.xlu0 %v2059, 32
    %v2062 = vpop.permute.xlu0 %2061
    %v2064 = vadd.f32 %v2054, %v2062
    %v2065 = vtanh.pop %v2064
    %2067 = vrot.lane.b32.xlu0 %v2065, 64
    %v2068 = vpop.permute.xlu0 %2067
    %v2070 = vmul.f32 %v2052, %v2068
    %v2071 = vsub.f32 0.0, %v2046
    %v2072 = vmul.f32 %v2071, 1.442695
    %v2073 = vpow.pop %v2072
    %v2074 = vadd.f32 %v2073, 1.0
    %v2075 = vrcp.pop %v2074
    %v2076 = vmul.f32 1.0, %v2075
    %v2077 = vtanh.pop %v2046
    %v2078 = vmul.f32 %v2076, %v1980
    %2080 = vrot.lane.b32.xlu0 %v2077, 64
    %v2081 = vpop.permute.xlu0 %2080
    %v2083 = vmul.f32 %v2076, %v2081
    %2085 = vrot.lane.b32.xlu0 %v2083, 32
    %v2086 = vpop.permute.xlu0 %2085
    %v2088 = vadd.f32 %v2078, %v2086
    %v2089 = vtanh.pop %v2088
    %2091 = vrot.lane.b32.xlu0 %v2089, 64
    %v2092 = vpop.permute.xlu0 %2091
    %v2094 = vmul.f32 %v2076, %v2092
    %2096 = vrot.lane.b32.xlu0 %v2070, 32
    %v2097 = vpop.permute.xlu0 %2096
    %2100 = vrot.lane.b32.xlu0 %v2094, 64
    %v2101 = vpop.permute.xlu0 %2100
    %v2103 = vsel %vm219, %v2097, %v2101
    %v2104 = vpack.c.bf16 %v2103, %v2103
    %v2106 = vsel %vm306, %v2104, 0
    %2108 = vmatprep.subr.bf16.mxu0 %v1339
    %2109 = vmatpush1.bf16.msra.mxu0 %v1338
    %2110 = vmatprep.subr.bf16.mxu0 %v1341
    %2111 = vmatpush1.bf16.msra.mxu0 %v1340
    %2112 = vmatprep.subr.bf16.mxu0 %v1343
    %2113 = vmatpush1.bf16.msra.mxu0 %v1342
    %2114 = vmatprep.subr.bf16.mxu0 %v1345
    %2115 = vmatpush1.bf16.msra.mxu0 %v1344
    %2116 = vmatprep.subr.bf16.mxu0 0
    %2117 = vmatpush1.bf16.msra.mxu0 0
    %2118 = vmatprep.subr.bf16.mxu0 0
    %2119 = vmatpush1.bf16.msra.mxu0 0
    %2120 = vmatprep.subr.bf16.mxu0 0
    %2121 = vmatpush1.bf16.msra.mxu0 0
    %2122 = vmatprep.subr.bf16.mxu0 0
    %2123 = vmatpush1.bf16.msra.mxu0 0
    %2124 = vmatprep.subr.bf16.mxu0 0
    %2125 = vmatpush1.bf16.msra.mxu0 0
    %2126 = vmatprep.subr.bf16.mxu0 0
    %2127 = vmatpush1.bf16.msra.mxu0 0
    %2128 = vmatprep.subr.bf16.mxu0 0
    %2129 = vmatpush1.bf16.msra.mxu0 0
    %2130 = vmatprep.subr.bf16.mxu0 0
    %2131 = vmatpush1.bf16.msra.mxu0 0
    %2132 = vmatprep.subr.bf16.mxu0 0
    %2133 = vmatpush1.bf16.msra.mxu0 0
    %2134 = vmatprep.subr.bf16.mxu0 0
    %2135 = vmatpush1.bf16.msra.mxu0 0
    %2136 = vmatprep.subr.bf16.mxu0 0
    %2137 = vmatpush1.bf16.msra.mxu0 0
    %2138 = vmatprep.subr.bf16.mxu0 0
    %2139 = vmatpush1.bf16.msra.mxu0 0
    %2140 = vmatprep.mubr.bf16.mxu0 0
    %2141 = vmatmul.mubr.bf16.gmra.mrb[0].mxu0 %v2106
    %v2142 = vpop.f32.mrb[0].mxu0
    %v2143 = vadd.f32 0.0, %v2142
    %v2144 = vpop.f32.mrb[0].mxu0
    %v2145 = vpop.f32.mrb[0].mxu0
    %v2146 = vpop.f32.mrb[0].mxu0
    %2147 = vdwg.mxu0
    %v2148 = vrot.slane %v1310, 6
    %v2150 = vadd.f32 %v2143, %v2148
    %v2151 = vsub.f32 0.0, %v2150
    %v2152 = vmul.f32 %v2151, 1.442695
    %v2153 = vpow.pop %v2152
    %v2154 = vadd.f32 %v2153, 1.0
    %v2155 = vrcp.pop %v2154
    %v2156 = vmul.f32 1.0, %v2155
    %v2157 = vtanh.pop %v2150
    %v2158 = vmul.f32 %v2156, %v2064
    %2160 = vrot.lane.b32.xlu0 %v2157, 64
    %v2161 = vpop.permute.xlu0 %2160
    %v2163 = vmul.f32 %v2156, %v2161
    %2165 = vrot.lane.b32.xlu0 %v2163, 32
    %v2166 = vpop.permute.xlu0 %2165
    %v2168 = vadd.f32 %v2158, %v2166
    %v2169 = vtanh.pop %v2168
    %2171 = vrot.lane.b32.xlu0 %v2169, 64
    %v2172 = vpop.permute.xlu0 %2171
    %v2174 = vmul.f32 %v2156, %v2172
    %2176 = vrot.lane.b32.xlu0 %v2174, 32
    %v2177 = vpop.permute.xlu0 %2176
    %v2179 = vsel %vm219, %v2177, %v1454
    %v2180 = vpack.c.bf16 %v2179, %v2179
    %v2181 = vld [vmem:[%s8] sm:$0xf]
    %v2182 = vld [vmem:[%s8 + $0x4] sm:$0xf]
    %v2183 = vld [vmem:[%s8 + $0x8] sm:$0xf]
    %v2184 = vld [vmem:[%s8 + $0xc] sm:$0xf]
    %v2185 = vld [vmem:[%s8 + $0x10] sm:$0xf]
    %v2186 = vld [vmem:[%s8 + $0x14] sm:$0xf]
    %v2187 = vld [vmem:[%s8 + $0x18] sm:$0xf]
    %v2188 = vld [vmem:[%s8 + $0x1c] sm:$0xf]
    %v2189 = vld [vmem:[%s9] sm:$0x1]
    %v2191 = vlaneseq
    %v2192 = vshrl.u32 %v2191, 7
    %v2193 = vsub.s32 0, %v2192
    %v2194 = vrot.slane %v2189, %v2193
    %v2204 = vunpack.c.l.b16 %v2181
    %v2205 = vunpack.c.l.b16 %v2182
    %v2206 = vunpack.c.l.b16 %v2183
    %v2207 = vunpack.c.l.b16 %v2184
    %v2208 = vunpack.c.l.b16 %v2185
    %v2209 = vunpack.c.l.b16 %v2186
    %v2210 = vunpack.c.l.b16 %v2187
    %v2211 = vunpack.c.l.b16 %v2188
    %v2212 = vpack.c.b16 %v2205, %v2204
    %v2213 = vpack.c.b16 %v2207, %v2206
    %v2214 = vpack.c.b16 %v2209, %v2208
    %v2215 = vpack.c.b16 %v2211, %v2210
    %v2221 = vsel %vm306, %v2180, 0
    %2223 = vmatprep.subr.bf16.mxu0 0
    %2224 = vmatpush1.bf16.msra.mxu0 %v2212
    %2225 = vmatprep.subr.bf16.mxu0 0
    %2226 = vmatpush1.bf16.msra.mxu0 %v2213
    %2227 = vmatprep.subr.bf16.mxu0 0
    %2228 = vmatpush1.bf16.msra.mxu0 %v2214
    %2229 = vmatprep.subr.bf16.mxu0 0
    %2230 = vmatpush1.bf16.msra.mxu0 %v2215
    %2231 = vmatprep.subr.bf16.mxu0 0
    %2232 = vmatpush1.bf16.msra.mxu0 0
    %2233 = vmatprep.subr.bf16.mxu0 0
    %2234 = vmatpush1.bf16.msra.mxu0 0
    %2235 = vmatprep.subr.bf16.mxu0 0
    %2236 = vmatpush1.bf16.msra.mxu0 0
    %2237 = vmatprep.subr.bf16.mxu0 0
    %2238 = vmatpush1.bf16.msra.mxu0 0
    %2239 = vmatprep.subr.bf16.mxu0 0
    %2240 = vmatpush1.bf16.msra.mxu0 0
    %2241 = vmatprep.subr.bf16.mxu0 0
    %2242 = vmatpush1.bf16.msra.mxu0 0
    %2243 = vmatprep.subr.bf16.mxu0 0
    %2244 = vmatpush1.bf16.msra.mxu0 0
    %2245 = vmatprep.subr.bf16.mxu0 0
    %2246 = vmatpush1.bf16.msra.mxu0 0
    %2247 = vmatprep.subr.bf16.mxu0 0
    %2248 = vmatpush1.bf16.msra.mxu0 0
    %2249 = vmatprep.subr.bf16.mxu0 0
    %2250 = vmatpush1.bf16.msra.mxu0 0
    %2251 = vmatprep.subr.bf16.mxu0 0
    %2252 = vmatpush1.bf16.msra.mxu0 0
    %2253 = vmatprep.subr.bf16.mxu0 0
    %2254 = vmatpush1.bf16.msra.mxu0 0
    %2255 = vmatprep.mubr.bf16.mxu0 0
    %2256 = vmatmul.mubr.bf16.gmra.mrb[0].mxu0 %v2221
    %v2257 = vpop.f32.mrb[0].mxu0
    %v2258 = vadd.f32 %v2194, %v2257
    %v2259 = vpop.f32.mrb[0].mxu0
    %v2260 = vpop.f32.mrb[0].mxu0
    %v2261 = vpop.f32.mrb[0].mxu0
    %2262 = vdwg.mxu0
    %v2263 = vmax.f32 %v2258, 0.0
    %vm2264 = vcmask 25600
    %2265 = vst.msk [vmem:[#allocation7] sm:$0x3] %vm2264, %v2263
    // Predicated region
    $region50: #{lstm_module_forward.1} parent=1 // pred_check
      _
    $region51: #{lstm_module_forward.1} parent=1 // pred_check_branch
      %2267 = sbr.rel (0) target = $region53
    $region52: #{lstm_module_forward.1} parent=1 // pred_region
      %s2269 = ssub.s32 32, 32
      %2270 = vsyncadd [#allocation4], %s2269
      %s2272 = sshll.u32 [#allocation7], 4
      %s2273 = int_to_ptr.vmem [resolvable:$true] %s2272
      %2275 = dma.vmem_to_hbm [thread:$0]  %s2273, 32, %s10, [#allocation4]
    $region53: #{lstm_module_forward.1} parent=1 // pred_fallthru
      _
    // Predicated region
    $region54: #{lstm_module_forward.1} parent=1 // pred_check
      _
    $region55: #{lstm_module_forward.1} parent=1 // pred_check_branch
      %2277 = sbr.rel (0) target = $region57
    $region56: #{lstm_module_forward.1} parent=1 // pred_region
      %2278 = dma.done [#allocation4], 32
    $region57: #{lstm_module_forward.1} parent=1 // pred_fallthru
      _
    %2279 = vsyncpa [#allocation3], 1
    %2280 = vsyncpa [#allocation6], 1
    %2281 = vsyncpa [#allocation4], 1

</llo_original>
